<compile_context>
chip_gen: v5e
topology: v5e:2x2
jax: 0.10.0
libtpu: 0.0.40
codegen_flags: <defaults>
</compile_context>

<pallas_src>
import math
import numpy as np
import jax
import jax.numpy as jnp
from jax import lax
from jax.experimental import pallas as pl
from jax.experimental.pallas import tpu as pltpu

# ----------------------------- static config -----------------------------
B = 2
H = W = 8
D_MODEL = 32
D_STATE = 16
EXPAND = 1
D_INNER = EXPAND * D_MODEL
DT_RANK = math.ceil(D_MODEL / 16)          # 'auto' -> 2
L = H * W                                  # 64 image tokens
HO = (H + 2 - 3) // 2 + 1                  # depth_conv (k=3, s=2, p=1) output = 4
WO = (W + 2 - 3) // 2 + 1
D_DEPTH_OUT = HO * WO                      # depth_fc in_features (16)
CC = D_INNER                               # d_inner // d_depth_squeeze
LL = L + CC                                # 96 scan steps (mode == 'head')
R = DT_RANK
N = D_STATE
ND = N * D_INNER                           # 512: flattened SSM state (col = n*D_INNER + d)
LN_EPS = 1e-5


def _silu(x):
    # numerically stable x * sigmoid(x)
    e = jnp.exp(-jnp.abs(x))
    sig = jnp.where(x >= 0.0, 1.0 / (1.0 + e), e / (1.0 + e))
    return x * sig


def _softplus(x):
    return jnp.where(x > 20.0, x, jnp.log(1.0 + jnp.exp(jnp.minimum(x, 20.0))))


def _shift_down_rows(m, k, fill):
    """Rows i >= k get m[i - k]; rows i < k get `fill` (the scan identity)."""
    rows, cols = m.shape
    top = jnp.full((k, cols), fill, dtype=m.dtype)
    return jnp.concatenate([top, m[:rows - k, :]], axis=0)


# ------------------- fused forward kernel (one batch element per grid step) -------------------
def _fused_kernel(x_ref,
                  w_in_ref, g1_ref, w_conv_ref, b_conv_ref,
                  g2_ref, w_dconv_ref, b_dconv_ref,
                  w_dfc_ref, b_dfc_ref,
                  w_ssm_ref, dt_bias_ref, a_flat_ref, t_d_ref, e_b_ref, g_mat_ref,
                  d_vec_ref, ln_g_ref, ln_b_ref, w_out_ref,
                  o_ref):
    f32 = jnp.float32

    # ---------------- in_proj: (L, d_model) @ (d_model, 2*d_inner); split x / z ----------------
    x_tok = x_ref[0]                                                       # (L, 32) token-major
    xz = jnp.dot(x_tok, w_in_ref[...], preferred_element_type=f32)        # (L, 2*D_INNER)
    z = xz[:, D_INNER:]                                                    # (L, D_INNER) gate
    x_in = xz[:, :D_INNER]                                                 # (L, D_INNER)

    # -------- depthwise conv2d 3x3, pad 1, + SiLU (taps gathered via constant MXU matmul) --------
    sh1 = jnp.dot(g1_ref[...], x_in, preferred_element_type=f32)          # (9*L, D_INNER)
    wc = w_conv_ref[...]                                                   # (9, D_INNER)
    acc = jnp.zeros((L, D_INNER), f32)
    for t in range(9):
        acc = acc + sh1[t * L:(t + 1) * L, :] * wc[t]
    x_conv = _silu(acc + b_conv_ref[...])                                  # (L, D_INNER): scan tail / u

    # ------ depth_conv: depthwise 3x3, stride 2, pad 1 (subsample folded into gather matrix) ------
    sh2 = jnp.dot(g2_ref[...], x_conv, preferred_element_type=f32)        # (9*16, D_INNER)
    wd = w_dconv_ref[...]                                                  # (9, D_INNER)
    dacc = jnp.zeros((D_DEPTH_OUT, D_INNER), f32)
    for t in range(9):
        dacc = dacc + sh2[t * D_DEPTH_OUT:(t + 1) * D_DEPTH_OUT, :] * wd[t]
    d_flat = dacc + b_dconv_ref[...]                                       # (16, D_INNER)

    # ---------------- depth_fc + SiLU -> head tokens (CC, D_INNER) ----------------
    dx_head = _silu(jnp.dot(d_flat.T, w_dfc_ref[...], preferred_element_type=f32)
                    + b_dfc_ref[...])                                      # (CC, D_INNER)

    # ---------------- selective-scan input (mode == 'head'): [dx ; flattened x] ----------------
    xs = jnp.concatenate([dx_head, x_conv], axis=0)                        # (LL, D_INNER)

    # x_proj with dt projection folded in: columns = [delta_pre | B | C]
    x_dbl = jnp.dot(xs, w_ssm_ref[...], preferred_element_type=f32)       # (LL, D_INNER + 2N)
    delta = _softplus(x_dbl[:, :D_INNER] + dt_bias_ref[...])              # (LL, D_INNER)
    du = delta * xs                                                        # (LL, D_INNER)

    # flat (LL, N*D) discretized tensors via MXU replication matmuls
    delta_t = jnp.dot(delta, t_d_ref[...], preferred_element_type=f32)    # (LL, ND): delta[l,d] at n*D+d
    du_t = jnp.dot(du, t_d_ref[...], preferred_element_type=f32)          # (LL, ND)
    b_rep = jnp.dot(x_dbl[:, D_INNER:D_INNER + N], e_b_ref[...],
                    preferred_element_type=f32)                            # (LL, ND): B[l,n] at n*D+d
    dA = jnp.exp(delta_t * a_flat_ref[...])                                # exp(delta * A)
    dBu = du_t * b_rep                                                     # delta * u * B

    # -------- associative Hillis-Steele scan over time (rows): h_l = dA_l * h_{l-1} + dBu_l --------
    # (a, b) o (a', b') = (a*a', a*b' + b); identity (1, 0) is used as the top-row fill.
    A = dA
    Bv = dBu
    k = 1
    while k < LL:
        b_sh = _shift_down_rows(Bv, k, 0.0)
        new_B = A * b_sh + Bv
        if 2 * k < LL:                       # A of the last step is never consumed
            a_sh = _shift_down_rows(A, k, 1.0)
            A = A * a_sh
        Bv = new_B
        k *= 2
    h64 = Bv[CC:, :]                                                       # (L, ND) states of image tokens

    # ---------------- y = C . h + D * u (tail timesteps only; single MXU contraction) ----------------
    c_rep = jnp.dot(x_dbl[CC:, D_INNER + N:], e_b_ref[...],
                    preferred_element_type=f32)                            # (L, ND)
    y = jnp.dot(c_rep * h64, g_mat_ref[...],
                preferred_element_type=f32) + x_conv * d_vec_ref[...]      # (L, D_INNER)

    # ---------------- LayerNorm -> gate with SiLU(z) -> out_proj ----------------
    mu = jnp.mean(y, axis=-1, keepdims=True)
    yc = y - mu
    var = jnp.mean(yc * yc, axis=-1, keepdims=True)
    yn = yc * lax.rsqrt(var + LN_EPS) * ln_g_ref[...] + ln_b_ref[...]
    out = jnp.dot(yn * _silu(z), w_out_ref[...], preferred_element_type=f32)
    # TODO(synk): nn.Dropout(p=0.5) omitted -- eval-mode (identity) semantics.
    o_ref[0] = out


# ----------------------------- wrapper -----------------------------
_KP_ORDER = ("w_in_t", "g1", "w_conv", "b_conv", "g2", "w_dconv", "b_dconv",
             "w_dfc_t", "b_dfc",
             "w_ssm", "dt_bias", "a_flat", "t_d", "e_b", "g_mat",
             "d_vec", "ln_g", "ln_b", "w_out_t")


def ss2depth_k1_forward(x, kp):
    Bb, Hh, Ww, Cc = x.shape
    weights = [kp[k] for k in _KP_ORDER]

    in_specs = [pl.BlockSpec((1, L, D_MODEL), lambda b: (b, 0, 0))]
    for wgt in weights:
        in_specs.append(pl.BlockSpec(wgt.shape, lambda b, _nd=wgt.ndim: (0,) * _nd))

    out = pl.pallas_call(
        _fused_kernel,
        out_shape=jax.ShapeDtypeStruct((Bb, L, D_MODEL), jnp.float32),
        grid=(Bb,),
        in_specs=in_specs,
        out_specs=pl.BlockSpec((1, L, D_MODEL), lambda b: (b, 0, 0)),
        compiler_params=pltpu.CompilerParams(dimension_semantics=("parallel",)),
    )(x.reshape(Bb, Hh * Ww, Cc), *weights)
    return out.reshape(Bb, Hh, Ww, D_MODEL)


# ----------------------------- constant-matrix builders -----------------------------
def _conv_gather_matrix(h, w, stride):
    """Stacked 0/1 gather matrices for a depthwise 3x3 conv with padding 1 and given stride.

    Row t*(HO*WO) + (i*WO + j) selects input token (stride*i + di - 1, stride*j + dj - 1)
    for tap t = di*3 + dj (zero row when the tap falls in the zero padding)."""
    ho = (h + 2 - 3) // stride + 1
    wo = (w + 2 - 3) // stride + 1
    g = np.zeros((9 * ho * wo, h * w), np.float32)
    for di in range(3):
        for dj in range(3):
            t = di * 3 + dj
            for i in range(ho):
                for j in range(wo):
                    hi = stride * i + di - 1
                    wj = stride * j + dj - 1
                    if 0 <= hi < h and 0 <= wj < w:
                        g[t * ho * wo + i * wo + j, hi * w + wj] = 1.0
    return jnp.asarray(g)


# ----------------------------- parameters (deterministic, synthetic, module-style) -----------------------------
def init_params(key):
    ks = jax.random.split(key, 12)
    u = lambda k, shape, s: jax.random.uniform(k, shape, jnp.float32, -s, s)
    std_in = 1.0 / math.sqrt(D_MODEL)
    std_conv = 1.0 / math.sqrt(9.0)
    std_dfc = 1.0 / math.sqrt(D_DEPTH_OUT)
    std_xp = 1.0 / math.sqrt(D_INNER)
    std_dt = DT_RANK ** (-0.5)
    std_out = 1.0 / math.sqrt(D_INNER)

    w_in = u(ks[0], (2 * D_INNER, D_MODEL), std_in)             # in_proj (no bias)
    w_conv = u(ks[1], (3, 3, D_INNER), std_conv)                # depthwise conv2d
    b_conv = u(ks[2], (D_INNER,), std_conv)
    w_dconv = u(ks[3], (3, 3, D_INNER), std_conv)               # depthwise depth_conv (stride 2)
    b_dconv = u(ks[4], (D_INNER,), std_conv)
    w_dfc = u(ks[5], (D_INNER, D_DEPTH_OUT), std_dfc)           # depth_fc (out, in)
    b_dfc = u(ks[6], (D_INNER,), std_dfc)
    x_proj_w = u(ks[7], (R + 2 * N, D_INNER), std_xp)           # x_proj_weight
    dt_w = u(ks[8], (D_INNER, R), std_dt)                       # dt_projs_weight
    dt = jnp.exp(jax.random.uniform(ks[9], (D_INNER,), jnp.float32)
                 * (math.log(0.1) - math.log(0.001)) + math.log(0.001))
    dt = jnp.maximum(dt, 1e-4)
    dt_bias = dt + jnp.log(-jnp.expm1(-dt))
    A_logs = jnp.tile(jnp.log(jnp.arange(1, N + 1, dtype=jnp.float32)), (D_INNER, 1))
    Ds = jnp.ones((D_INNER,), jnp.float32)
    ln_g = jnp.ones((D_INNER,), jnp.float32)
    ln_b = jnp.zeros((D_INNER,), jnp.float32)
    w_out = u(ks[10], (D_MODEL, D_INNER), std_out)              # out_proj (no bias)

    return dict(w_in=w_in, w_conv=w_conv, b_conv=b_conv, w_dconv=w_dconv, b_dconv=b_dconv,
                w_dfc=w_dfc, b_dfc=b_dfc, x_proj_w=x_proj_w, dt_w=dt_w, dt_bias=dt_bias,
                A_logs=A_logs, Ds=Ds, ln_g=ln_g, ln_b=ln_b, w_out=w_out)


def prepare_params(p):
    """Fold dt projection into x_proj; build conv gather / SSM replication constants.

    NOTE: a real PyTorch checkpoint stores depthwise Conv2d weights as (C, 1, 3, 3);
    permute them to (3, 3, C) before the reshape(9, C) below (the synthetic init here is
    already (3, 3, C))."""
    w_delta = (p["dt_w"] @ p["x_proj_w"][:R, :]).T                         # (D_INNER, D_INNER)
    w_ssm = jnp.concatenate([w_delta,
                             p["x_proj_w"][R:R + N, :].T,                   # B columns
                             p["x_proj_w"][R + N:, :].T], axis=1)           # C columns -> (32, 64)
    A = -jnp.exp(p["A_logs"])                                              # (D_INNER, N)
    a_flat = A.T.reshape(1, ND)                                            # col n*D+d holds A[d, n]
    eye_d = jnp.eye(D_INNER, dtype=jnp.float32)
    t_d = jnp.tile(eye_d, (1, N))                                          # (D, ND): replicate d over n
    g_mat = t_d.T                                                          # (ND, D): sum over n per d
    e_b = jnp.repeat(jnp.eye(N, dtype=jnp.float32), D_INNER, axis=1)       # (N, ND): replicate n over d
    return dict(
        w_in_t=p["w_in"].T,
        g1=_conv_gather_matrix(H, W, 1),                                   # (576, 64) conv taps
        w_conv=p["w_conv"].reshape(9, D_INNER), b_conv=p["b_conv"].reshape(1, D_INNER),
        g2=_conv_gather_matrix(H, W, 2),                                   # (144, 64) strided taps
        w_dconv=p["w_dconv"].reshape(9, D_INNER), b_dconv=p["b_dconv"].reshape(1, D_INNER),
        w_dfc_t=p["w_dfc"].T, b_dfc=p["b_dfc"].reshape(1, D_INNER),
        w_ssm=w_ssm, dt_bias=p["dt_bias"].reshape(1, D_INNER),
        a_flat=a_flat, t_d=t_d, e_b=e_b, g_mat=g_mat,
        d_vec=p["Ds"].reshape(1, D_INNER),
        ln_g=p["ln_g"].reshape(1, D_INNER), ln_b=p["ln_b"].reshape(1, D_INNER),
        w_out_t=p["w_out"].T,
    )


if __name__ == "__main__":
    key = jax.random.PRNGKey(0)
    pkey, xkey = jax.random.split(key)
    params = init_params(pkey)
    kp = prepare_params(params)
    x = jax.random.normal(xkey, (B, H, W, D_MODEL), jnp.float32)

    out = jax.jit(ss2depth_k1_forward)(x, kp)
    out = jax.block_until_ready(out)
    assert out.shape == (B, H, W, D_MODEL)
    assert out.dtype == jnp.float32
    assert bool(jnp.all(jnp.isfinite(out)))
    print("KERNEL_OK")
</pallas_src>

<mosaic_0001>
module attributes {stable_mosaic.version = 11 : i64} {
  func.func @_fused_kernel(%arg0: i32, %arg1: memref<1x64x32xf32, #tpu.memory_space<vmem>>, %arg2: memref<32x64xf32, #tpu.memory_space<vmem>>, %arg3: memref<576x64xf32, #tpu.memory_space<vmem>>, %arg4: memref<9x32xf32, #tpu.memory_space<vmem>>, %arg5: memref<1x32xf32, #tpu.memory_space<vmem>>, %arg6: memref<144x64xf32, #tpu.memory_space<vmem>>, %arg7: memref<9x32xf32, #tpu.memory_space<vmem>>, %arg8: memref<1x32xf32, #tpu.memory_space<vmem>>, %arg9: memref<16x32xf32, #tpu.memory_space<vmem>>, %arg10: memref<1x32xf32, #tpu.memory_space<vmem>>, %arg11: memref<32x64xf32, #tpu.memory_space<vmem>>, %arg12: memref<1x32xf32, #tpu.memory_space<vmem>>, %arg13: memref<1x512xf32, #tpu.memory_space<vmem>>, %arg14: memref<32x512xf32, #tpu.memory_space<vmem>>, %arg15: memref<16x512xf32, #tpu.memory_space<vmem>>, %arg16: memref<512x32xf32, #tpu.memory_space<vmem>>, %arg17: memref<1x32xf32, #tpu.memory_space<vmem>>, %arg18: memref<1x32xf32, #tpu.memory_space<vmem>>, %arg19: memref<1x32xf32, #tpu.memory_space<vmem>>, %arg20: memref<32x32xf32, #tpu.memory_space<vmem>>, %arg21: memref<1x64x32xf32, #tpu.memory_space<vmem>>) attributes {dimension_semantics = [#tpu.dimension_semantics<parallel>], iteration_bounds = array<i64: 2>, scalar_prefetch = 0 : i64, scratch_operands = 0 : i64, tpu.core_type = #tpu.core_type<tc>, window_params = [{transform_indices = @transform_0, window_bounds = array<i64: 1, 64, 32>}, {pipeline_mode = #tpu.pipeline_mode<synchronous>, transform_indices = @transform_1, window_bounds = array<i64: 32, 64>}, {pipeline_mode = #tpu.pipeline_mode<synchronous>, transform_indices = @transform_2, window_bounds = array<i64: 576, 64>}, {pipeline_mode = #tpu.pipeline_mode<synchronous>, transform_indices = @transform_3, window_bounds = array<i64: 9, 32>}, {pipeline_mode = #tpu.pipeline_mode<synchronous>, transform_indices = @transform_4, window_bounds = array<i64: 1, 32>}, {pipeline_mode = #tpu.pipeline_mode<synchronous>, transform_indices = @transform_5, window_bounds = array<i64: 144, 64>}, {pipeline_mode = #tpu.pipeline_mode<synchronous>, transform_indices = @transform_6, window_bounds = array<i64: 9, 32>}, {pipeline_mode = #tpu.pipeline_mode<synchronous>, transform_indices = @transform_7, window_bounds = array<i64: 1, 32>}, {pipeline_mode = #tpu.pipeline_mode<synchronous>, transform_indices = @transform_8, window_bounds = array<i64: 16, 32>}, {pipeline_mode = #tpu.pipeline_mode<synchronous>, transform_indices = @transform_9, window_bounds = array<i64: 1, 32>}, {pipeline_mode = #tpu.pipeline_mode<synchronous>, transform_indices = @transform_10, window_bounds = array<i64: 32, 64>}, {pipeline_mode = #tpu.pipeline_mode<synchronous>, transform_indices = @transform_11, window_bounds = array<i64: 1, 32>}, {pipeline_mode = #tpu.pipeline_mode<synchronous>, transform_indices = @transform_12, window_bounds = array<i64: 1, 512>}, {pipeline_mode = #tpu.pipeline_mode<synchronous>, transform_indices = @transform_13, window_bounds = array<i64: 32, 512>}, {pipeline_mode = #tpu.pipeline_mode<synchronous>, transform_indices = @transform_14, window_bounds = array<i64: 16, 512>}, {pipeline_mode = #tpu.pipeline_mode<synchronous>, transform_indices = @transform_15, window_bounds = array<i64: 512, 32>}, {pipeline_mode = #tpu.pipeline_mode<synchronous>, transform_indices = @transform_16, window_bounds = array<i64: 1, 32>}, {pipeline_mode = #tpu.pipeline_mode<synchronous>, transform_indices = @transform_17, window_bounds = array<i64: 1, 32>}, {pipeline_mode = #tpu.pipeline_mode<synchronous>, transform_indices = @transform_18, window_bounds = array<i64: 1, 32>}, {pipeline_mode = #tpu.pipeline_mode<synchronous>, transform_indices = @transform_19, window_bounds = array<i64: 32, 32>}, {transform_indices = @transform_20, window_bounds = array<i64: 1, 64, 32>}]} {
    %c0 = arith.constant 0 : index
    %c0_0 = arith.constant 0 : index
    %c0_1 = arith.constant 0 : index
    %0 = vector.load %arg1[%c0, %c0_0, %c0_1] : memref<1x64x32xf32, #tpu.memory_space<vmem>>, vector<1x64x32xf32>
    %1 = vector.shape_cast %0 : vector<1x64x32xf32> to vector<64x32xf32>
    %c0_2 = arith.constant 0 : index
    %c0_3 = arith.constant 0 : index
    %2 = vector.load %arg2[%c0_2, %c0_3] : memref<32x64xf32, #tpu.memory_space<vmem>>, vector<32x64xf32>
    %cst = arith.constant dense<0.000000e+00> : vector<64x64xf32>
    %3 = tpu.matmul %1, %2, %cst {dimension_numbers = #tpu.dot_dimension_numbers<[1], [0], [0], [1], [0, 0, 1, 1], [], []>} : vector<64x32xf32>, vector<32x64xf32>, vector<64x64xf32> -> vector<64x64xf32>
    %4 = vector.extract_strided_slice %3 {offsets = [0, 32], sizes = [64, 32], strides = [1, 1]} : vector<64x64xf32> to vector<64x32xf32>
    %5 = vector.extract_strided_slice %3 {offsets = [0, 0], sizes = [64, 32], strides = [1, 1]} : vector<64x64xf32> to vector<64x32xf32>
    %c0_4 = arith.constant 0 : index
    %c0_5 = arith.constant 0 : index
    %6 = vector.load %arg3[%c0_4, %c0_5] : memref<576x64xf32, #tpu.memory_space<vmem>>, vector<576x64xf32>
    %cst_6 = arith.constant dense<0.000000e+00> : vector<576x32xf32>
    %7 = tpu.matmul %6, %5, %cst_6 {dimension_numbers = #tpu.dot_dimension_numbers<[1], [0], [0], [1], [0, 0, 1, 1], [], []>} : vector<576x64xf32>, vector<64x32xf32>, vector<576x32xf32> -> vector<576x32xf32>
    %c0_7 = arith.constant 0 : index
    %c0_8 = arith.constant 0 : index
    %8 = vector.load %arg4[%c0_7, %c0_8] : memref<9x32xf32, #tpu.memory_space<vmem>>, vector<9x32xf32>
    %cst_9 = arith.constant 0.000000e+00 : f32
    %9 = vector.broadcast %cst_9 : f32 to vector<64x32xf32>
    %10 = vector.extract_strided_slice %7 {offsets = [0, 0], sizes = [64, 32], strides = [1, 1]} : vector<576x32xf32> to vector<64x32xf32>
    %11 = vector.extract_strided_slice %8 {offsets = [0, 0], sizes = [1, 32], strides = [1, 1]} : vector<9x32xf32> to vector<1x32xf32>
    %12 = vector.shape_cast %11 : vector<1x32xf32> to vector<32xf32>
    %13 = vector.shape_cast %12 : vector<32xf32> to vector<1x32xf32>
    %14 = vector.broadcast %13 : vector<1x32xf32> to vector<64x32xf32>
    %15 = arith.mulf %10, %14 : vector<64x32xf32>
    %16 = arith.addf %9, %15 : vector<64x32xf32>
    %17 = vector.extract_strided_slice %7 {offsets = [64, 0], sizes = [64, 32], strides = [1, 1]} : vector<576x32xf32> to vector<64x32xf32>
    %18 = vector.extract_strided_slice %8 {offsets = [1, 0], sizes = [1, 32], strides = [1, 1]} : vector<9x32xf32> to vector<1x32xf32>
    %19 = vector.shape_cast %18 : vector<1x32xf32> to vector<32xf32>
    %20 = vector.shape_cast %19 : vector<32xf32> to vector<1x32xf32>
    %21 = vector.broadcast %20 : vector<1x32xf32> to vector<64x32xf32>
    %22 = arith.mulf %17, %21 : vector<64x32xf32>
    %23 = arith.addf %16, %22 : vector<64x32xf32>
    %24 = vector.extract_strided_slice %7 {offsets = [128, 0], sizes = [64, 32], strides = [1, 1]} : vector<576x32xf32> to vector<64x32xf32>
    %25 = vector.extract_strided_slice %8 {offsets = [2, 0], sizes = [1, 32], strides = [1, 1]} : vector<9x32xf32> to vector<1x32xf32>
    %26 = vector.shape_cast %25 : vector<1x32xf32> to vector<32xf32>
    %27 = vector.shape_cast %26 : vector<32xf32> to vector<1x32xf32>
    %28 = vector.broadcast %27 : vector<1x32xf32> to vector<64x32xf32>
    %29 = arith.mulf %24, %28 : vector<64x32xf32>
    %30 = arith.addf %23, %29 : vector<64x32xf32>
    %31 = vector.extract_strided_slice %7 {offsets = [192, 0], sizes = [64, 32], strides = [1, 1]} : vector<576x32xf32> to vector<64x32xf32>
    %32 = vector.extract_strided_slice %8 {offsets = [3, 0], sizes = [1, 32], strides = [1, 1]} : vector<9x32xf32> to vector<1x32xf32>
    %33 = vector.shape_cast %32 : vector<1x32xf32> to vector<32xf32>
    %34 = vector.shape_cast %33 : vector<32xf32> to vector<1x32xf32>
    %35 = vector.broadcast %34 : vector<1x32xf32> to vector<64x32xf32>
    %36 = arith.mulf %31, %35 : vector<64x32xf32>
    %37 = arith.addf %30, %36 : vector<64x32xf32>
    %38 = vector.extract_strided_slice %7 {offsets = [256, 0], sizes = [64, 32], strides = [1, 1]} : vector<576x32xf32> to vector<64x32xf32>
    %39 = vector.extract_strided_slice %8 {offsets = [4, 0], sizes = [1, 32], strides = [1, 1]} : vector<9x32xf32> to vector<1x32xf32>
    %40 = vector.shape_cast %39 : vector<1x32xf32> to vector<32xf32>
    %41 = vector.shape_cast %40 : vector<32xf32> to vector<1x32xf32>
    %42 = vector.broadcast %41 : vector<1x32xf32> to vector<64x32xf32>
    %43 = arith.mulf %38, %42 : vector<64x32xf32>
    %44 = arith.addf %37, %43 : vector<64x32xf32>
    %45 = vector.extract_strided_slice %7 {offsets = [320, 0], sizes = [64, 32], strides = [1, 1]} : vector<576x32xf32> to vector<64x32xf32>
    %46 = vector.extract_strided_slice %8 {offsets = [5, 0], sizes = [1, 32], strides = [1, 1]} : vector<9x32xf32> to vector<1x32xf32>
    %47 = vector.shape_cast %46 : vector<1x32xf32> to vector<32xf32>
    %48 = vector.shape_cast %47 : vector<32xf32> to vector<1x32xf32>
    %49 = vector.broadcast %48 : vector<1x32xf32> to vector<64x32xf32>
    %50 = arith.mulf %45, %49 : vector<64x32xf32>
    %51 = arith.addf %44, %50 : vector<64x32xf32>
    %52 = vector.extract_strided_slice %7 {offsets = [384, 0], sizes = [64, 32], strides = [1, 1]} : vector<576x32xf32> to vector<64x32xf32>
    %53 = vector.extract_strided_slice %8 {offsets = [6, 0], sizes = [1, 32], strides = [1, 1]} : vector<9x32xf32> to vector<1x32xf32>
    %54 = vector.shape_cast %53 : vector<1x32xf32> to vector<32xf32>
    %55 = vector.shape_cast %54 : vector<32xf32> to vector<1x32xf32>
    %56 = vector.broadcast %55 : vector<1x32xf32> to vector<64x32xf32>
    %57 = arith.mulf %52, %56 : vector<64x32xf32>
    %58 = arith.addf %51, %57 : vector<64x32xf32>
    %59 = vector.extract_strided_slice %7 {offsets = [448, 0], sizes = [64, 32], strides = [1, 1]} : vector<576x32xf32> to vector<64x32xf32>
    %60 = vector.extract_strided_slice %8 {offsets = [7, 0], sizes = [1, 32], strides = [1, 1]} : vector<9x32xf32> to vector<1x32xf32>
    %61 = vector.shape_cast %60 : vector<1x32xf32> to vector<32xf32>
    %62 = vector.shape_cast %61 : vector<32xf32> to vector<1x32xf32>
    %63 = vector.broadcast %62 : vector<1x32xf32> to vector<64x32xf32>
    %64 = arith.mulf %59, %63 : vector<64x32xf32>
    %65 = arith.addf %58, %64 : vector<64x32xf32>
    %66 = vector.extract_strided_slice %7 {offsets = [512, 0], sizes = [64, 32], strides = [1, 1]} : vector<576x32xf32> to vector<64x32xf32>
    %67 = vector.extract_strided_slice %8 {offsets = [8, 0], sizes = [1, 32], strides = [1, 1]} : vector<9x32xf32> to vector<1x32xf32>
    %68 = vector.shape_cast %67 : vector<1x32xf32> to vector<32xf32>
    %69 = vector.shape_cast %68 : vector<32xf32> to vector<1x32xf32>
    %70 = vector.broadcast %69 : vector<1x32xf32> to vector<64x32xf32>
    %71 = arith.mulf %66, %70 : vector<64x32xf32>
    %72 = arith.addf %65, %71 : vector<64x32xf32>
    %c0_10 = arith.constant 0 : index
    %c0_11 = arith.constant 0 : index
    %73 = vector.load %arg5[%c0_10, %c0_11] : memref<1x32xf32, #tpu.memory_space<vmem>>, vector<1x32xf32>
    %74 = vector.broadcast %73 : vector<1x32xf32> to vector<64x32xf32>
    %75 = arith.addf %72, %74 : vector<64x32xf32>
    %76 = math.absf %75 : vector<64x32xf32>
    %cst_12 = arith.constant 0.000000e+00 : f32
    %77 = vector.broadcast %cst_12 : f32 to vector<64x32xf32>
    %78 = arith.subf %77, %76 : vector<64x32xf32>
    %79 = math.exp %78 : vector<64x32xf32>
    %cst_13 = arith.constant 0.000000e+00 : f32
    %80 = vector.broadcast %cst_13 : f32 to vector<64x32xf32>
    %81 = arith.cmpf oge, %75, %80 : vector<64x32xf32>
    %cst_14 = arith.constant 1.000000e+00 : f32
    %82 = vector.broadcast %cst_14 : f32 to vector<64x32xf32>
    %83 = arith.addf %82, %79 : vector<64x32xf32>
    %cst_15 = arith.constant 1.000000e+00 : f32
    %84 = vector.broadcast %cst_15 : f32 to vector<64x32xf32>
    %85 = arith.divf %84, %83 : vector<64x32xf32>
    %cst_16 = arith.constant 1.000000e+00 : f32
    %86 = vector.broadcast %cst_16 : f32 to vector<64x32xf32>
    %87 = arith.addf %86, %79 : vector<64x32xf32>
    %88 = arith.divf %79, %87 : vector<64x32xf32>
    %89 = arith.select %81, %85, %88 : vector<64x32xi1>, vector<64x32xf32>
    %90 = arith.mulf %75, %89 : vector<64x32xf32>
    %c0_17 = arith.constant 0 : index
    %c0_18 = arith.constant 0 : index
    %91 = vector.load %arg6[%c0_17, %c0_18] : memref<144x64xf32, #tpu.memory_space<vmem>>, vector<144x64xf32>
    %cst_19 = arith.constant dense<0.000000e+00> : vector<144x32xf32>
    %92 = tpu.matmul %91, %90, %cst_19 {dimension_numbers = #tpu.dot_dimension_numbers<[1], [0], [0], [1], [0, 0, 1, 1], [], []>} : vector<144x64xf32>, vector<64x32xf32>, vector<144x32xf32> -> vector<144x32xf32>
    %c0_20 = arith.constant 0 : index
    %c0_21 = arith.constant 0 : index
    %93 = vector.load %arg7[%c0_20, %c0_21] : memref<9x32xf32, #tpu.memory_space<vmem>>, vector<9x32xf32>
    %cst_22 = arith.constant 0.000000e+00 : f32
    %94 = vector.broadcast %cst_22 : f32 to vector<16x32xf32>
    %95 = vector.extract_strided_slice %92 {offsets = [0, 0], sizes = [16, 32], strides = [1, 1]} : vector<144x32xf32> to vector<16x32xf32>
    %96 = vector.extract_strided_slice %93 {offsets = [0, 0], sizes = [1, 32], strides = [1, 1]} : vector<9x32xf32> to vector<1x32xf32>
    %97 = vector.shape_cast %96 : vector<1x32xf32> to vector<32xf32>
    %98 = vector.shape_cast %97 : vector<32xf32> to vector<1x32xf32>
    %99 = vector.broadcast %98 : vector<1x32xf32> to vector<16x32xf32>
    %100 = arith.mulf %95, %99 : vector<16x32xf32>
    %101 = arith.addf %94, %100 : vector<16x32xf32>
    %102 = vector.extract_strided_slice %92 {offsets = [16, 0], sizes = [16, 32], strides = [1, 1]} : vector<144x32xf32> to vector<16x32xf32>
    %103 = vector.extract_strided_slice %93 {offsets = [1, 0], sizes = [1, 32], strides = [1, 1]} : vector<9x32xf32> to vector<1x32xf32>
    %104 = vector.shape_cast %103 : vector<1x32xf32> to vector<32xf32>
    %105 = vector.shape_cast %104 : vector<32xf32> to vector<1x32xf32>
    %106 = vector.broadcast %105 : vector<1x32xf32> to vector<16x32xf32>
    %107 = arith.mulf %102, %106 : vector<16x32xf32>
    %108 = arith.addf %101, %107 : vector<16x32xf32>
    %109 = vector.extract_strided_slice %92 {offsets = [32, 0], sizes = [16, 32], strides = [1, 1]} : vector<144x32xf32> to vector<16x32xf32>
    %110 = vector.extract_strided_slice %93 {offsets = [2, 0], sizes = [1, 32], strides = [1, 1]} : vector<9x32xf32> to vector<1x32xf32>
    %111 = vector.shape_cast %110 : vector<1x32xf32> to vector<32xf32>
    %112 = vector.shape_cast %111 : vector<32xf32> to vector<1x32xf32>
    %113 = vector.broadcast %112 : vector<1x32xf32> to vector<16x32xf32>
    %114 = arith.mulf %109, %113 : vector<16x32xf32>
    %115 = arith.addf %108, %114 : vector<16x32xf32>
    %116 = vector.extract_strided_slice %92 {offsets = [48, 0], sizes = [16, 32], strides = [1, 1]} : vector<144x32xf32> to vector<16x32xf32>
    %117 = vector.extract_strided_slice %93 {offsets = [3, 0], sizes = [1, 32], strides = [1, 1]} : vector<9x32xf32> to vector<1x32xf32>
    %118 = vector.shape_cast %117 : vector<1x32xf32> to vector<32xf32>
    %119 = vector.shape_cast %118 : vector<32xf32> to vector<1x32xf32>
    %120 = vector.broadcast %119 : vector<1x32xf32> to vector<16x32xf32>
    %121 = arith.mulf %116, %120 : vector<16x32xf32>
    %122 = arith.addf %115, %121 : vector<16x32xf32>
    %123 = vector.extract_strided_slice %92 {offsets = [64, 0], sizes = [16, 32], strides = [1, 1]} : vector<144x32xf32> to vector<16x32xf32>
    %124 = vector.extract_strided_slice %93 {offsets = [4, 0], sizes = [1, 32], strides = [1, 1]} : vector<9x32xf32> to vector<1x32xf32>
    %125 = vector.shape_cast %124 : vector<1x32xf32> to vector<32xf32>
    %126 = vector.shape_cast %125 : vector<32xf32> to vector<1x32xf32>
    %127 = vector.broadcast %126 : vector<1x32xf32> to vector<16x32xf32>
    %128 = arith.mulf %123, %127 : vector<16x32xf32>
    %129 = arith.addf %122, %128 : vector<16x32xf32>
    %130 = vector.extract_strided_slice %92 {offsets = [80, 0], sizes = [16, 32], strides = [1, 1]} : vector<144x32xf32> to vector<16x32xf32>
    %131 = vector.extract_strided_slice %93 {offsets = [5, 0], sizes = [1, 32], strides = [1, 1]} : vector<9x32xf32> to vector<1x32xf32>
    %132 = vector.shape_cast %131 : vector<1x32xf32> to vector<32xf32>
    %133 = vector.shape_cast %132 : vector<32xf32> to vector<1x32xf32>
    %134 = vector.broadcast %133 : vector<1x32xf32> to vector<16x32xf32>
    %135 = arith.mulf %130, %134 : vector<16x32xf32>
    %136 = arith.addf %129, %135 : vector<16x32xf32>
    %137 = vector.extract_strided_slice %92 {offsets = [96, 0], sizes = [16, 32], strides = [1, 1]} : vector<144x32xf32> to vector<16x32xf32>
    %138 = vector.extract_strided_slice %93 {offsets = [6, 0], sizes = [1, 32], strides = [1, 1]} : vector<9x32xf32> to vector<1x32xf32>
    %139 = vector.shape_cast %138 : vector<1x32xf32> to vector<32xf32>
    %140 = vector.shape_cast %139 : vector<32xf32> to vector<1x32xf32>
    %141 = vector.broadcast %140 : vector<1x32xf32> to vector<16x32xf32>
    %142 = arith.mulf %137, %141 : vector<16x32xf32>
    %143 = arith.addf %136, %142 : vector<16x32xf32>
    %144 = vector.extract_strided_slice %92 {offsets = [112, 0], sizes = [16, 32], strides = [1, 1]} : vector<144x32xf32> to vector<16x32xf32>
    %145 = vector.extract_strided_slice %93 {offsets = [7, 0], sizes = [1, 32], strides = [1, 1]} : vector<9x32xf32> to vector<1x32xf32>
    %146 = vector.shape_cast %145 : vector<1x32xf32> to vector<32xf32>
    %147 = vector.shape_cast %146 : vector<32xf32> to vector<1x32xf32>
    %148 = vector.broadcast %147 : vector<1x32xf32> to vector<16x32xf32>
    %149 = arith.mulf %144, %148 : vector<16x32xf32>
    %150 = arith.addf %143, %149 : vector<16x32xf32>
    %151 = vector.extract_strided_slice %92 {offsets = [128, 0], sizes = [16, 32], strides = [1, 1]} : vector<144x32xf32> to vector<16x32xf32>
    %152 = vector.extract_strided_slice %93 {offsets = [8, 0], sizes = [1, 32], strides = [1, 1]} : vector<9x32xf32> to vector<1x32xf32>
    %153 = vector.shape_cast %152 : vector<1x32xf32> to vector<32xf32>
    %154 = vector.shape_cast %153 : vector<32xf32> to vector<1x32xf32>
    %155 = vector.broadcast %154 : vector<1x32xf32> to vector<16x32xf32>
    %156 = arith.mulf %151, %155 : vector<16x32xf32>
    %157 = arith.addf %150, %156 : vector<16x32xf32>
    %c0_23 = arith.constant 0 : index
    %c0_24 = arith.constant 0 : index
    %158 = vector.load %arg8[%c0_23, %c0_24] : memref<1x32xf32, #tpu.memory_space<vmem>>, vector<1x32xf32>
    %159 = vector.broadcast %158 : vector<1x32xf32> to vector<16x32xf32>
    %160 = arith.addf %157, %159 : vector<16x32xf32>
    %161 = tpu.transpose %160, [1, 0] : vector<16x32xf32> -> vector<32x16xf32>
    %c0_25 = arith.constant 0 : index
    %c0_26 = arith.constant 0 : index
    %162 = vector.load %arg9[%c0_25, %c0_26] : memref<16x32xf32, #tpu.memory_space<vmem>>, vector<16x32xf32>
    %cst_27 = arith.constant dense<0.000000e+00> : vector<32x32xf32>
    %163 = tpu.matmul %161, %162, %cst_27 {dimension_numbers = #tpu.dot_dimension_numbers<[1], [0], [0], [1], [0, 0, 1, 1], [], []>} : vector<32x16xf32>, vector<16x32xf32>, vector<32x32xf32> -> vector<32x32xf32>
    %c0_28 = arith.constant 0 : index
    %c0_29 = arith.constant 0 : index
    %164 = vector.load %arg10[%c0_28, %c0_29] : memref<1x32xf32, #tpu.memory_space<vmem>>, vector<1x32xf32>
    %165 = vector.broadcast %164 : vector<1x32xf32> to vector<32x32xf32>
    %166 = arith.addf %163, %165 : vector<32x32xf32>
    %167 = math.absf %166 : vector<32x32xf32>
    %cst_30 = arith.constant 0.000000e+00 : f32
    %168 = vector.broadcast %cst_30 : f32 to vector<32x32xf32>
    %169 = arith.subf %168, %167 : vector<32x32xf32>
    %170 = math.exp %169 : vector<32x32xf32>
    %cst_31 = arith.constant 0.000000e+00 : f32
    %171 = vector.broadcast %cst_31 : f32 to vector<32x32xf32>
    %172 = arith.cmpf oge, %166, %171 : vector<32x32xf32>
    %cst_32 = arith.constant 1.000000e+00 : f32
    %173 = vector.broadcast %cst_32 : f32 to vector<32x32xf32>
    %174 = arith.addf %173, %170 : vector<32x32xf32>
    %cst_33 = arith.constant 1.000000e+00 : f32
    %175 = vector.broadcast %cst_33 : f32 to vector<32x32xf32>
    %176 = arith.divf %175, %174 : vector<32x32xf32>
    %cst_34 = arith.constant 1.000000e+00 : f32
    %177 = vector.broadcast %cst_34 : f32 to vector<32x32xf32>
    %178 = arith.addf %177, %170 : vector<32x32xf32>
    %179 = arith.divf %170, %178 : vector<32x32xf32>
    %180 = arith.select %172, %176, %179 : vector<32x32xi1>, vector<32x32xf32>
    %181 = arith.mulf %166, %180 : vector<32x32xf32>
    %182 = tpu.concatenate %181, %90 in 0 : vector<32x32xf32>, vector<64x32xf32> -> vector<96x32xf32>
    %c0_35 = arith.constant 0 : index
    %c0_36 = arith.constant 0 : index
    %183 = vector.load %arg11[%c0_35, %c0_36] : memref<32x64xf32, #tpu.memory_space<vmem>>, vector<32x64xf32>
    %cst_37 = arith.constant dense<0.000000e+00> : vector<96x64xf32>
    %184 = tpu.matmul %182, %183, %cst_37 {dimension_numbers = #tpu.dot_dimension_numbers<[1], [0], [0], [1], [0, 0, 1, 1], [], []>} : vector<96x32xf32>, vector<32x64xf32>, vector<96x64xf32> -> vector<96x64xf32>
    %185 = vector.extract_strided_slice %184 {offsets = [0, 0], sizes = [96, 32], strides = [1, 1]} : vector<96x64xf32> to vector<96x32xf32>
    %c0_38 = arith.constant 0 : index
    %c0_39 = arith.constant 0 : index
    %186 = vector.load %arg12[%c0_38, %c0_39] : memref<1x32xf32, #tpu.memory_space<vmem>>, vector<1x32xf32>
    %187 = vector.broadcast %186 : vector<1x32xf32> to vector<96x32xf32>
    %188 = arith.addf %185, %187 : vector<96x32xf32>
    %cst_40 = arith.constant 2.000000e+01 : f32
    %189 = vector.broadcast %cst_40 : f32 to vector<96x32xf32>
    %190 = arith.cmpf ogt, %188, %189 : vector<96x32xf32>
    %cst_41 = arith.constant 2.000000e+01 : f32
    %191 = vector.broadcast %cst_41 : f32 to vector<96x32xf32>
    %192 = arith.minimumf %188, %191 : vector<96x32xf32>
    %193 = math.exp %192 : vector<96x32xf32>
    %cst_42 = arith.constant 1.000000e+00 : f32
    %194 = vector.broadcast %cst_42 : f32 to vector<96x32xf32>
    %195 = arith.addf %194, %193 : vector<96x32xf32>
    %196 = math.log %195 : vector<96x32xf32>
    %197 = arith.select %190, %188, %196 : vector<96x32xi1>, vector<96x32xf32>
    %198 = arith.mulf %197, %182 : vector<96x32xf32>
    %c0_43 = arith.constant 0 : index
    %c0_44 = arith.constant 0 : index
    %199 = vector.load %arg14[%c0_43, %c0_44] : memref<32x512xf32, #tpu.memory_space<vmem>>, vector<32x512xf32>
    %cst_45 = arith.constant dense<0.000000e+00> : vector<96x512xf32>
    %200 = tpu.matmul %197, %199, %cst_45 {dimension_numbers = #tpu.dot_dimension_numbers<[1], [0], [0], [1], [0, 0, 1, 1], [], []>} : vector<96x32xf32>, vector<32x512xf32>, vector<96x512xf32> -> vector<96x512xf32>
    %c0_46 = arith.constant 0 : index
    %c0_47 = arith.constant 0 : index
    %201 = vector.load %arg14[%c0_46, %c0_47] : memref<32x512xf32, #tpu.memory_space<vmem>>, vector<32x512xf32>
    %cst_48 = arith.constant dense<0.000000e+00> : vector<96x512xf32>
    %202 = tpu.matmul %198, %201, %cst_48 {dimension_numbers = #tpu.dot_dimension_numbers<[1], [0], [0], [1], [0, 0, 1, 1], [], []>} : vector<96x32xf32>, vector<32x512xf32>, vector<96x512xf32> -> vector<96x512xf32>
    %203 = vector.extract_strided_slice %184 {offsets = [0, 32], sizes = [96, 16], strides = [1, 1]} : vector<96x64xf32> to vector<96x16xf32>
    %c0_49 = arith.constant 0 : index
    %c0_50 = arith.constant 0 : index
    %204 = vector.load %arg15[%c0_49, %c0_50] : memref<16x512xf32, #tpu.memory_space<vmem>>, vector<16x512xf32>
    %cst_51 = arith.constant dense<0.000000e+00> : vector<96x512xf32>
    %205 = tpu.matmul %203, %204, %cst_51 {dimension_numbers = #tpu.dot_dimension_numbers<[1], [0], [0], [1], [0, 0, 1, 1], [], []>} : vector<96x16xf32>, vector<16x512xf32>, vector<96x512xf32> -> vector<96x512xf32>
    %c0_52 = arith.constant 0 : index
    %c0_53 = arith.constant 0 : index
    %206 = vector.load %arg13[%c0_52, %c0_53] : memref<1x512xf32, #tpu.memory_space<vmem>>, vector<1x512xf32>
    %207 = vector.broadcast %206 : vector<1x512xf32> to vector<96x512xf32>
    %208 = arith.mulf %200, %207 : vector<96x512xf32>
    %209 = math.exp %208 : vector<96x512xf32>
    %210 = arith.mulf %202, %205 : vector<96x512xf32>
    %cst_54 = arith.constant 0.000000e+00 : f32
    %211 = vector.broadcast %cst_54 : f32 to vector<1x512xf32>
    %212 = vector.extract_strided_slice %210 {offsets = [0, 0], sizes = [95, 512], strides = [1, 1]} : vector<96x512xf32> to vector<95x512xf32>
    %213 = tpu.concatenate %211, %212 in 0 : vector<1x512xf32>, vector<95x512xf32> -> vector<96x512xf32>
    %214 = arith.mulf %209, %213 : vector<96x512xf32>
    %215 = arith.addf %214, %210 : vector<96x512xf32>
    %cst_55 = arith.constant 1.000000e+00 : f32
    %216 = vector.broadcast %cst_55 : f32 to vector<1x512xf32>
    %217 = vector.extract_strided_slice %209 {offsets = [0, 0], sizes = [95, 512], strides = [1, 1]} : vector<96x512xf32> to vector<95x512xf32>
    %218 = tpu.concatenate %216, %217 in 0 : vector<1x512xf32>, vector<95x512xf32> -> vector<96x512xf32>
    %219 = arith.mulf %209, %218 : vector<96x512xf32>
    %cst_56 = arith.constant 0.000000e+00 : f32
    %220 = vector.broadcast %cst_56 : f32 to vector<2x512xf32>
    %221 = vector.extract_strided_slice %215 {offsets = [0, 0], sizes = [94, 512], strides = [1, 1]} : vector<96x512xf32> to vector<94x512xf32>
    %222 = tpu.concatenate %220, %221 in 0 : vector<2x512xf32>, vector<94x512xf32> -> vector<96x512xf32>
    %223 = arith.mulf %219, %222 : vector<96x512xf32>
    %224 = arith.addf %223, %215 : vector<96x512xf32>
    %cst_57 = arith.constant 1.000000e+00 : f32
    %225 = vector.broadcast %cst_57 : f32 to vector<2x512xf32>
    %226 = vector.extract_strided_slice %219 {offsets = [0, 0], sizes = [94, 512], strides = [1, 1]} : vector<96x512xf32> to vector<94x512xf32>
    %227 = tpu.concatenate %225, %226 in 0 : vector<2x512xf32>, vector<94x512xf32> -> vector<96x512xf32>
    %228 = arith.mulf %219, %227 : vector<96x512xf32>
    %cst_58 = arith.constant 0.000000e+00 : f32
    %229 = vector.broadcast %cst_58 : f32 to vector<4x512xf32>
    %230 = vector.extract_strided_slice %224 {offsets = [0, 0], sizes = [92, 512], strides = [1, 1]} : vector<96x512xf32> to vector<92x512xf32>
    %231 = tpu.concatenate %229, %230 in 0 : vector<4x512xf32>, vector<92x512xf32> -> vector<96x512xf32>
    %232 = arith.mulf %228, %231 : vector<96x512xf32>
    %233 = arith.addf %232, %224 : vector<96x512xf32>
    %cst_59 = arith.constant 1.000000e+00 : f32
    %234 = vector.broadcast %cst_59 : f32 to vector<4x512xf32>
    %235 = vector.extract_strided_slice %228 {offsets = [0, 0], sizes = [92, 512], strides = [1, 1]} : vector<96x512xf32> to vector<92x512xf32>
    %236 = tpu.concatenate %234, %235 in 0 : vector<4x512xf32>, vector<92x512xf32> -> vector<96x512xf32>
    %237 = arith.mulf %228, %236 : vector<96x512xf32>
    %cst_60 = arith.constant 0.000000e+00 : f32
    %238 = vector.broadcast %cst_60 : f32 to vector<8x512xf32>
    %239 = vector.extract_strided_slice %233 {offsets = [0, 0], sizes = [88, 512], strides = [1, 1]} : vector<96x512xf32> to vector<88x512xf32>
    %240 = tpu.concatenate %238, %239 in 0 : vector<8x512xf32>, vector<88x512xf32> -> vector<96x512xf32>
    %241 = arith.mulf %237, %240 : vector<96x512xf32>
    %242 = arith.addf %241, %233 : vector<96x512xf32>
    %cst_61 = arith.constant 1.000000e+00 : f32
    %243 = vector.broadcast %cst_61 : f32 to vector<8x512xf32>
    %244 = vector.extract_strided_slice %237 {offsets = [0, 0], sizes = [88, 512], strides = [1, 1]} : vector<96x512xf32> to vector<88x512xf32>
    %245 = tpu.concatenate %243, %244 in 0 : vector<8x512xf32>, vector<88x512xf32> -> vector<96x512xf32>
    %246 = arith.mulf %237, %245 : vector<96x512xf32>
    %cst_62 = arith.constant 0.000000e+00 : f32
    %247 = vector.broadcast %cst_62 : f32 to vector<16x512xf32>
    %248 = vector.extract_strided_slice %242 {offsets = [0, 0], sizes = [80, 512], strides = [1, 1]} : vector<96x512xf32> to vector<80x512xf32>
    %249 = tpu.concatenate %247, %248 in 0 : vector<16x512xf32>, vector<80x512xf32> -> vector<96x512xf32>
    %250 = arith.mulf %246, %249 : vector<96x512xf32>
    %251 = arith.addf %250, %242 : vector<96x512xf32>
    %cst_63 = arith.constant 1.000000e+00 : f32
    %252 = vector.broadcast %cst_63 : f32 to vector<16x512xf32>
    %253 = vector.extract_strided_slice %246 {offsets = [0, 0], sizes = [80, 512], strides = [1, 1]} : vector<96x512xf32> to vector<80x512xf32>
    %254 = tpu.concatenate %252, %253 in 0 : vector<16x512xf32>, vector<80x512xf32> -> vector<96x512xf32>
    %255 = arith.mulf %246, %254 : vector<96x512xf32>
    %cst_64 = arith.constant 0.000000e+00 : f32
    %256 = vector.broadcast %cst_64 : f32 to vector<32x512xf32>
    %257 = vector.extract_strided_slice %251 {offsets = [0, 0], sizes = [64, 512], strides = [1, 1]} : vector<96x512xf32> to vector<64x512xf32>
    %258 = tpu.concatenate %256, %257 in 0 : vector<32x512xf32>, vector<64x512xf32> -> vector<96x512xf32>
    %259 = arith.mulf %255, %258 : vector<96x512xf32>
    %260 = arith.addf %259, %251 : vector<96x512xf32>
    %cst_65 = arith.constant 1.000000e+00 : f32
    %261 = vector.broadcast %cst_65 : f32 to vector<32x512xf32>
    %262 = vector.extract_strided_slice %255 {offsets = [0, 0], sizes = [64, 512], strides = [1, 1]} : vector<96x512xf32> to vector<64x512xf32>
    %263 = tpu.concatenate %261, %262 in 0 : vector<32x512xf32>, vector<64x512xf32> -> vector<96x512xf32>
    %264 = arith.mulf %255, %263 : vector<96x512xf32>
    %cst_66 = arith.constant 0.000000e+00 : f32
    %265 = vector.broadcast %cst_66 : f32 to vector<64x512xf32>
    %266 = vector.extract_strided_slice %260 {offsets = [0, 0], sizes = [32, 512], strides = [1, 1]} : vector<96x512xf32> to vector<32x512xf32>
    %267 = tpu.concatenate %265, %266 in 0 : vector<64x512xf32>, vector<32x512xf32> -> vector<96x512xf32>
    %268 = arith.mulf %264, %267 : vector<96x512xf32>
    %269 = arith.addf %268, %260 : vector<96x512xf32>
    %270 = vector.extract_strided_slice %269 {offsets = [32, 0], sizes = [64, 512], strides = [1, 1]} : vector<96x512xf32> to vector<64x512xf32>
    %271 = vector.extract_strided_slice %184 {offsets = [32, 48], sizes = [64, 16], strides = [1, 1]} : vector<96x64xf32> to vector<64x16xf32>
    %c0_67 = arith.constant 0 : index
    %c0_68 = arith.constant 0 : index
    %272 = vector.load %arg15[%c0_67, %c0_68] : memref<16x512xf32, #tpu.memory_space<vmem>>, vector<16x512xf32>
    %cst_69 = arith.constant dense<0.000000e+00> : vector<64x512xf32>
    %273 = tpu.matmul %271, %272, %cst_69 {dimension_numbers = #tpu.dot_dimension_numbers<[1], [0], [0], [1], [0, 0, 1, 1], [], []>} : vector<64x16xf32>, vector<16x512xf32>, vector<64x512xf32> -> vector<64x512xf32>
    %274 = arith.mulf %273, %270 : vector<64x512xf32>
    %c0_70 = arith.constant 0 : index
    %c0_71 = arith.constant 0 : index
    %275 = vector.load %arg16[%c0_70, %c0_71] : memref<512x32xf32, #tpu.memory_space<vmem>>, vector<512x32xf32>
    %cst_72 = arith.constant dense<0.000000e+00> : vector<64x32xf32>
    %276 = tpu.matmul %274, %275, %cst_72 {dimension_numbers = #tpu.dot_dimension_numbers<[1], [0], [0], [1], [0, 0, 1, 1], [], []>} : vector<64x512xf32>, vector<512x32xf32>, vector<64x32xf32> -> vector<64x32xf32>
    %c0_73 = arith.constant 0 : index
    %c0_74 = arith.constant 0 : index
    %277 = vector.load %arg17[%c0_73, %c0_74] : memref<1x32xf32, #tpu.memory_space<vmem>>, vector<1x32xf32>
    %278 = vector.broadcast %277 : vector<1x32xf32> to vector<64x32xf32>
    %279 = arith.mulf %90, %278 : vector<64x32xf32>
    %280 = arith.addf %276, %279 : vector<64x32xf32>
    %cst_75 = arith.constant dense<0.000000e+00> : vector<64xf32>
    %281 = vector.multi_reduction <add>, %280, %cst_75 [1] : vector<64x32xf32> to vector<64xf32>
    %282 = vector.shape_cast %281 : vector<64xf32> to vector<64x1xf32>
    %cst_76 = arith.constant 3.200000e+01 : f32
    %283 = vector.broadcast %cst_76 : f32 to vector<64x1xf32>
    %284 = arith.divf %282, %283 : vector<64x1xf32>
    %285 = vector.broadcast %284 : vector<64x1xf32> to vector<64x32xf32>
    %286 = arith.subf %280, %285 : vector<64x32xf32>
    %287 = arith.mulf %286, %286 : vector<64x32xf32>
    %cst_77 = arith.constant dense<0.000000e+00> : vector<64xf32>
    %288 = vector.multi_reduction <add>, %287, %cst_77 [1] : vector<64x32xf32> to vector<64xf32>
    %289 = vector.shape_cast %288 : vector<64xf32> to vector<64x1xf32>
    %cst_78 = arith.constant 3.200000e+01 : f32
    %290 = vector.broadcast %cst_78 : f32 to vector<64x1xf32>
    %291 = arith.divf %289, %290 : vector<64x1xf32>
    %cst_79 = arith.constant 9.99999974E-6 : f32
    %292 = vector.broadcast %cst_79 : f32 to vector<64x1xf32>
    %293 = arith.addf %291, %292 : vector<64x1xf32>
    %294 = math.rsqrt %293 : vector<64x1xf32>
    %295 = vector.broadcast %294 : vector<64x1xf32> to vector<64x32xf32>
    %296 = arith.mulf %286, %295 : vector<64x32xf32>
    %c0_80 = arith.constant 0 : index
    %c0_81 = arith.constant 0 : index
    %297 = vector.load %arg18[%c0_80, %c0_81] : memref<1x32xf32, #tpu.memory_space<vmem>>, vector<1x32xf32>
    %298 = vector.broadcast %297 : vector<1x32xf32> to vector<64x32xf32>
    %299 = arith.mulf %296, %298 : vector<64x32xf32>
    %c0_82 = arith.constant 0 : index
    %c0_83 = arith.constant 0 : index
    %300 = vector.load %arg19[%c0_82, %c0_83] : memref<1x32xf32, #tpu.memory_space<vmem>>, vector<1x32xf32>
    %301 = vector.broadcast %300 : vector<1x32xf32> to vector<64x32xf32>
    %302 = arith.addf %299, %301 : vector<64x32xf32>
    %303 = math.absf %4 : vector<64x32xf32>
    %cst_84 = arith.constant 0.000000e+00 : f32
    %304 = vector.broadcast %cst_84 : f32 to vector<64x32xf32>
    %305 = arith.subf %304, %303 : vector<64x32xf32>
    %306 = math.exp %305 : vector<64x32xf32>
    %cst_85 = arith.constant 0.000000e+00 : f32
    %307 = vector.broadcast %cst_85 : f32 to vector<64x32xf32>
    %308 = arith.cmpf oge, %4, %307 : vector<64x32xf32>
    %cst_86 = arith.constant 1.000000e+00 : f32
    %309 = vector.broadcast %cst_86 : f32 to vector<64x32xf32>
    %310 = arith.addf %309, %306 : vector<64x32xf32>
    %cst_87 = arith.constant 1.000000e+00 : f32
    %311 = vector.broadcast %cst_87 : f32 to vector<64x32xf32>
    %312 = arith.divf %311, %310 : vector<64x32xf32>
    %cst_88 = arith.constant 1.000000e+00 : f32
    %313 = vector.broadcast %cst_88 : f32 to vector<64x32xf32>
    %314 = arith.addf %313, %306 : vector<64x32xf32>
    %315 = arith.divf %306, %314 : vector<64x32xf32>
    %316 = arith.select %308, %312, %315 : vector<64x32xi1>, vector<64x32xf32>
    %317 = arith.mulf %4, %316 : vector<64x32xf32>
    %318 = arith.mulf %302, %317 : vector<64x32xf32>
    %c0_89 = arith.constant 0 : index
    %c0_90 = arith.constant 0 : index
    %319 = vector.load %arg20[%c0_89, %c0_90] : memref<32x32xf32, #tpu.memory_space<vmem>>, vector<32x32xf32>
    %cst_91 = arith.constant dense<0.000000e+00> : vector<64x32xf32>
    %320 = tpu.matmul %318, %319, %cst_91 {dimension_numbers = #tpu.dot_dimension_numbers<[1], [0], [0], [1], [0, 0, 1, 1], [], []>} : vector<64x32xf32>, vector<32x32xf32>, vector<64x32xf32> -> vector<64x32xf32>
    %c0_92 = arith.constant 0 : index
    %c0_93 = arith.constant 0 : index
    %c0_94 = arith.constant 0 : index
    %321 = vector.load %arg21[%c0_92, %c0_93, %c0_94] : memref<1x64x32xf32, #tpu.memory_space<vmem>>, vector<1x64x32xf32>
    %322 = vector.shape_cast %321 : vector<1x64x32xf32> to vector<64x32xf32>
    %323 = vector.shape_cast %320 : vector<64x32xf32> to vector<1x64x32xf32>
    tpu.vector_store %arg21[%c0_92, %c0_93, %c0_94], %323 {strides = array<i32>} : memref<1x64x32xf32, #tpu.memory_space<vmem>>, vector<1x64x32xf32>,
    return
  }
  func.func @transform_0(%arg0: i32) -> (i32, i32, i32) {
    %c0_i32 = arith.constant 0 : i32
    %c0_i32_0 = arith.constant 0 : i32
    %c0_i32_1 = arith.constant 0 : i32
    return %arg0, %c0_i32, %c0_i32_0 : i32, i32, i32
  }
  func.func @transform_1(%arg0: i32) -> (i32, i32) {
    %c0_i32 = arith.constant 0 : i32
    %c0_i32_0 = arith.constant 0 : i32
    %c0_i32_1 = arith.constant 0 : i32
    return %c0_i32, %c0_i32_0 : i32, i32
  }
  func.func @transform_2(%arg0: i32) -> (i32, i32) {
    %c0_i32 = arith.constant 0 : i32
    %c0_i32_0 = arith.constant 0 : i32
    %c0_i32_1 = arith.constant 0 : i32
    return %c0_i32, %c0_i32_0 : i32, i32
  }
  func.func @transform_3(%arg0: i32) -> (i32, i32) {
    %c0_i32 = arith.constant 0 : i32
    %c0_i32_0 = arith.constant 0 : i32
    %c0_i32_1 = arith.constant 0 : i32
    return %c0_i32, %c0_i32_0 : i32, i32
  }
  func.func @transform_4(%arg0: i32) -> (i32, i32) {
    %c0_i32 = arith.constant 0 : i32
    %c0_i32_0 = arith.constant 0 : i32
    %c0_i32_1 = arith.constant 0 : i32
    return %c0_i32, %c0_i32_0 : i32, i32
  }
  func.func @transform_5(%arg0: i32) -> (i32, i32) {
    %c0_i32 = arith.constant 0 : i32
    %c0_i32_0 = arith.constant 0 : i32
    %c0_i32_1 = arith.constant 0 : i32
    return %c0_i32, %c0_i32_0 : i32, i32
  }
  func.func @transform_6(%arg0: i32) -> (i32, i32) {
    %c0_i32 = arith.constant 0 : i32
    %c0_i32_0 = arith.constant 0 : i32
    %c0_i32_1 = arith.constant 0 : i32
    return %c0_i32, %c0_i32_0 : i32, i32
  }
  func.func @transform_7(%arg0: i32) -> (i32, i32) {
    %c0_i32 = arith.constant 0 : i32
    %c0_i32_0 = arith.constant 0 : i32
    %c0_i32_1 = arith.constant 0 : i32
    return %c0_i32, %c0_i32_0 : i32, i32
  }
  func.func @transform_8(%arg0: i32) -> (i32, i32) {
    %c0_i32 = arith.constant 0 : i32
    %c0_i32_0 = arith.constant 0 : i32
    %c0_i32_1 = arith.constant 0 : i32
    return %c0_i32, %c0_i32_0 : i32, i32
  }
  func.func @transform_9(%arg0: i32) -> (i32, i32) {
    %c0_i32 = arith.constant 0 : i32
    %c0_i32_0 = arith.constant 0 : i32
    %c0_i32_1 = arith.constant 0 : i32
    return %c0_i32, %c0_i32_0 : i32, i32
  }
  func.func @transform_10(%arg0: i32) -> (i32, i32) {
    %c0_i32 = arith.constant 0 : i32
    %c0_i32_0 = arith.constant 0 : i32
    %c0_i32_1 = arith.constant 0 : i32
    return %c0_i32, %c0_i32_0 : i32, i32
  }
  func.func @transform_11(%arg0: i32) -> (i32, i32) {
    %c0_i32 = arith.constant 0 : i32
    %c0_i32_0 = arith.constant 0 : i32
    %c0_i32_1 = arith.constant 0 : i32
    return %c0_i32, %c0_i32_0 : i32, i32
  }
  func.func @transform_12(%arg0: i32) -> (i32, i32) {
    %c0_i32 = arith.constant 0 : i32
    %c0_i32_0 = arith.constant 0 : i32
    %c0_i32_1 = arith.constant 0 : i32
    return %c0_i32, %c0_i32_0 : i32, i32
  }
  func.func @transform_13(%arg0: i32) -> (i32, i32) {
    %c0_i32 = arith.constant 0 : i32
    %c0_i32_0 = arith.constant 0 : i32
    %c0_i32_1 = arith.constant 0 : i32
    return %c0_i32, %c0_i32_0 : i32, i32
  }
  func.func @transform_14(%arg0: i32) -> (i32, i32) {
    %c0_i32 = arith.constant 0 : i32
    %c0_i32_0 = arith.constant 0 : i32
    %c0_i32_1 = arith.constant 0 : i32
    return %c0_i32, %c0_i32_0 : i32, i32
  }
  func.func @transform_15(%arg0: i32) -> (i32, i32) {
    %c0_i32 = arith.constant 0 : i32
    %c0_i32_0 = arith.constant 0 : i32
    %c0_i32_1 = arith.constant 0 : i32
    return %c0_i32, %c0_i32_0 : i32, i32
  }
  func.func @transform_16(%arg0: i32) -> (i32, i32) {
    %c0_i32 = arith.constant 0 : i32
    %c0_i32_0 = arith.constant 0 : i32
    %c0_i32_1 = arith.constant 0 : i32
    return %c0_i32, %c0_i32_0 : i32, i32
  }
  func.func @transform_17(%arg0: i32) -> (i32, i32) {
    %c0_i32 = arith.constant 0 : i32
    %c0_i32_0 = arith.constant 0 : i32
    %c0_i32_1 = arith.constant 0 : i32
    return %c0_i32, %c0_i32_0 : i32, i32
  }
  func.func @transform_18(%arg0: i32) -> (i32, i32) {
    %c0_i32 = arith.constant 0 : i32
    %c0_i32_0 = arith.constant 0 : i32
    %c0_i32_1 = arith.constant 0 : i32
    return %c0_i32, %c0_i32_0 : i32, i32
  }
  func.func @transform_19(%arg0: i32) -> (i32, i32) {
    %c0_i32 = arith.constant 0 : i32
    %c0_i32_0 = arith.constant 0 : i32
    %c0_i32_1 = arith.constant 0 : i32
    return %c0_i32, %c0_i32_0 : i32, i32
  }
  func.func @transform_20(%arg0: i32) -> (i32, i32, i32) {
    %c0_i32 = arith.constant 0 : i32
    %c0_i32_0 = arith.constant 0 : i32
    %c0_i32_1 = arith.constant 0 : i32
    return %arg0, %c0_i32, %c0_i32_0 : i32, i32, i32
  }
}

</mosaic_0001>

<llo_original>
// kernel: ss2depth_k1_forward.1
$region0: #{ss2depth_k1_forward.1}
  #allocation0 [shape = 'u32[]', space=smem, size = 0x4, offset = 0x4, fixed_abs, tag = 'smem constant byte address 0x4 - core index']
  #allocation1 [shape = 'u32[72,128]{1,0:T(1,128)}', space=vmem, size = 0x9000, scoped, tag = 'internal scratch']
  %s0 = inlined_call_operand.vmem [shape: f32[2,64,32], index: 0, kind: input, shape index: {}]
  %s1 = inlined_call_operand.vmem [shape: f32[32,64], index: 1, kind: input, shape index: {}]
  %s2 = inlined_call_operand.vmem [shape: f32[576,64], index: 2, kind: input, shape index: {}]
  %s3 = inlined_call_operand.vmem [shape: f32[9,32], index: 3, kind: input, shape index: {}]
  %s4 = inlined_call_operand.vmem [shape: f32[1,32], index: 4, kind: input, shape index: {}]
  %s5 = inlined_call_operand.vmem [shape: f32[144,64], index: 5, kind: input, shape index: {}]
  %s6 = inlined_call_operand.vmem [shape: f32[9,32], index: 6, kind: input, shape index: {}]
  %s7 = inlined_call_operand.vmem [shape: f32[1,32], index: 7, kind: input, shape index: {}]
  %s8 = inlined_call_operand.vmem [shape: f32[16,32], index: 8, kind: input, shape index: {}]
  %s9 = inlined_call_operand.vmem [shape: f32[1,32], index: 9, kind: input, shape index: {}]
  %s10 = inlined_call_operand.vmem [shape: f32[32,64], index: 10, kind: input, shape index: {}]
  %s11 = inlined_call_operand.vmem [shape: f32[1,32], index: 11, kind: input, shape index: {}]
  %s12 = inlined_call_operand.vmem [shape: f32[1,512], index: 12, kind: input, shape index: {}]
  %s13 = inlined_call_operand.vmem [shape: f32[32,512], index: 13, kind: input, shape index: {}]
  %s14 = inlined_call_operand.vmem [shape: f32[16,512], index: 14, kind: input, shape index: {}]
  %s15 = inlined_call_operand.vmem [shape: f32[512,32], index: 15, kind: input, shape index: {}]
  %s16 = inlined_call_operand.vmem [shape: f32[1,32], index: 16, kind: input, shape index: {}]
  %s17 = inlined_call_operand.vmem [shape: f32[1,32], index: 17, kind: input, shape index: {}]
  %s18 = inlined_call_operand.vmem [shape: f32[1,32], index: 18, kind: input, shape index: {}]
  %s19 = inlined_call_operand.vmem [shape: f32[32,32], index: 19, kind: input, shape index: {}]
  %s20 = inlined_call_operand.hbm [shape: f32[2,64,32], index: 20, kind: output, shape index: {}]
  %s21 = sld [smem:[#allocation0]]
  $region113: #{ss2depth_k1_forward.1} parent=0
    _
  %s23 = ssub.s32 1, %s21
  %s24 = scalar_select 0, %s23, %s21
  $region1: #{ss2depth_k1_forward.1} parent=0
    #allocation2 [shape = 'u8[65536]{0}', space=vmem, size = 0x10000, scoped, tag = 'output window, operand 0']
    #allocation3 [shape = 's32[2]{0}', space=sflag, size = 0x8, scoped, tag = 'scoped memory for ss2depth_k1_forward.1']
    %25 = vsyncpa [#allocation3], 0
    %s26 = scalar_lea.sflag [#allocation3], 1
    %27 = vsyncpa %s26, 0
    loop: start=0, step=1, limit=4
    $region2: #{ss2depth_k1_forward.1} parent=1 // loop_pre_header
      _
    $region3: #{ss2depth_k1_forward.1} parent=1 // loop_header
      %s29 = sphi 0, %s33
      %p30 = scmp.ge.s32.totalorder %s29, 4
      %s39 = sphi 0, %s41
      %s42 = sphi 0, %s39
      %s43 = sphi 0, %s42
      %s59 = sphi 0, %s43
      %s63 = sphi 0, %s63
      %s65 = sphi 0, %s63
      %s66 = sphi 0, %s65
      %s80 = sphi 0, %s66
      %s84 = sphi 0, %s84
      %s86 = sphi 0, %s84
      %s87 = sphi 0, %s86
      %s101 = sphi 0, %s87
      %s105 = sphi 0, %s105
      %s107 = sphi 0, %s105
      %s108 = sphi 0, %s107
      %s122 = sphi 0, %s108
      %s126 = sphi 0, %s126
      %s128 = sphi 0, %s126
      %s129 = sphi 0, %s128
      %s143 = sphi 0, %s129
      %s147 = sphi 0, %s147
      %s149 = sphi 0, %s147
      %s150 = sphi 0, %s149
      %s164 = sphi 0, %s150
      %s168 = sphi 0, %s168
      %s170 = sphi 0, %s168
      %s171 = sphi 0, %s170
      %s185 = sphi 0, %s171
      %s189 = sphi 0, %s189
      %s191 = sphi 0, %s189
      %s192 = sphi 0, %s191
      %s206 = sphi 0, %s192
      %s210 = sphi 0, %s210
      %s212 = sphi 0, %s210
      %s213 = sphi 0, %s212
      %s227 = sphi 0, %s213
      %s231 = sphi 0, %s231
      %s233 = sphi 0, %s231
      %s234 = sphi 0, %s233
      %s248 = sphi 0, %s234
      %s252 = sphi 0, %s252
      %s254 = sphi 0, %s252
      %s255 = sphi 0, %s254
      %s269 = sphi 0, %s255
      %s273 = sphi 0, %s273
      %s275 = sphi 0, %s273
      %s276 = sphi 0, %s275
      %s290 = sphi 0, %s276
      %s294 = sphi 0, %s294
      %s296 = sphi 0, %s294
      %s297 = sphi 0, %s296
      %s311 = sphi 0, %s297
      %s315 = sphi 0, %s315
      %s317 = sphi 0, %s315
      %s318 = sphi 0, %s317
      %s332 = sphi 0, %s318
      %s336 = sphi 0, %s336
      %s338 = sphi 0, %s336
      %s339 = sphi 0, %s338
      %s353 = sphi 0, %s339
      %s357 = sphi 0, %s357
      %s359 = sphi 0, %s357
      %s360 = sphi 0, %s359
      %s374 = sphi 0, %s360
      %s378 = sphi 0, %s378
      %s380 = sphi 0, %s378
      %s381 = sphi 0, %s380
      %s395 = sphi 0, %s381
      %s399 = sphi 0, %s399
      %s401 = sphi 0, %s399
      %s402 = sphi 0, %s401
      %s416 = sphi 0, %s402
      %s420 = sphi 0, %s420
      %s422 = sphi 0, %s420
      %s423 = sphi 0, %s422
      %s437 = sphi 0, %s423
      %s441 = sphi 0, %s441
      %s443 = sphi 0, %s441
      %s444 = sphi 0, %s443
      %s458 = sphi 0, %s444
      %s464 = sphi 0, %s466
      %s467 = sphi 0, %s464
      %s468 = sphi 0, %s467
      %s484 = sphi 0, %s468
    $region4: #{ss2depth_k1_forward.1} parent=1 // loop_header_branch
      %32 = sbr.rel (%p30) target = $region8
    $region5: #{ss2depth_k1_forward.1} parent=1 // loop_body
      %s34 = ssub.s32 %s29, 1
      %s35 = ssub.s32 %s29, 2
      %s36 = sadd.s32 %s29, 1
      %s37 = ssub.s32 %s29, %s36
      %p38 = scmp.eq.s32.totalorder %s37, 0
      %s40 = sadd.s32 %s39, 1
      %s41 = scalar_select %p38, %s39, %s40
      %p44 = pneg %p38
      %p45 = scmp.eq.s32.totalorder %s29, 1
      %p46 = por %p44, %p45
      %p47 = scmp.ne.s32.totalorder %s39, %s42
      %p48 = scmp.eq.s32.totalorder %s29, 0
      %p49 = por %p47, %p48
      %p50 = scmp.ne.s32.totalorder %s39, %s42
      %p51 = scmp.eq.s32.totalorder %s34, 1
      %p52 = por %p50, %p51
      %p53 = scmp.ne.s32.totalorder %s42, %s43
      %p54 = scmp.eq.s32.totalorder %s34, 0
      %p55 = por %p53, %p54
      %p56 = scmp.ne.s32.totalorder %s42, %s43
      %p57 = scmp.eq.s32.totalorder %s35, 1
      %p58 = por %p56, %p57
      %p60 = scmp.ne.s32.totalorder %s43, %s59
      %p61 = scmp.eq.s32.totalorder %s35, 0
      %p62 = por %p60, %p61
      %s64 = sadd.s32 %s63, 1
      %p67 = scmp.eq.s32.totalorder %s29, 1
      %p68 = scmp.ne.s32.totalorder %s63, %s65
      %p69 = scmp.eq.s32.totalorder %s29, 0
      %p70 = por %p68, %p69
      %p71 = scmp.ne.s32.totalorder %s63, %s65
      %p72 = scmp.eq.s32.totalorder %s34, 1
      %p73 = por %p71, %p72
      %p74 = scmp.ne.s32.totalorder %s65, %s66
      %p75 = scmp.eq.s32.totalorder %s34, 0
      %p76 = por %p74, %p75
      %p77 = scmp.ne.s32.totalorder %s65, %s66
      %p78 = scmp.eq.s32.totalorder %s35, 1
      %p79 = por %p77, %p78
      %p81 = scmp.ne.s32.totalorder %s66, %s80
      %p82 = scmp.eq.s32.totalorder %s35, 0
      %p83 = por %p81, %p82
      %s85 = sadd.s32 %s84, 1
      %p88 = scmp.eq.s32.totalorder %s29, 1
      %p89 = scmp.ne.s32.totalorder %s84, %s86
      %p90 = scmp.eq.s32.totalorder %s29, 0
      %p91 = por %p89, %p90
      %p92 = scmp.ne.s32.totalorder %s84, %s86
      %p93 = scmp.eq.s32.totalorder %s34, 1
      %p94 = por %p92, %p93
      %p95 = scmp.ne.s32.totalorder %s86, %s87
      %p96 = scmp.eq.s32.totalorder %s34, 0
      %p97 = por %p95, %p96
      %p98 = scmp.ne.s32.totalorder %s86, %s87
      %p99 = scmp.eq.s32.totalorder %s35, 1
      %p100 = por %p98, %p99
      %p102 = scmp.ne.s32.totalorder %s87, %s101
      %p103 = scmp.eq.s32.totalorder %s35, 0
      %p104 = por %p102, %p103
      %s106 = sadd.s32 %s105, 1
      %p109 = scmp.eq.s32.totalorder %s29, 1
      %p110 = scmp.ne.s32.totalorder %s105, %s107
      %p111 = scmp.eq.s32.totalorder %s29, 0
      %p112 = por %p110, %p111
      %p113 = scmp.ne.s32.totalorder %s105, %s107
      %p114 = scmp.eq.s32.totalorder %s34, 1
      %p115 = por %p113, %p114
      %p116 = scmp.ne.s32.totalorder %s107, %s108
      %p117 = scmp.eq.s32.totalorder %s34, 0
      %p118 = por %p116, %p117
      %p119 = scmp.ne.s32.totalorder %s107, %s108
      %p120 = scmp.eq.s32.totalorder %s35, 1
      %p121 = por %p119, %p120
      %p123 = scmp.ne.s32.totalorder %s108, %s122
      %p124 = scmp.eq.s32.totalorder %s35, 0
      %p125 = por %p123, %p124
      %s127 = sadd.s32 %s126, 1
      %p130 = scmp.eq.s32.totalorder %s29, 1
      %p131 = scmp.ne.s32.totalorder %s126, %s128
      %p132 = scmp.eq.s32.totalorder %s29, 0
      %p133 = por %p131, %p132
      %p134 = scmp.ne.s32.totalorder %s126, %s128
      %p135 = scmp.eq.s32.totalorder %s34, 1
      %p136 = por %p134, %p135
      %p137 = scmp.ne.s32.totalorder %s128, %s129
      %p138 = scmp.eq.s32.totalorder %s34, 0
      %p139 = por %p137, %p138
      %p140 = scmp.ne.s32.totalorder %s128, %s129
      %p141 = scmp.eq.s32.totalorder %s35, 1
      %p142 = por %p140, %p141
      %p144 = scmp.ne.s32.totalorder %s129, %s143
      %p145 = scmp.eq.s32.totalorder %s35, 0
      %p146 = por %p144, %p145
      %s148 = sadd.s32 %s147, 1
      %p151 = scmp.eq.s32.totalorder %s29, 1
      %p152 = scmp.ne.s32.totalorder %s147, %s149
      %p153 = scmp.eq.s32.totalorder %s29, 0
      %p154 = por %p152, %p153
      %p155 = scmp.ne.s32.totalorder %s147, %s149
      %p156 = scmp.eq.s32.totalorder %s34, 1
      %p157 = por %p155, %p156
      %p158 = scmp.ne.s32.totalorder %s149, %s150
      %p159 = scmp.eq.s32.totalorder %s34, 0
      %p160 = por %p158, %p159
      %p161 = scmp.ne.s32.totalorder %s149, %s150
      %p162 = scmp.eq.s32.totalorder %s35, 1
      %p163 = por %p161, %p162
      %p165 = scmp.ne.s32.totalorder %s150, %s164
      %p166 = scmp.eq.s32.totalorder %s35, 0
      %p167 = por %p165, %p166
      %s169 = sadd.s32 %s168, 1
      %p172 = scmp.eq.s32.totalorder %s29, 1
      %p173 = scmp.ne.s32.totalorder %s168, %s170
      %p174 = scmp.eq.s32.totalorder %s29, 0
      %p175 = por %p173, %p174
      %p176 = scmp.ne.s32.totalorder %s168, %s170
      %p177 = scmp.eq.s32.totalorder %s34, 1
      %p178 = por %p176, %p177
      %p179 = scmp.ne.s32.totalorder %s170, %s171
      %p180 = scmp.eq.s32.totalorder %s34, 0
      %p181 = por %p179, %p180
      %p182 = scmp.ne.s32.totalorder %s170, %s171
      %p183 = scmp.eq.s32.totalorder %s35, 1
      %p184 = por %p182, %p183
      %p186 = scmp.ne.s32.totalorder %s171, %s185
      %p187 = scmp.eq.s32.totalorder %s35, 0
      %p188 = por %p186, %p187
      %s190 = sadd.s32 %s189, 1
      %p193 = scmp.eq.s32.totalorder %s29, 1
      %p194 = scmp.ne.s32.totalorder %s189, %s191
      %p195 = scmp.eq.s32.totalorder %s29, 0
      %p196 = por %p194, %p195
      %p197 = scmp.ne.s32.totalorder %s189, %s191
      %p198 = scmp.eq.s32.totalorder %s34, 1
      %p199 = por %p197, %p198
      %p200 = scmp.ne.s32.totalorder %s191, %s192
      %p201 = scmp.eq.s32.totalorder %s34, 0
      %p202 = por %p200, %p201
      %p203 = scmp.ne.s32.totalorder %s191, %s192
      %p204 = scmp.eq.s32.totalorder %s35, 1
      %p205 = por %p203, %p204
      %p207 = scmp.ne.s32.totalorder %s192, %s206
      %p208 = scmp.eq.s32.totalorder %s35, 0
      %p209 = por %p207, %p208
      %s211 = sadd.s32 %s210, 1
      %p214 = scmp.eq.s32.totalorder %s29, 1
      %p215 = scmp.ne.s32.totalorder %s210, %s212
      %p216 = scmp.eq.s32.totalorder %s29, 0
      %p217 = por %p215, %p216
      %p218 = scmp.ne.s32.totalorder %s210, %s212
      %p219 = scmp.eq.s32.totalorder %s34, 1
      %p220 = por %p218, %p219
      %p221 = scmp.ne.s32.totalorder %s212, %s213
      %p222 = scmp.eq.s32.totalorder %s34, 0
      %p223 = por %p221, %p222
      %p224 = scmp.ne.s32.totalorder %s212, %s213
      %p225 = scmp.eq.s32.totalorder %s35, 1
      %p226 = por %p224, %p225
      %p228 = scmp.ne.s32.totalorder %s213, %s227
      %p229 = scmp.eq.s32.totalorder %s35, 0
      %p230 = por %p228, %p229
      %s232 = sadd.s32 %s231, 1
      %p235 = scmp.eq.s32.totalorder %s29, 1
      %p236 = scmp.ne.s32.totalorder %s231, %s233
      %p237 = scmp.eq.s32.totalorder %s29, 0
      %p238 = por %p236, %p237
      %p239 = scmp.ne.s32.totalorder %s231, %s233
      %p240 = scmp.eq.s32.totalorder %s34, 1
      %p241 = por %p239, %p240
      %p242 = scmp.ne.s32.totalorder %s233, %s234
      %p243 = scmp.eq.s32.totalorder %s34, 0
      %p244 = por %p242, %p243
      %p245 = scmp.ne.s32.totalorder %s233, %s234
      %p246 = scmp.eq.s32.totalorder %s35, 1
      %p247 = por %p245, %p246
      %p249 = scmp.ne.s32.totalorder %s234, %s248
      %p250 = scmp.eq.s32.totalorder %s35, 0
      %p251 = por %p249, %p250
      %s253 = sadd.s32 %s252, 1
      %p256 = scmp.eq.s32.totalorder %s29, 1
      %p257 = scmp.ne.s32.totalorder %s252, %s254
      %p258 = scmp.eq.s32.totalorder %s29, 0
      %p259 = por %p257, %p258
      %p260 = scmp.ne.s32.totalorder %s252, %s254
      %p261 = scmp.eq.s32.totalorder %s34, 1
      %p262 = por %p260, %p261
      %p263 = scmp.ne.s32.totalorder %s254, %s255
      %p264 = scmp.eq.s32.totalorder %s34, 0
      %p265 = por %p263, %p264
      %p266 = scmp.ne.s32.totalorder %s254, %s255
      %p267 = scmp.eq.s32.totalorder %s35, 1
      %p268 = por %p266, %p267
      %p270 = scmp.ne.s32.totalorder %s255, %s269
      %p271 = scmp.eq.s32.totalorder %s35, 0
      %p272 = por %p270, %p271
      %s274 = sadd.s32 %s273, 1
      %p277 = scmp.eq.s32.totalorder %s29, 1
      %p278 = scmp.ne.s32.totalorder %s273, %s275
      %p279 = scmp.eq.s32.totalorder %s29, 0
      %p280 = por %p278, %p279
      %p281 = scmp.ne.s32.totalorder %s273, %s275
      %p282 = scmp.eq.s32.totalorder %s34, 1
      %p283 = por %p281, %p282
      %p284 = scmp.ne.s32.totalorder %s275, %s276
      %p285 = scmp.eq.s32.totalorder %s34, 0
      %p286 = por %p284, %p285
      %p287 = scmp.ne.s32.totalorder %s275, %s276
      %p288 = scmp.eq.s32.totalorder %s35, 1
      %p289 = por %p287, %p288
      %p291 = scmp.ne.s32.totalorder %s276, %s290
      %p292 = scmp.eq.s32.totalorder %s35, 0
      %p293 = por %p291, %p292
      %s295 = sadd.s32 %s294, 1
      %p298 = scmp.eq.s32.totalorder %s29, 1
      %p299 = scmp.ne.s32.totalorder %s294, %s296
      %p300 = scmp.eq.s32.totalorder %s29, 0
      %p301 = por %p299, %p300
      %p302 = scmp.ne.s32.totalorder %s294, %s296
      %p303 = scmp.eq.s32.totalorder %s34, 1
      %p304 = por %p302, %p303
      %p305 = scmp.ne.s32.totalorder %s296, %s297
      %p306 = scmp.eq.s32.totalorder %s34, 0
      %p307 = por %p305, %p306
      %p308 = scmp.ne.s32.totalorder %s296, %s297
      %p309 = scmp.eq.s32.totalorder %s35, 1
      %p310 = por %p308, %p309
      %p312 = scmp.ne.s32.totalorder %s297, %s311
      %p313 = scmp.eq.s32.totalorder %s35, 0
      %p314 = por %p312, %p313
      %s316 = sadd.s32 %s315, 1
      %p319 = scmp.eq.s32.totalorder %s29, 1
      %p320 = scmp.ne.s32.totalorder %s315, %s317
      %p321 = scmp.eq.s32.totalorder %s29, 0
      %p322 = por %p320, %p321
      %p323 = scmp.ne.s32.totalorder %s315, %s317
      %p324 = scmp.eq.s32.totalorder %s34, 1
      %p325 = por %p323, %p324
      %p326 = scmp.ne.s32.totalorder %s317, %s318
      %p327 = scmp.eq.s32.totalorder %s34, 0
      %p328 = por %p326, %p327
      %p329 = scmp.ne.s32.totalorder %s317, %s318
      %p330 = scmp.eq.s32.totalorder %s35, 1
      %p331 = por %p329, %p330
      %p333 = scmp.ne.s32.totalorder %s318, %s332
      %p334 = scmp.eq.s32.totalorder %s35, 0
      %p335 = por %p333, %p334
      %s337 = sadd.s32 %s336, 1
      %p340 = scmp.eq.s32.totalorder %s29, 1
      %p341 = scmp.ne.s32.totalorder %s336, %s338
      %p342 = scmp.eq.s32.totalorder %s29, 0
      %p343 = por %p341, %p342
      %p344 = scmp.ne.s32.totalorder %s336, %s338
      %p345 = scmp.eq.s32.totalorder %s34, 1
      %p346 = por %p344, %p345
      %p347 = scmp.ne.s32.totalorder %s338, %s339
      %p348 = scmp.eq.s32.totalorder %s34, 0
      %p349 = por %p347, %p348
      %p350 = scmp.ne.s32.totalorder %s338, %s339
      %p351 = scmp.eq.s32.totalorder %s35, 1
      %p352 = por %p350, %p351
      %p354 = scmp.ne.s32.totalorder %s339, %s353
      %p355 = scmp.eq.s32.totalorder %s35, 0
      %p356 = por %p354, %p355
      %s358 = sadd.s32 %s357, 1
      %p361 = scmp.eq.s32.totalorder %s29, 1
      %p362 = scmp.ne.s32.totalorder %s357, %s359
      %p363 = scmp.eq.s32.totalorder %s29, 0
      %p364 = por %p362, %p363
      %p365 = scmp.ne.s32.totalorder %s357, %s359
      %p366 = scmp.eq.s32.totalorder %s34, 1
      %p367 = por %p365, %p366
      %p368 = scmp.ne.s32.totalorder %s359, %s360
      %p369 = scmp.eq.s32.totalorder %s34, 0
      %p370 = por %p368, %p369
      %p371 = scmp.ne.s32.totalorder %s359, %s360
      %p372 = scmp.eq.s32.totalorder %s35, 1
      %p373 = por %p371, %p372
      %p375 = scmp.ne.s32.totalorder %s360, %s374
      %p376 = scmp.eq.s32.totalorder %s35, 0
      %p377 = por %p375, %p376
      %s379 = sadd.s32 %s378, 1
      %p382 = scmp.eq.s32.totalorder %s29, 1
      %p383 = scmp.ne.s32.totalorder %s378, %s380
      %p384 = scmp.eq.s32.totalorder %s29, 0
      %p385 = por %p383, %p384
      %p386 = scmp.ne.s32.totalorder %s378, %s380
      %p387 = scmp.eq.s32.totalorder %s34, 1
      %p388 = por %p386, %p387
      %p389 = scmp.ne.s32.totalorder %s380, %s381
      %p390 = scmp.eq.s32.totalorder %s34, 0
      %p391 = por %p389, %p390
      %p392 = scmp.ne.s32.totalorder %s380, %s381
      %p393 = scmp.eq.s32.totalorder %s35, 1
      %p394 = por %p392, %p393
      %p396 = scmp.ne.s32.totalorder %s381, %s395
      %p397 = scmp.eq.s32.totalorder %s35, 0
      %p398 = por %p396, %p397
      %s400 = sadd.s32 %s399, 1
      %p403 = scmp.eq.s32.totalorder %s29, 1
      %p404 = scmp.ne.s32.totalorder %s399, %s401
      %p405 = scmp.eq.s32.totalorder %s29, 0
      %p406 = por %p404, %p405
      %p407 = scmp.ne.s32.totalorder %s399, %s401
      %p408 = scmp.eq.s32.totalorder %s34, 1
      %p409 = por %p407, %p408
      %p410 = scmp.ne.s32.totalorder %s401, %s402
      %p411 = scmp.eq.s32.totalorder %s34, 0
      %p412 = por %p410, %p411
      %p413 = scmp.ne.s32.totalorder %s401, %s402
      %p414 = scmp.eq.s32.totalorder %s35, 1
      %p415 = por %p413, %p414
      %p417 = scmp.ne.s32.totalorder %s402, %s416
      %p418 = scmp.eq.s32.totalorder %s35, 0
      %p419 = por %p417, %p418
      %s421 = sadd.s32 %s420, 1
      %p424 = scmp.eq.s32.totalorder %s29, 1
      %p425 = scmp.ne.s32.totalorder %s420, %s422
      %p426 = scmp.eq.s32.totalorder %s29, 0
      %p427 = por %p425, %p426
      %p428 = scmp.ne.s32.totalorder %s420, %s422
      %p429 = scmp.eq.s32.totalorder %s34, 1
      %p430 = por %p428, %p429
      %p431 = scmp.ne.s32.totalorder %s422, %s423
      %p432 = scmp.eq.s32.totalorder %s34, 0
      %p433 = por %p431, %p432
      %p434 = scmp.ne.s32.totalorder %s422, %s423
      %p435 = scmp.eq.s32.totalorder %s35, 1
      %p436 = por %p434, %p435
      %p438 = scmp.ne.s32.totalorder %s423, %s437
      %p439 = scmp.eq.s32.totalorder %s35, 0
      %p440 = por %p438, %p439
      %s442 = sadd.s32 %s441, 1
      %p445 = scmp.eq.s32.totalorder %s29, 1
      %p446 = scmp.ne.s32.totalorder %s441, %s443
      %p447 = scmp.eq.s32.totalorder %s29, 0
      %p448 = por %p446, %p447
      %p449 = scmp.ne.s32.totalorder %s441, %s443
      %p450 = scmp.eq.s32.totalorder %s34, 1
      %p451 = por %p449, %p450
      %p452 = scmp.ne.s32.totalorder %s443, %s444
      %p453 = scmp.eq.s32.totalorder %s34, 0
      %p454 = por %p452, %p453
      %p455 = scmp.ne.s32.totalorder %s443, %s444
      %p456 = scmp.eq.s32.totalorder %s35, 1
      %p457 = por %p455, %p456
      %p459 = scmp.ne.s32.totalorder %s444, %s458
      %p460 = scmp.eq.s32.totalorder %s35, 0
      %p461 = por %p459, %p460
      %s462 = ssub.s32 %s29, %s36
      %p463 = scmp.eq.s32.totalorder %s462, 0
      %s465 = sadd.s32 %s464, 1
      %s466 = scalar_select %p463, %s464, %s465
      %p469 = pneg %p463
      %p470 = scmp.eq.s32.totalorder %s29, 1
      %p471 = por %p469, %p470
      %p472 = scmp.ne.s32.totalorder %s464, %s467
      %p473 = scmp.eq.s32.totalorder %s29, 0
      %p474 = por %p472, %p473
      %p475 = scmp.ne.s32.totalorder %s464, %s467
      %p476 = scmp.eq.s32.totalorder %s34, 1
      %p477 = por %p475, %p476
      %p478 = scmp.ne.s32.totalorder %s467, %s468
      %p479 = scmp.eq.s32.totalorder %s34, 0
      %p480 = por %p478, %p479
      %p481 = scmp.ne.s32.totalorder %s467, %s468
      %p482 = scmp.eq.s32.totalorder %s35, 1
      %p483 = por %p481, %p482
      %p485 = scmp.ne.s32.totalorder %s468, %s484
      %p486 = scmp.eq.s32.totalorder %s35, 0
      %p487 = por %p485, %p486
      %p488 = scmp.le.s32.totalorder 1, %s29
      %p489 = scmp.lt.s32.totalorder %s29, 3
      %p490 = pnand %p488, %p489
      %p491 = pneg %p490
      // Predicated region
      $region9: #{ss2depth_k1_forward.1} parent=5 // pred_check
        _
      $region10: #{ss2depth_k1_forward.1} parent=5 // pred_check_branch
        %493 = sbr.rel (%p490) target = $region12
      $region11: #{ss2depth_k1_forward.1} parent=5 // pred_region
        %s494 = ssub.s32 %s29, 1
        // Predicated region
        $region13: #{ss2depth_k1_forward.1} parent=11 // pred_check
          %p495 = pneg %p76
        $region14: #{ss2depth_k1_forward.1} parent=11 // pred_check_branch
          %497 = sbr.rel (%p495) target = $region16
        $region15: #{ss2depth_k1_forward.1} parent=11 // pred_region
          _
        $region16: #{ss2depth_k1_forward.1} parent=11 // pred_fallthru
          _
        // Predicated region
        $region17: #{ss2depth_k1_forward.1} parent=11 // pred_check
          %p498 = pneg %p97
        $region18: #{ss2depth_k1_forward.1} parent=11 // pred_check_branch
          %500 = sbr.rel (%p498) target = $region20
        $region19: #{ss2depth_k1_forward.1} parent=11 // pred_region
          _
        $region20: #{ss2depth_k1_forward.1} parent=11 // pred_fallthru
          _
        // Predicated region
        $region21: #{ss2depth_k1_forward.1} parent=11 // pred_check
          %p501 = pneg %p118
        $region22: #{ss2depth_k1_forward.1} parent=11 // pred_check_branch
          %503 = sbr.rel (%p501) target = $region24
        $region23: #{ss2depth_k1_forward.1} parent=11 // pred_region
          _
        $region24: #{ss2depth_k1_forward.1} parent=11 // pred_fallthru
          _
        // Predicated region
        $region25: #{ss2depth_k1_forward.1} parent=11 // pred_check
          %p504 = pneg %p139
        $region26: #{ss2depth_k1_forward.1} parent=11 // pred_check_branch
          %506 = sbr.rel (%p504) target = $region28
        $region27: #{ss2depth_k1_forward.1} parent=11 // pred_region
          _
        $region28: #{ss2depth_k1_forward.1} parent=11 // pred_fallthru
          _
        // Predicated region
        $region29: #{ss2depth_k1_forward.1} parent=11 // pred_check
          %p507 = pneg %p160
        $region30: #{ss2depth_k1_forward.1} parent=11 // pred_check_branch
          %509 = sbr.rel (%p507) target = $region32
        $region31: #{ss2depth_k1_forward.1} parent=11 // pred_region
          _
        $region32: #{ss2depth_k1_forward.1} parent=11 // pred_fallthru
          _
        // Predicated region
        $region33: #{ss2depth_k1_forward.1} parent=11 // pred_check
          %p510 = pneg %p181
        $region34: #{ss2depth_k1_forward.1} parent=11 // pred_check_branch
          %512 = sbr.rel (%p510) target = $region36
        $region35: #{ss2depth_k1_forward.1} parent=11 // pred_region
          _
        $region36: #{ss2depth_k1_forward.1} parent=11 // pred_fallthru
          _
        // Predicated region
        $region37: #{ss2depth_k1_forward.1} parent=11 // pred_check
          %p513 = pneg %p202
        $region38: #{ss2depth_k1_forward.1} parent=11 // pred_check_branch
          %515 = sbr.rel (%p513) target = $region40
        $region39: #{ss2depth_k1_forward.1} parent=11 // pred_region
          _
        $region40: #{ss2depth_k1_forward.1} parent=11 // pred_fallthru
          _
        // Predicated region
        $region41: #{ss2depth_k1_forward.1} parent=11 // pred_check
          %p516 = pneg %p223
        $region42: #{ss2depth_k1_forward.1} parent=11 // pred_check_branch
          %518 = sbr.rel (%p516) target = $region44
        $region43: #{ss2depth_k1_forward.1} parent=11 // pred_region
          _
        $region44: #{ss2depth_k1_forward.1} parent=11 // pred_fallthru
          _
        // Predicated region
        $region45: #{ss2depth_k1_forward.1} parent=11 // pred_check
          %p519 = pneg %p244
        $region46: #{ss2depth_k1_forward.1} parent=11 // pred_check_branch
          %521 = sbr.rel (%p519) target = $region48
        $region47: #{ss2depth_k1_forward.1} parent=11 // pred_region
          _
        $region48: #{ss2depth_k1_forward.1} parent=11 // pred_fallthru
          _
        // Predicated region
        $region49: #{ss2depth_k1_forward.1} parent=11 // pred_check
          %p522 = pneg %p265
        $region50: #{ss2depth_k1_forward.1} parent=11 // pred_check_branch
          %524 = sbr.rel (%p522) target = $region52
        $region51: #{ss2depth_k1_forward.1} parent=11 // pred_region
          _
        $region52: #{ss2depth_k1_forward.1} parent=11 // pred_fallthru
          _
        // Predicated region
        $region53: #{ss2depth_k1_forward.1} parent=11 // pred_check
          %p525 = pneg %p286
        $region54: #{ss2depth_k1_forward.1} parent=11 // pred_check_branch
          %527 = sbr.rel (%p525) target = $region56
        $region55: #{ss2depth_k1_forward.1} parent=11 // pred_region
          _
        $region56: #{ss2depth_k1_forward.1} parent=11 // pred_fallthru
          _
        // Predicated region
        $region57: #{ss2depth_k1_forward.1} parent=11 // pred_check
          %p528 = pneg %p307
        $region58: #{ss2depth_k1_forward.1} parent=11 // pred_check_branch
          %530 = sbr.rel (%p528) target = $region60
        $region59: #{ss2depth_k1_forward.1} parent=11 // pred_region
          _
        $region60: #{ss2depth_k1_forward.1} parent=11 // pred_fallthru
          _
        // Predicated region
        $region61: #{ss2depth_k1_forward.1} parent=11 // pred_check
          %p531 = pneg %p328
        $region62: #{ss2depth_k1_forward.1} parent=11 // pred_check_branch
          %533 = sbr.rel (%p531) target = $region64
        $region63: #{ss2depth_k1_forward.1} parent=11 // pred_region
          _
        $region64: #{ss2depth_k1_forward.1} parent=11 // pred_fallthru
          _
        // Predicated region
        $region65: #{ss2depth_k1_forward.1} parent=11 // pred_check
          %p534 = pneg %p349
        $region66: #{ss2depth_k1_forward.1} parent=11 // pred_check_branch
          %536 = sbr.rel (%p534) target = $region68
        $region67: #{ss2depth_k1_forward.1} parent=11 // pred_region
          _
        $region68: #{ss2depth_k1_forward.1} parent=11 // pred_fallthru
          _
        // Predicated region
        $region69: #{ss2depth_k1_forward.1} parent=11 // pred_check
          %p537 = pneg %p370
        $region70: #{ss2depth_k1_forward.1} parent=11 // pred_check_branch
          %539 = sbr.rel (%p537) target = $region72
        $region71: #{ss2depth_k1_forward.1} parent=11 // pred_region
          _
        $region72: #{ss2depth_k1_forward.1} parent=11 // pred_fallthru
          _
        // Predicated region
        $region73: #{ss2depth_k1_forward.1} parent=11 // pred_check
          %p540 = pneg %p391
        $region74: #{ss2depth_k1_forward.1} parent=11 // pred_check_branch
          %542 = sbr.rel (%p540) target = $region76
        $region75: #{ss2depth_k1_forward.1} parent=11 // pred_region
          _
        $region76: #{ss2depth_k1_forward.1} parent=11 // pred_fallthru
          _
        // Predicated region
        $region77: #{ss2depth_k1_forward.1} parent=11 // pred_check
          %p543 = pneg %p412
        $region78: #{ss2depth_k1_forward.1} parent=11 // pred_check_branch
          %545 = sbr.rel (%p543) target = $region80
        $region79: #{ss2depth_k1_forward.1} parent=11 // pred_region
          _
        $region80: #{ss2depth_k1_forward.1} parent=11 // pred_fallthru
          _
        // Predicated region
        $region81: #{ss2depth_k1_forward.1} parent=11 // pred_check
          %p546 = pneg %p433
        $region82: #{ss2depth_k1_forward.1} parent=11 // pred_check_branch
          %548 = sbr.rel (%p546) target = $region84
        $region83: #{ss2depth_k1_forward.1} parent=11 // pred_region
          _
        $region84: #{ss2depth_k1_forward.1} parent=11 // pred_fallthru
          _
        // Predicated region
        $region85: #{ss2depth_k1_forward.1} parent=11 // pred_check
          %p549 = pneg %p454
        $region86: #{ss2depth_k1_forward.1} parent=11 // pred_check_branch
          %551 = sbr.rel (%p549) target = $region88
        $region87: #{ss2depth_k1_forward.1} parent=11 // pred_region
          _
        $region88: #{ss2depth_k1_forward.1} parent=11 // pred_fallthru
          _
      $region12: #{ss2depth_k1_forward.1} parent=5 // pred_fallthru
        _
      %p552 = scmp.lt.s32.totalorder %s29, 2
      // Predicated region
      $region89: #{ss2depth_k1_forward.1} parent=5 // pred_check
        %p553 = pneg %p552
      $region90: #{ss2depth_k1_forward.1} parent=5 // pred_check_branch
        %555 = sbr.rel (%p553) target = $region92
      $region91: #{ss2depth_k1_forward.1} parent=5 // pred_region
        // Predicated region
        $region93: #{ss2depth_k1_forward.1} parent=91 // pred_check
          %p556 = pneg %p49
        $region94: #{ss2depth_k1_forward.1} parent=91 // pred_check_branch
          %558 = sbr.rel (%p556) target = $region96
        $region95: #{ss2depth_k1_forward.1} parent=91 // pred_region
          %p559 = scmp.lt.s32.totalorder %s29, 1
          %s560 = scalar_select %p559, %s29, 1
          %s561 = smul.addr %s560, 8
          %s562 = smul.addr %s561, 8
          %s563 = scalar_lea.vmem %s0, %s562
        $region96: #{ss2depth_k1_forward.1} parent=91 // pred_fallthru
          _
      $region92: #{ss2depth_k1_forward.1} parent=5 // pred_fallthru
        _
      %p564 = scmp.le.s32.totalorder 1, %s29
      %p565 = scmp.lt.s32.totalorder %s29, 3
      %p566 = pnand %p564, %p565
      %p567 = pneg %p566
      // Predicated region
      $region97: #{ss2depth_k1_forward.1} parent=5 // pred_check
        _
      $region98: #{ss2depth_k1_forward.1} parent=5 // pred_check_branch
        %569 = sbr.rel (%p566) target = $region100
      $region99: #{ss2depth_k1_forward.1} parent=5 // pred_region
        %s570 = ssub.s32 %s29, 1
        %p571 = scmp.lt.s32.totalorder %s34, 1
        %s572 = scalar_select %p571, %s34, 1
        %s573 = smul.addr %s572, 8
        %s574 = smul.addr %s573, 8
        %s575 = scalar_lea.vmem %s0, %s574
        %p576 = pneg %p55
        %p577 = pneg %p52
        %p578 = pneg %p76
        %p579 = pneg %p73
        %p580 = pneg %p97
        %p581 = pneg %p94
        %p582 = pneg %p118
        %p583 = pneg %p115
        %p584 = pneg %p139
        %p585 = pneg %p136
        %p586 = pneg %p160
        %p587 = pneg %p157
        %p588 = pneg %p181
        %p589 = pneg %p178
        %p590 = pneg %p202
        %p591 = pneg %p199
        %p592 = pneg %p223
        %p593 = pneg %p220
        %p594 = pneg %p244
        %p595 = pneg %p241
        %p596 = pneg %p265
        %p597 = pneg %p262
        %p598 = pneg %p286
        %p599 = pneg %p283
        %p600 = pneg %p307
        %p601 = pneg %p304
        %p602 = pneg %p328
        %p603 = pneg %p325
        %p604 = pneg %p349
        %p605 = pneg %p346
        %p606 = pneg %p370
        %p607 = pneg %p367
        %p608 = pneg %p391
        %p609 = pneg %p388
        %p610 = pneg %p412
        %p611 = pneg %p409
        %p612 = pneg %p433
        %p613 = pneg %p430
        %p614 = pneg %p454
        %p615 = pneg %p451
        %p616 = pneg %p480
        %p617 = pneg %p477
        %s618 = sand.u32 %s467, 1
        %s619 = scalar_lea.sflag [#allocation3], %s618
        %s620 = sand.u32 %s467, 1
        %s621 = smul.addr %s620, 64
        %s622 = scalar_lea.vmem [#allocation2], %s621
        %p623 = scmp.lt.s32.totalorder %s34, 1
        %s624 = scalar_select %p623, %s34, 1
        %s625 = smul.addr %s624, 8
        %s626 = smul.addr %s625, 8
        %s627 = scalar_lea.vmem %s0, %s626
        %v628 = vld [vmem:[%s627] sm:$0xff]
        %v629 = vld [vmem:[%s627 + $0x8] sm:$0xff]
        %v630 = vld [vmem:[%s627 + $0x10] sm:$0xff]
        %v631 = vld [vmem:[%s627 + $0x18] sm:$0xff]
        %v632 = vld [vmem:[%s627 + $0x20] sm:$0xff]
        %v633 = vld [vmem:[%s627 + $0x28] sm:$0xff]
        %v634 = vld [vmem:[%s627 + $0x30] sm:$0xff]
        %v635 = vld [vmem:[%s627 + $0x38] sm:$0xff]
        %v636 = vld [vmem:[%s1] sm:$0xff]
        %v637 = vld [vmem:[%s1 + $0x8] sm:$0xff]
        %v638 = vld [vmem:[%s1 + $0x10] sm:$0xff]
        %v639 = vld [vmem:[%s1 + $0x18] sm:$0xff]
        %vm640 = vcmask 261120
        %v642 = vsel %vm640, %v628, 0
        %v645 = vsel %vm640, %v629, 0
        %v648 = vsel %vm640, %v630, 0
        %v651 = vsel %vm640, %v631, 0
        %v654 = vsel %vm640, %v632, 0
        %v657 = vsel %vm640, %v633, 0
        %v660 = vsel %vm640, %v634, 0
        %v663 = vsel %vm640, %v635, 0
        %665 = vmatpush.msra.mxu0 0.0
        %666 = vmatpush.msra.mxu0 0.0
        %667 = vmatpush.msra.mxu0 0.0
        %668 = vmatpush.msra.mxu0 0.0
        %669 = vmatpush.msra.mxu0 0.0
        %670 = vmatpush.msra.mxu0 0.0
        %671 = vmatpush.msra.mxu0 0.0
        %672 = vmatpush.msra.mxu0 0.0
        %673 = vmatpush.msra.mxu0 0.0
        %674 = vmatpush.msra.mxu0 0.0
        %675 = vmatpush.msra.mxu0 0.0
        %676 = vmatpush.msra.mxu0 0.0
        %677 = vmatpush.msra.mxu0 %v639
        %678 = vmatpush.msra.mxu0 %v638
        %679 = vmatpush.msra.mxu0 %v637
        %680 = vmatpush.msra.mxu0 %v636
        %681 = vmatmul.f32.gmra.mxu0 %v642
        %v682 = vpop.f32.mrf.mxu0
        %v683 = vadd.f32 0.0, %v682
        %684 = vmatmul.f32.gmra.mxu0 %v645
        %v685 = vpop.f32.mrf.mxu0
        %v686 = vadd.f32 0.0, %v685
        %687 = vmatmul.f32.gmra.mxu0 %v648
        %v688 = vpop.f32.mrf.mxu0
        %v689 = vadd.f32 0.0, %v688
        %690 = vmatmul.f32.gmra.mxu0 %v651
        %v691 = vpop.f32.mrf.mxu0
        %v692 = vadd.f32 0.0, %v691
        %693 = vmatmul.f32.gmra.mxu0 %v654
        %v694 = vpop.f32.mrf.mxu0
        %v695 = vadd.f32 0.0, %v694
        %696 = vmatmul.f32.gmra.mxu0 %v657
        %v697 = vpop.f32.mrf.mxu0
        %v698 = vadd.f32 0.0, %v697
        %699 = vmatmul.f32.gmra.mxu0 %v660
        %v700 = vpop.f32.mrf.mxu0
        %v701 = vadd.f32 0.0, %v700
        %702 = vmatmul.f32.gmra.mxu0 %v663
        %v703 = vpop.f32.mrf.mxu0
        %v704 = vadd.f32 0.0, %v703
        %705 = vdwg.mxu0
        %v706 = vld [vmem:[%s2] sm:$0xff]
        %v707 = vld [vmem:[%s2 + $0x8] sm:$0xff]
        %v708 = vld [vmem:[%s2 + $0x10] sm:$0xff]
        %v709 = vld [vmem:[%s2 + $0x18] sm:$0xff]
        %v710 = vld [vmem:[%s2 + $0x20] sm:$0xff]
        %v711 = vld [vmem:[%s2 + $0x28] sm:$0xff]
        %v712 = vld [vmem:[%s2 + $0x30] sm:$0xff]
        %v713 = vld [vmem:[%s2 + $0x38] sm:$0xff]
        %v714 = vld [vmem:[%s2 + $0x40] sm:$0xff]
        %v715 = vld [vmem:[%s2 + $0x48] sm:$0xff]
        %v716 = vld [vmem:[%s2 + $0x50] sm:$0xff]
        %v717 = vld [vmem:[%s2 + $0x58] sm:$0xff]
        %v718 = vld [vmem:[%s2 + $0x60] sm:$0xff]
        %v719 = vld [vmem:[%s2 + $0x68] sm:$0xff]
        %v720 = vld [vmem:[%s2 + $0x70] sm:$0xff]
        %v721 = vld [vmem:[%s2 + $0x78] sm:$0xff]
        %v722 = vld [vmem:[%s2 + $0x80] sm:$0xff]
        %v723 = vld [vmem:[%s2 + $0x88] sm:$0xff]
        %v724 = vld [vmem:[%s2 + $0x90] sm:$0xff]
        %v725 = vld [vmem:[%s2 + $0x98] sm:$0xff]
        %v726 = vld [vmem:[%s2 + $0xa0] sm:$0xff]
        %v727 = vld [vmem:[%s2 + $0xa8] sm:$0xff]
        %v728 = vld [vmem:[%s2 + $0xb0] sm:$0xff]
        %v729 = vld [vmem:[%s2 + $0xb8] sm:$0xff]
        %v730 = vld [vmem:[%s2 + $0xc0] sm:$0xff]
        %v731 = vld [vmem:[%s2 + $0xc8] sm:$0xff]
        %v732 = vld [vmem:[%s2 + $0xd0] sm:$0xff]
        %v733 = vld [vmem:[%s2 + $0xd8] sm:$0xff]
        %v734 = vld [vmem:[%s2 + $0xe0] sm:$0xff]
        %v735 = vld [vmem:[%s2 + $0xe8] sm:$0xff]
        %v736 = vld [vmem:[%s2 + $0xf0] sm:$0xff]
        %v737 = vld [vmem:[%s2 + $0xf8] sm:$0xff]
        %v738 = vld [vmem:[%s2 + $0x100] sm:$0xff]
        %v739 = vld [vmem:[%s2 + $0x108] sm:$0xff]
        %v740 = vld [vmem:[%s2 + $0x110] sm:$0xff]
        %v741 = vld [vmem:[%s2 + $0x118] sm:$0xff]
        %v742 = vld [vmem:[%s2 + $0x120] sm:$0xff]
        %v743 = vld [vmem:[%s2 + $0x128] sm:$0xff]
        %v744 = vld [vmem:[%s2 + $0x130] sm:$0xff]
        %v745 = vld [vmem:[%s2 + $0x138] sm:$0xff]
        %v746 = vld [vmem:[%s2 + $0x140] sm:$0xff]
        %v747 = vld [vmem:[%s2 + $0x148] sm:$0xff]
        %v748 = vld [vmem:[%s2 + $0x150] sm:$0xff]
        %v749 = vld [vmem:[%s2 + $0x158] sm:$0xff]
        %v750 = vld [vmem:[%s2 + $0x160] sm:$0xff]
        %v751 = vld [vmem:[%s2 + $0x168] sm:$0xff]
        %v752 = vld [vmem:[%s2 + $0x170] sm:$0xff]
        %v753 = vld [vmem:[%s2 + $0x178] sm:$0xff]
        %v754 = vld [vmem:[%s2 + $0x180] sm:$0xff]
        %v755 = vld [vmem:[%s2 + $0x188] sm:$0xff]
        %v756 = vld [vmem:[%s2 + $0x190] sm:$0xff]
        %v757 = vld [vmem:[%s2 + $0x198] sm:$0xff]
        %v758 = vld [vmem:[%s2 + $0x1a0] sm:$0xff]
        %v759 = vld [vmem:[%s2 + $0x1a8] sm:$0xff]
        %v760 = vld [vmem:[%s2 + $0x1b0] sm:$0xff]
        %v761 = vld [vmem:[%s2 + $0x1b8] sm:$0xff]
        %v762 = vld [vmem:[%s2 + $0x1c0] sm:$0xff]
        %v763 = vld [vmem:[%s2 + $0x1c8] sm:$0xff]
        %v764 = vld [vmem:[%s2 + $0x1d0] sm:$0xff]
        %v765 = vld [vmem:[%s2 + $0x1d8] sm:$0xff]
        %v766 = vld [vmem:[%s2 + $0x1e0] sm:$0xff]
        %v767 = vld [vmem:[%s2 + $0x1e8] sm:$0xff]
        %v768 = vld [vmem:[%s2 + $0x1f0] sm:$0xff]
        %v769 = vld [vmem:[%s2 + $0x1f8] sm:$0xff]
        %v770 = vld [vmem:[%s2 + $0x200] sm:$0xff]
        %v771 = vld [vmem:[%s2 + $0x208] sm:$0xff]
        %v772 = vld [vmem:[%s2 + $0x210] sm:$0xff]
        %v773 = vld [vmem:[%s2 + $0x218] sm:$0xff]
        %v774 = vld [vmem:[%s2 + $0x220] sm:$0xff]
        %v775 = vld [vmem:[%s2 + $0x228] sm:$0xff]
        %v776 = vld [vmem:[%s2 + $0x230] sm:$0xff]
        %v777 = vld [vmem:[%s2 + $0x238] sm:$0xff]
        %vm778 = vcmask 523264
        %v780 = vsel %vm778, %v706, 0
        %v783 = vsel %vm778, %v707, 0
        %v786 = vsel %vm778, %v708, 0
        %v789 = vsel %vm778, %v709, 0
        %v792 = vsel %vm778, %v710, 0
        %v795 = vsel %vm778, %v711, 0
        %v798 = vsel %vm778, %v712, 0
        %v801 = vsel %vm778, %v713, 0
        %v804 = vsel %vm778, %v714, 0
        %v807 = vsel %vm778, %v715, 0
        %v810 = vsel %vm778, %v716, 0
        %v813 = vsel %vm778, %v717, 0
        %v816 = vsel %vm778, %v718, 0
        %v819 = vsel %vm778, %v719, 0
        %v822 = vsel %vm778, %v720, 0
        %v825 = vsel %vm778, %v721, 0
        %v828 = vsel %vm778, %v722, 0
        %v831 = vsel %vm778, %v723, 0
        %v834 = vsel %vm778, %v724, 0
        %v837 = vsel %vm778, %v725, 0
        %v840 = vsel %vm778, %v726, 0
        %v843 = vsel %vm778, %v727, 0
        %v846 = vsel %vm778, %v728, 0
        %v849 = vsel %vm778, %v729, 0
        %v852 = vsel %vm778, %v730, 0
        %v855 = vsel %vm778, %v731, 0
        %v858 = vsel %vm778, %v732, 0
        %v861 = vsel %vm778, %v733, 0
        %v864 = vsel %vm778, %v734, 0
        %v867 = vsel %vm778, %v735, 0
        %v870 = vsel %vm778, %v736, 0
        %v873 = vsel %vm778, %v737, 0
        %v876 = vsel %vm778, %v738, 0
        %v879 = vsel %vm778, %v739, 0
        %v882 = vsel %vm778, %v740, 0
        %v885 = vsel %vm778, %v741, 0
        %v888 = vsel %vm778, %v742, 0
        %v891 = vsel %vm778, %v743, 0
        %v894 = vsel %vm778, %v744, 0
        %v897 = vsel %vm778, %v745, 0
        %v900 = vsel %vm778, %v746, 0
        %v903 = vsel %vm778, %v747, 0
        %v906 = vsel %vm778, %v748, 0
        %v909 = vsel %vm778, %v749, 0
        %v912 = vsel %vm778, %v750, 0
        %v915 = vsel %vm778, %v751, 0
        %v918 = vsel %vm778, %v752, 0
        %v921 = vsel %vm778, %v753, 0
        %v924 = vsel %vm778, %v754, 0
        %v927 = vsel %vm778, %v755, 0
        %v930 = vsel %vm778, %v756, 0
        %v933 = vsel %vm778, %v757, 0
        %v936 = vsel %vm778, %v758, 0
        %v939 = vsel %vm778, %v759, 0
        %v942 = vsel %vm778, %v760, 0
        %v945 = vsel %vm778, %v761, 0
        %v948 = vsel %vm778, %v762, 0
        %v951 = vsel %vm778, %v763, 0
        %v954 = vsel %vm778, %v764, 0
        %v957 = vsel %vm778, %v765, 0
        %v960 = vsel %vm778, %v766, 0
        %v963 = vsel %vm778, %v767, 0
        %v966 = vsel %vm778, %v768, 0
        %v969 = vsel %vm778, %v769, 0
        %v972 = vsel %vm778, %v770, 0
        %v975 = vsel %vm778, %v771, 0
        %v978 = vsel %vm778, %v772, 0
        %v981 = vsel %vm778, %v773, 0
        %v984 = vsel %vm778, %v774, 0
        %v987 = vsel %vm778, %v775, 0
        %v990 = vsel %vm778, %v776, 0
        %v993 = vsel %vm778, %v777, 0
        %995 = vmatpush.msra.mxu0 0.0
        %996 = vmatpush.msra.mxu0 0.0
        %997 = vmatpush.msra.mxu0 0.0
        %998 = vmatpush.msra.mxu0 0.0
        %999 = vmatpush.msra.mxu0 0.0
        %1000 = vmatpush.msra.mxu0 0.0
        %1001 = vmatpush.msra.mxu0 0.0
        %1002 = vmatpush.msra.mxu0 0.0
        %1003 = vmatpush.msra.mxu0 %v704
        %1004 = vmatpush.msra.mxu0 %v701
        %1005 = vmatpush.msra.mxu0 %v698
        %1006 = vmatpush.msra.mxu0 %v695
        %1007 = vmatpush.msra.mxu0 %v692
        %1008 = vmatpush.msra.mxu0 %v689
        %1009 = vmatpush.msra.mxu0 %v686
        %1010 = vmatpush.msra.mxu0 %v683
        %1011 = vmatmul.f32.gmra.mxu0 %v780
        %v1012 = vpop.f32.mrf.mxu0
        %v1013 = vadd.f32 0.0, %v1012
        %1014 = vmatmul.f32.gmra.mxu0 %v783
        %v1015 = vpop.f32.mrf.mxu0
        %v1016 = vadd.f32 0.0, %v1015
        %1017 = vmatmul.f32.gmra.mxu0 %v786
        %v1018 = vpop.f32.mrf.mxu0
        %v1019 = vadd.f32 0.0, %v1018
        %1020 = vmatmul.f32.gmra.mxu0 %v789
        %v1021 = vpop.f32.mrf.mxu0
        %v1022 = vadd.f32 0.0, %v1021
        %1023 = vmatmul.f32.gmra.mxu0 %v792
        %v1024 = vpop.f32.mrf.mxu0
        %v1025 = vadd.f32 0.0, %v1024
        %1026 = vmatmul.f32.gmra.mxu0 %v795
        %v1027 = vpop.f32.mrf.mxu0
        %v1028 = vadd.f32 0.0, %v1027
        %1029 = vmatmul.f32.gmra.mxu0 %v798
        %v1030 = vpop.f32.mrf.mxu0
        %v1031 = vadd.f32 0.0, %v1030
        %1032 = vmatmul.f32.gmra.mxu0 %v801
        %v1033 = vpop.f32.mrf.mxu0
        %v1034 = vadd.f32 0.0, %v1033
        %1035 = vmatmul.f32.gmra.mxu0 %v804
        %v1036 = vpop.f32.mrf.mxu0
        %v1037 = vadd.f32 0.0, %v1036
        %1038 = vmatmul.f32.gmra.mxu0 %v807
        %v1039 = vpop.f32.mrf.mxu0
        %v1040 = vadd.f32 0.0, %v1039
        %1041 = vmatmul.f32.gmra.mxu0 %v810
        %v1042 = vpop.f32.mrf.mxu0
        %v1043 = vadd.f32 0.0, %v1042
        %1044 = vmatmul.f32.gmra.mxu0 %v813
        %v1045 = vpop.f32.mrf.mxu0
        %v1046 = vadd.f32 0.0, %v1045
        %1047 = vmatmul.f32.gmra.mxu0 %v816
        %v1048 = vpop.f32.mrf.mxu0
        %v1049 = vadd.f32 0.0, %v1048
        %1050 = vmatmul.f32.gmra.mxu0 %v819
        %v1051 = vpop.f32.mrf.mxu0
        %v1052 = vadd.f32 0.0, %v1051
        %1053 = vmatmul.f32.gmra.mxu0 %v822
        %v1054 = vpop.f32.mrf.mxu0
        %v1055 = vadd.f32 0.0, %v1054
        %1056 = vmatmul.f32.gmra.mxu0 %v825
        %v1057 = vpop.f32.mrf.mxu0
        %v1058 = vadd.f32 0.0, %v1057
        %1059 = vmatmul.f32.gmra.mxu0 %v828
        %v1060 = vpop.f32.mrf.mxu0
        %v1061 = vadd.f32 0.0, %v1060
        %1062 = vmatmul.f32.gmra.mxu0 %v831
        %v1063 = vpop.f32.mrf.mxu0
        %v1064 = vadd.f32 0.0, %v1063
        %1065 = vmatmul.f32.gmra.mxu0 %v834
        %v1066 = vpop.f32.mrf.mxu0
        %v1067 = vadd.f32 0.0, %v1066
        %1068 = vmatmul.f32.gmra.mxu0 %v837
        %v1069 = vpop.f32.mrf.mxu0
        %v1070 = vadd.f32 0.0, %v1069
        %1071 = vmatmul.f32.gmra.mxu0 %v840
        %v1072 = vpop.f32.mrf.mxu0
        %v1073 = vadd.f32 0.0, %v1072
        %1074 = vmatmul.f32.gmra.mxu0 %v843
        %v1075 = vpop.f32.mrf.mxu0
        %v1076 = vadd.f32 0.0, %v1075
        %1077 = vmatmul.f32.gmra.mxu0 %v846
        %v1078 = vpop.f32.mrf.mxu0
        %v1079 = vadd.f32 0.0, %v1078
        %1080 = vmatmul.f32.gmra.mxu0 %v849
        %v1081 = vpop.f32.mrf.mxu0
        %v1082 = vadd.f32 0.0, %v1081
        %1083 = vmatmul.f32.gmra.mxu0 %v852
        %v1084 = vpop.f32.mrf.mxu0
        %v1085 = vadd.f32 0.0, %v1084
        %1086 = vmatmul.f32.gmra.mxu0 %v855
        %v1087 = vpop.f32.mrf.mxu0
        %v1088 = vadd.f32 0.0, %v1087
        %1089 = vmatmul.f32.gmra.mxu0 %v858
        %v1090 = vpop.f32.mrf.mxu0
        %v1091 = vadd.f32 0.0, %v1090
        %1092 = vmatmul.f32.gmra.mxu0 %v861
        %v1093 = vpop.f32.mrf.mxu0
        %v1094 = vadd.f32 0.0, %v1093
        %1095 = vmatmul.f32.gmra.mxu0 %v864
        %v1096 = vpop.f32.mrf.mxu0
        %v1097 = vadd.f32 0.0, %v1096
        %1098 = vmatmul.f32.gmra.mxu0 %v867
        %v1099 = vpop.f32.mrf.mxu0
        %v1100 = vadd.f32 0.0, %v1099
        %1101 = vmatmul.f32.gmra.mxu0 %v870
        %v1102 = vpop.f32.mrf.mxu0
        %v1103 = vadd.f32 0.0, %v1102
        %1104 = vmatmul.f32.gmra.mxu0 %v873
        %v1105 = vpop.f32.mrf.mxu0
        %v1106 = vadd.f32 0.0, %v1105
        %1107 = vmatmul.f32.gmra.mxu0 %v876
        %v1108 = vpop.f32.mrf.mxu0
        %v1109 = vadd.f32 0.0, %v1108
        %1110 = vmatmul.f32.gmra.mxu0 %v879
        %v1111 = vpop.f32.mrf.mxu0
        %v1112 = vadd.f32 0.0, %v1111
        %1113 = vmatmul.f32.gmra.mxu0 %v882
        %v1114 = vpop.f32.mrf.mxu0
        %v1115 = vadd.f32 0.0, %v1114
        %1116 = vmatmul.f32.gmra.mxu0 %v885
        %v1117 = vpop.f32.mrf.mxu0
        %v1118 = vadd.f32 0.0, %v1117
        %1119 = vmatmul.f32.gmra.mxu0 %v888
        %v1120 = vpop.f32.mrf.mxu0
        %v1121 = vadd.f32 0.0, %v1120
        %1122 = vmatmul.f32.gmra.mxu0 %v891
        %v1123 = vpop.f32.mrf.mxu0
        %v1124 = vadd.f32 0.0, %v1123
        %1125 = vmatmul.f32.gmra.mxu0 %v894
        %v1126 = vpop.f32.mrf.mxu0
        %v1127 = vadd.f32 0.0, %v1126
        %1128 = vmatmul.f32.gmra.mxu0 %v897
        %v1129 = vpop.f32.mrf.mxu0
        %v1130 = vadd.f32 0.0, %v1129
        %1131 = vmatmul.f32.gmra.mxu0 %v900
        %v1132 = vpop.f32.mrf.mxu0
        %v1133 = vadd.f32 0.0, %v1132
        %1134 = vmatmul.f32.gmra.mxu0 %v903
        %v1135 = vpop.f32.mrf.mxu0
        %v1136 = vadd.f32 0.0, %v1135
        %1137 = vmatmul.f32.gmra.mxu0 %v906
        %v1138 = vpop.f32.mrf.mxu0
        %v1139 = vadd.f32 0.0, %v1138
        %1140 = vmatmul.f32.gmra.mxu0 %v909
        %v1141 = vpop.f32.mrf.mxu0
        %v1142 = vadd.f32 0.0, %v1141
        %1143 = vmatmul.f32.gmra.mxu0 %v912
        %v1144 = vpop.f32.mrf.mxu0
        %v1145 = vadd.f32 0.0, %v1144
        %1146 = vmatmul.f32.gmra.mxu0 %v915
        %v1147 = vpop.f32.mrf.mxu0
        %v1148 = vadd.f32 0.0, %v1147
        %1149 = vmatmul.f32.gmra.mxu0 %v918
        %v1150 = vpop.f32.mrf.mxu0
        %v1151 = vadd.f32 0.0, %v1150
        %1152 = vmatmul.f32.gmra.mxu0 %v921
        %v1153 = vpop.f32.mrf.mxu0
        %v1154 = vadd.f32 0.0, %v1153
        %1155 = vmatmul.f32.gmra.mxu0 %v924
        %v1156 = vpop.f32.mrf.mxu0
        %v1157 = vadd.f32 0.0, %v1156
        %1158 = vmatmul.f32.gmra.mxu0 %v927
        %v1159 = vpop.f32.mrf.mxu0
        %v1160 = vadd.f32 0.0, %v1159
        %1161 = vmatmul.f32.gmra.mxu0 %v930
        %v1162 = vpop.f32.mrf.mxu0
        %v1163 = vadd.f32 0.0, %v1162
        %1164 = vmatmul.f32.gmra.mxu0 %v933
        %v1165 = vpop.f32.mrf.mxu0
        %v1166 = vadd.f32 0.0, %v1165
        %1167 = vmatmul.f32.gmra.mxu0 %v936
        %v1168 = vpop.f32.mrf.mxu0
        %v1169 = vadd.f32 0.0, %v1168
        %1170 = vmatmul.f32.gmra.mxu0 %v939
        %v1171 = vpop.f32.mrf.mxu0
        %v1172 = vadd.f32 0.0, %v1171
        %1173 = vmatmul.f32.gmra.mxu0 %v942
        %v1174 = vpop.f32.mrf.mxu0
        %v1175 = vadd.f32 0.0, %v1174
        %1176 = vmatmul.f32.gmra.mxu0 %v945
        %v1177 = vpop.f32.mrf.mxu0
        %v1178 = vadd.f32 0.0, %v1177
        %1179 = vmatmul.f32.gmra.mxu0 %v948
        %v1180 = vpop.f32.mrf.mxu0
        %v1181 = vadd.f32 0.0, %v1180
        %1182 = vmatmul.f32.gmra.mxu0 %v951
        %v1183 = vpop.f32.mrf.mxu0
        %v1184 = vadd.f32 0.0, %v1183
        %1185 = vmatmul.f32.gmra.mxu0 %v954
        %v1186 = vpop.f32.mrf.mxu0
        %v1187 = vadd.f32 0.0, %v1186
        %1188 = vmatmul.f32.gmra.mxu0 %v957
        %v1189 = vpop.f32.mrf.mxu0
        %v1190 = vadd.f32 0.0, %v1189
        %1191 = vmatmul.f32.gmra.mxu0 %v960
        %v1192 = vpop.f32.mrf.mxu0
        %v1193 = vadd.f32 0.0, %v1192
        %1194 = vmatmul.f32.gmra.mxu0 %v963
        %v1195 = vpop.f32.mrf.mxu0
        %v1196 = vadd.f32 0.0, %v1195
        %1197 = vmatmul.f32.gmra.mxu0 %v966
        %v1198 = vpop.f32.mrf.mxu0
        %v1199 = vadd.f32 0.0, %v1198
        %1200 = vmatmul.f32.gmra.mxu0 %v969
        %v1201 = vpop.f32.mrf.mxu0
        %v1202 = vadd.f32 0.0, %v1201
        %1203 = vmatmul.f32.gmra.mxu0 %v972
        %v1204 = vpop.f32.mrf.mxu0
        %v1205 = vadd.f32 0.0, %v1204
        %1206 = vmatmul.f32.gmra.mxu0 %v975
        %v1207 = vpop.f32.mrf.mxu0
        %v1208 = vadd.f32 0.0, %v1207
        %1209 = vmatmul.f32.gmra.mxu0 %v978
        %v1210 = vpop.f32.mrf.mxu0
        %v1211 = vadd.f32 0.0, %v1210
        %1212 = vmatmul.f32.gmra.mxu0 %v981
        %v1213 = vpop.f32.mrf.mxu0
        %v1214 = vadd.f32 0.0, %v1213
        %1215 = vmatmul.f32.gmra.mxu0 %v984
        %v1216 = vpop.f32.mrf.mxu0
        %v1217 = vadd.f32 0.0, %v1216
        %1218 = vmatmul.f32.gmra.mxu0 %v987
        %v1219 = vpop.f32.mrf.mxu0
        %v1220 = vadd.f32 0.0, %v1219
        %1221 = vmatmul.f32.gmra.mxu0 %v990
        %v1222 = vpop.f32.mrf.mxu0
        %v1223 = vadd.f32 0.0, %v1222
        %1224 = vmatmul.f32.gmra.mxu0 %v993
        %v1225 = vpop.f32.mrf.mxu0
        %v1226 = vadd.f32 0.0, %v1225
        %1227 = vdwg.mxu0
        %v1228 = vld [vmem:[%s3] sm:$0xff]
        %v1229 = vld [vmem:[%s3 + $0x8] sm:$0x1]
        %v1230 = vperm.slane %v1228, 0
        %v1231 = vmul.f32 %v1013, %v1230
        %v1232 = vmul.f32 %v1016, %v1230
        %v1233 = vmul.f32 %v1019, %v1230
        %v1234 = vmul.f32 %v1022, %v1230
        %v1235 = vmul.f32 %v1025, %v1230
        %v1236 = vmul.f32 %v1028, %v1230
        %v1237 = vmul.f32 %v1031, %v1230
        %v1238 = vmul.f32 %v1034, %v1230
        %v1239 = vadd.f32 %v1231, 0.0
        %v1240 = vadd.f32 %v1232, 0.0
        %v1241 = vadd.f32 %v1233, 0.0
        %v1242 = vadd.f32 %v1234, 0.0
        %v1243 = vadd.f32 %v1235, 0.0
        %v1244 = vadd.f32 %v1236, 0.0
        %v1245 = vadd.f32 %v1237, 0.0
        %v1246 = vadd.f32 %v1238, 0.0
        %v1247 = vperm.slane %v1228, 1
        %v1248 = vmul.f32 %v1037, %v1247
        %v1249 = vmul.f32 %v1040, %v1247
        %v1250 = vmul.f32 %v1043, %v1247
        %v1251 = vmul.f32 %v1046, %v1247
        %v1252 = vmul.f32 %v1049, %v1247
        %v1253 = vmul.f32 %v1052, %v1247
        %v1254 = vmul.f32 %v1055, %v1247
        %v1255 = vmul.f32 %v1058, %v1247
        %v1256 = vadd.f32 %v1239, %v1248
        %v1257 = vadd.f32 %v1240, %v1249
        %v1258 = vadd.f32 %v1241, %v1250
        %v1259 = vadd.f32 %v1242, %v1251
        %v1260 = vadd.f32 %v1243, %v1252
        %v1261 = vadd.f32 %v1244, %v1253
        %v1262 = vadd.f32 %v1245, %v1254
        %v1263 = vadd.f32 %v1246, %v1255
        %v1264 = vperm.slane %v1228, 2
        %v1265 = vmul.f32 %v1061, %v1264
        %v1266 = vmul.f32 %v1064, %v1264
        %v1267 = vmul.f32 %v1067, %v1264
        %v1268 = vmul.f32 %v1070, %v1264
        %v1269 = vmul.f32 %v1073, %v1264
        %v1270 = vmul.f32 %v1076, %v1264
        %v1271 = vmul.f32 %v1079, %v1264
        %v1272 = vmul.f32 %v1082, %v1264
        %v1273 = vadd.f32 %v1256, %v1265
        %v1274 = vadd.f32 %v1257, %v1266
        %v1275 = vadd.f32 %v1258, %v1267
        %v1276 = vadd.f32 %v1259, %v1268
        %v1277 = vadd.f32 %v1260, %v1269
        %v1278 = vadd.f32 %v1261, %v1270
        %v1279 = vadd.f32 %v1262, %v1271
        %v1280 = vadd.f32 %v1263, %v1272
        %v1281 = vperm.slane %v1228, 3
        %v1282 = vmul.f32 %v1085, %v1281
        %v1283 = vmul.f32 %v1088, %v1281
        %v1284 = vmul.f32 %v1091, %v1281
        %v1285 = vmul.f32 %v1094, %v1281
        %v1286 = vmul.f32 %v1097, %v1281
        %v1287 = vmul.f32 %v1100, %v1281
        %v1288 = vmul.f32 %v1103, %v1281
        %v1289 = vmul.f32 %v1106, %v1281
        %v1290 = vadd.f32 %v1273, %v1282
        %v1291 = vadd.f32 %v1274, %v1283
        %v1292 = vadd.f32 %v1275, %v1284
        %v1293 = vadd.f32 %v1276, %v1285
        %v1294 = vadd.f32 %v1277, %v1286
        %v1295 = vadd.f32 %v1278, %v1287
        %v1296 = vadd.f32 %v1279, %v1288
        %v1297 = vadd.f32 %v1280, %v1289
        %v1298 = vperm.slane %v1228, 4
        %v1299 = vmul.f32 %v1109, %v1298
        %v1300 = vmul.f32 %v1112, %v1298
        %v1301 = vmul.f32 %v1115, %v1298
        %v1302 = vmul.f32 %v1118, %v1298
        %v1303 = vmul.f32 %v1121, %v1298
        %v1304 = vmul.f32 %v1124, %v1298
        %v1305 = vmul.f32 %v1127, %v1298
        %v1306 = vmul.f32 %v1130, %v1298
        %v1307 = vadd.f32 %v1290, %v1299
        %v1308 = vadd.f32 %v1291, %v1300
        %v1309 = vadd.f32 %v1292, %v1301
        %v1310 = vadd.f32 %v1293, %v1302
        %v1311 = vadd.f32 %v1294, %v1303
        %v1312 = vadd.f32 %v1295, %v1304
        %v1313 = vadd.f32 %v1296, %v1305
        %v1314 = vadd.f32 %v1297, %v1306
        %v1315 = vperm.slane %v1228, 5
        %v1316 = vmul.f32 %v1133, %v1315
        %v1317 = vmul.f32 %v1136, %v1315
        %v1318 = vmul.f32 %v1139, %v1315
        %v1319 = vmul.f32 %v1142, %v1315
        %v1320 = vmul.f32 %v1145, %v1315
        %v1321 = vmul.f32 %v1148, %v1315
        %v1322 = vmul.f32 %v1151, %v1315
        %v1323 = vmul.f32 %v1154, %v1315
        %v1324 = vadd.f32 %v1307, %v1316
        %v1325 = vadd.f32 %v1308, %v1317
        %v1326 = vadd.f32 %v1309, %v1318
        %v1327 = vadd.f32 %v1310, %v1319
        %v1328 = vadd.f32 %v1311, %v1320
        %v1329 = vadd.f32 %v1312, %v1321
        %v1330 = vadd.f32 %v1313, %v1322
        %v1331 = vadd.f32 %v1314, %v1323
        %v1332 = vperm.slane %v1228, 6
        %v1333 = vmul.f32 %v1157, %v1332
        %v1334 = vmul.f32 %v1160, %v1332
        %v1335 = vmul.f32 %v1163, %v1332
        %v1336 = vmul.f32 %v1166, %v1332
        %v1337 = vmul.f32 %v1169, %v1332
        %v1338 = vmul.f32 %v1172, %v1332
        %v1339 = vmul.f32 %v1175, %v1332
        %v1340 = vmul.f32 %v1178, %v1332
        %v1341 = vadd.f32 %v1324, %v1333
        %v1342 = vadd.f32 %v1325, %v1334
        %v1343 = vadd.f32 %v1326, %v1335
        %v1344 = vadd.f32 %v1327, %v1336
        %v1345 = vadd.f32 %v1328, %v1337
        %v1346 = vadd.f32 %v1329, %v1338
        %v1347 = vadd.f32 %v1330, %v1339
        %v1348 = vadd.f32 %v1331, %v1340
        %v1349 = vperm.slane %v1228, 7
        %v1350 = vmul.f32 %v1181, %v1349
        %v1351 = vmul.f32 %v1184, %v1349
        %v1352 = vmul.f32 %v1187, %v1349
        %v1353 = vmul.f32 %v1190, %v1349
        %v1354 = vmul.f32 %v1193, %v1349
        %v1355 = vmul.f32 %v1196, %v1349
        %v1356 = vmul.f32 %v1199, %v1349
        %v1357 = vmul.f32 %v1202, %v1349
        %v1358 = vadd.f32 %v1341, %v1350
        %v1359 = vadd.f32 %v1342, %v1351
        %v1360 = vadd.f32 %v1343, %v1352
        %v1361 = vadd.f32 %v1344, %v1353
        %v1362 = vadd.f32 %v1345, %v1354
        %v1363 = vadd.f32 %v1346, %v1355
        %v1364 = vadd.f32 %v1347, %v1356
        %v1365 = vadd.f32 %v1348, %v1357
        %v1366 = vperm.slane %v1229, 0
        %v1367 = vmul.f32 %v1205, %v1366
        %v1368 = vmul.f32 %v1208, %v1366
        %v1369 = vmul.f32 %v1211, %v1366
        %v1370 = vmul.f32 %v1214, %v1366
        %v1371 = vmul.f32 %v1217, %v1366
        %v1372 = vmul.f32 %v1220, %v1366
        %v1373 = vmul.f32 %v1223, %v1366
        %v1374 = vmul.f32 %v1226, %v1366
        %v1375 = vadd.f32 %v1358, %v1367
        %v1376 = vadd.f32 %v1359, %v1368
        %v1377 = vadd.f32 %v1360, %v1369
        %v1378 = vadd.f32 %v1361, %v1370
        %v1379 = vadd.f32 %v1362, %v1371
        %v1380 = vadd.f32 %v1363, %v1372
        %v1381 = vadd.f32 %v1364, %v1373
        %v1382 = vadd.f32 %v1365, %v1374
        %v1383 = vld [vmem:[%s4] sm:$0x1]
        %v1385 = vperm.slane %v1383, 0
        %v1387 = vadd.f32 %v1375, %v1385
        %v1388 = vadd.f32 %v1376, %v1385
        %v1389 = vadd.f32 %v1377, %v1385
        %v1390 = vadd.f32 %v1378, %v1385
        %v1391 = vadd.f32 %v1379, %v1385
        %v1392 = vadd.f32 %v1380, %v1385
        %v1393 = vadd.f32 %v1381, %v1385
        %v1394 = vadd.f32 %v1382, %v1385
        %v1395 = vand.u32 2147483647, %v1387
        %v1396 = vand.u32 2147483647, %v1388
        %v1397 = vand.u32 2147483647, %v1389
        %v1398 = vand.u32 2147483647, %v1390
        %v1399 = vand.u32 2147483647, %v1391
        %v1400 = vand.u32 2147483647, %v1392
        %v1401 = vand.u32 2147483647, %v1393
        %v1402 = vand.u32 2147483647, %v1394
        %v1403 = vsub.f32 0.0, %v1395
        %v1404 = vsub.f32 0.0, %v1396
        %v1405 = vsub.f32 0.0, %v1397
        %v1406 = vsub.f32 0.0, %v1398
        %v1407 = vsub.f32 0.0, %v1399
        %v1408 = vsub.f32 0.0, %v1400
        %v1409 = vsub.f32 0.0, %v1401
        %v1410 = vsub.f32 0.0, %v1402
        %v1411 = vmul.f32 %v1403, 1.442695
        %v1412 = vpow.pop %v1411
        %v1413 = vmul.f32 %v1404, 1.442695
        %v1414 = vpow.pop %v1413
        %v1415 = vmul.f32 %v1405, 1.442695
        %v1416 = vpow.pop %v1415
        %v1417 = vmul.f32 %v1406, 1.442695
        %v1418 = vpow.pop %v1417
        %v1419 = vmul.f32 %v1407, 1.442695
        %v1420 = vpow.pop %v1419
        %v1421 = vmul.f32 %v1408, 1.442695
        %v1422 = vpow.pop %v1421
        %v1423 = vmul.f32 %v1409, 1.442695
        %v1424 = vpow.pop %v1423
        %v1425 = vmul.f32 %v1410, 1.442695
        %v1426 = vpow.pop %v1425
        %vm1427 = vcmp.ge.f32.partialorder %v1387, 0.0
        %vm1428 = vcmp.ge.f32.partialorder %v1388, 0.0
        %vm1429 = vcmp.ge.f32.partialorder %v1389, 0.0
        %vm1430 = vcmp.ge.f32.partialorder %v1390, 0.0
        %vm1431 = vcmp.ge.f32.partialorder %v1391, 0.0
        %vm1432 = vcmp.ge.f32.partialorder %v1392, 0.0
        %vm1433 = vcmp.ge.f32.partialorder %v1393, 0.0
        %vm1434 = vcmp.ge.f32.partialorder %v1394, 0.0
        %v1435 = vadd.f32 %v1412, 1.0
        %v1436 = vadd.f32 %v1414, 1.0
        %v1437 = vadd.f32 %v1416, 1.0
        %v1438 = vadd.f32 %v1418, 1.0
        %v1439 = vadd.f32 %v1420, 1.0
        %v1440 = vadd.f32 %v1422, 1.0
        %v1441 = vadd.f32 %v1424, 1.0
        %v1442 = vadd.f32 %v1426, 1.0
        %v1443 = vrcp.pop %v1435
        %v1444 = vmul.f32 %v1435, %v1443
        %v1445 = vsub.f32 1.0, %v1444
        %v1446 = vmul.f32 %v1443, %v1445
        %v1447 = vadd.f32 %v1443, %v1446
        %vm1448 = vweird.f32 %v1435
        %vm1449 = vweird.f32 %v1443
        %vm1450 = vmor %vm1448, %vm1449
        %v1451 = vsel %vm1450, %v1443, %v1447
        %v1452 = vand.u32 2147483647, %v1435
        %vm1453 = vcmp.eq.f32.partialorder %v1452, 8.507059e+37
        %v1454 = vand.u32 %v1435, 2147483648
        %v1455 = vor.u32 1.1754944e-38, %v1454
        %v1456 = vsel %vm1453, %v1455, %v1451
        %v1457 = vmul.f32 1.0, %v1456
        %v1458 = vrcp.pop %v1436
        %v1459 = vmul.f32 %v1436, %v1458
        %v1460 = vsub.f32 1.0, %v1459
        %v1461 = vmul.f32 %v1458, %v1460
        %v1462 = vadd.f32 %v1458, %v1461
        %vm1463 = vweird.f32 %v1436
        %vm1464 = vweird.f32 %v1458
        %vm1465 = vmor %vm1463, %vm1464
        %v1466 = vsel %vm1465, %v1458, %v1462
        %v1467 = vand.u32 2147483647, %v1436
        %vm1468 = vcmp.eq.f32.partialorder %v1467, 8.507059e+37
        %v1469 = vand.u32 %v1436, 2147483648
        %v1470 = vor.u32 1.1754944e-38, %v1469
        %v1471 = vsel %vm1468, %v1470, %v1466
        %v1472 = vmul.f32 1.0, %v1471
        %v1473 = vrcp.pop %v1437
        %v1474 = vmul.f32 %v1437, %v1473
        %v1475 = vsub.f32 1.0, %v1474
        %v1476 = vmul.f32 %v1473, %v1475
        %v1477 = vadd.f32 %v1473, %v1476
        %vm1478 = vweird.f32 %v1437
        %vm1479 = vweird.f32 %v1473
        %vm1480 = vmor %vm1478, %vm1479
        %v1481 = vsel %vm1480, %v1473, %v1477
        %v1482 = vand.u32 2147483647, %v1437
        %vm1483 = vcmp.eq.f32.partialorder %v1482, 8.507059e+37
        %v1484 = vand.u32 %v1437, 2147483648
        %v1485 = vor.u32 1.1754944e-38, %v1484
        %v1486 = vsel %vm1483, %v1485, %v1481
        %v1487 = vmul.f32 1.0, %v1486
        %v1488 = vrcp.pop %v1438
        %v1489 = vmul.f32 %v1438, %v1488
        %v1490 = vsub.f32 1.0, %v1489
        %v1491 = vmul.f32 %v1488, %v1490
        %v1492 = vadd.f32 %v1488, %v1491
        %vm1493 = vweird.f32 %v1438
        %vm1494 = vweird.f32 %v1488
        %vm1495 = vmor %vm1493, %vm1494
        %v1496 = vsel %vm1495, %v1488, %v1492
        %v1497 = vand.u32 2147483647, %v1438
        %vm1498 = vcmp.eq.f32.partialorder %v1497, 8.507059e+37
        %v1499 = vand.u32 %v1438, 2147483648
        %v1500 = vor.u32 1.1754944e-38, %v1499
        %v1501 = vsel %vm1498, %v1500, %v1496
        %v1502 = vmul.f32 1.0, %v1501
        %v1503 = vrcp.pop %v1439
        %v1504 = vmul.f32 %v1439, %v1503
        %v1505 = vsub.f32 1.0, %v1504
        %v1506 = vmul.f32 %v1503, %v1505
        %v1507 = vadd.f32 %v1503, %v1506
        %vm1508 = vweird.f32 %v1439
        %vm1509 = vweird.f32 %v1503
        %vm1510 = vmor %vm1508, %vm1509
        %v1511 = vsel %vm1510, %v1503, %v1507
        %v1512 = vand.u32 2147483647, %v1439
        %vm1513 = vcmp.eq.f32.partialorder %v1512, 8.507059e+37
        %v1514 = vand.u32 %v1439, 2147483648
        %v1515 = vor.u32 1.1754944e-38, %v1514
        %v1516 = vsel %vm1513, %v1515, %v1511
        %v1517 = vmul.f32 1.0, %v1516
        %v1518 = vrcp.pop %v1440
        %v1519 = vmul.f32 %v1440, %v1518
        %v1520 = vsub.f32 1.0, %v1519
        %v1521 = vmul.f32 %v1518, %v1520
        %v1522 = vadd.f32 %v1518, %v1521
        %vm1523 = vweird.f32 %v1440
        %vm1524 = vweird.f32 %v1518
        %vm1525 = vmor %vm1523, %vm1524
        %v1526 = vsel %vm1525, %v1518, %v1522
        %v1527 = vand.u32 2147483647, %v1440
        %vm1528 = vcmp.eq.f32.partialorder %v1527, 8.507059e+37
        %v1529 = vand.u32 %v1440, 2147483648
        %v1530 = vor.u32 1.1754944e-38, %v1529
        %v1531 = vsel %vm1528, %v1530, %v1526
        %v1532 = vmul.f32 1.0, %v1531
        %v1533 = vrcp.pop %v1441
        %v1534 = vmul.f32 %v1441, %v1533
        %v1535 = vsub.f32 1.0, %v1534
        %v1536 = vmul.f32 %v1533, %v1535
        %v1537 = vadd.f32 %v1533, %v1536
        %vm1538 = vweird.f32 %v1441
        %vm1539 = vweird.f32 %v1533
        %vm1540 = vmor %vm1538, %vm1539
        %v1541 = vsel %vm1540, %v1533, %v1537
        %v1542 = vand.u32 2147483647, %v1441
        %vm1543 = vcmp.eq.f32.partialorder %v1542, 8.507059e+37
        %v1544 = vand.u32 %v1441, 2147483648
        %v1545 = vor.u32 1.1754944e-38, %v1544
        %v1546 = vsel %vm1543, %v1545, %v1541
        %v1547 = vmul.f32 1.0, %v1546
        %v1548 = vrcp.pop %v1442
        %v1549 = vmul.f32 %v1442, %v1548
        %v1550 = vsub.f32 1.0, %v1549
        %v1551 = vmul.f32 %v1548, %v1550
        %v1552 = vadd.f32 %v1548, %v1551
        %vm1553 = vweird.f32 %v1442
        %vm1554 = vweird.f32 %v1548
        %vm1555 = vmor %vm1553, %vm1554
        %v1556 = vsel %vm1555, %v1548, %v1552
        %v1557 = vand.u32 2147483647, %v1442
        %vm1558 = vcmp.eq.f32.partialorder %v1557, 8.507059e+37
        %v1559 = vand.u32 %v1442, 2147483648
        %v1560 = vor.u32 1.1754944e-38, %v1559
        %v1561 = vsel %vm1558, %v1560, %v1556
        %v1562 = vmul.f32 1.0, %v1561
        %v1563 = vmul.f32 %v1412, %v1456
        %v1564 = vmul.f32 %v1414, %v1471
        %v1565 = vmul.f32 %v1416, %v1486
        %v1566 = vmul.f32 %v1418, %v1501
        %v1567 = vmul.f32 %v1420, %v1516
        %v1568 = vmul.f32 %v1422, %v1531
        %v1569 = vmul.f32 %v1424, %v1546
        %v1570 = vmul.f32 %v1426, %v1561
        %v1571 = vsel %vm1427, %v1457, %v1563
        %v1572 = vsel %vm1428, %v1472, %v1564
        %v1573 = vsel %vm1429, %v1487, %v1565
        %v1574 = vsel %vm1430, %v1502, %v1566
        %v1575 = vsel %vm1431, %v1517, %v1567
        %v1576 = vsel %vm1432, %v1532, %v1568
        %v1577 = vsel %vm1433, %v1547, %v1569
        %v1578 = vsel %vm1434, %v1562, %v1570
        %v1579 = vmul.f32 %v1387, %v1571
        %v1580 = vmul.f32 %v1388, %v1572
        %v1581 = vmul.f32 %v1389, %v1573
        %v1582 = vmul.f32 %v1390, %v1574
        %v1583 = vmul.f32 %v1391, %v1575
        %v1584 = vmul.f32 %v1392, %v1576
        %v1585 = vmul.f32 %v1393, %v1577
        %v1586 = vmul.f32 %v1394, %v1578
        %v1587 = vld [vmem:[%s5] sm:$0xff]
        %v1588 = vld [vmem:[%s5 + $0x8] sm:$0xff]
        %v1589 = vld [vmem:[%s5 + $0x10] sm:$0xff]
        %v1590 = vld [vmem:[%s5 + $0x18] sm:$0xff]
        %v1591 = vld [vmem:[%s5 + $0x20] sm:$0xff]
        %v1592 = vld [vmem:[%s5 + $0x28] sm:$0xff]
        %v1593 = vld [vmem:[%s5 + $0x30] sm:$0xff]
        %v1594 = vld [vmem:[%s5 + $0x38] sm:$0xff]
        %v1595 = vld [vmem:[%s5 + $0x40] sm:$0xff]
        %v1596 = vld [vmem:[%s5 + $0x48] sm:$0xff]
        %v1597 = vld [vmem:[%s5 + $0x50] sm:$0xff]
        %v1598 = vld [vmem:[%s5 + $0x58] sm:$0xff]
        %v1599 = vld [vmem:[%s5 + $0x60] sm:$0xff]
        %v1600 = vld [vmem:[%s5 + $0x68] sm:$0xff]
        %v1601 = vld [vmem:[%s5 + $0x70] sm:$0xff]
        %v1602 = vld [vmem:[%s5 + $0x78] sm:$0xff]
        %v1603 = vld [vmem:[%s5 + $0x80] sm:$0xff]
        %v1604 = vld [vmem:[%s5 + $0x88] sm:$0xff]
        %v1606 = vsel %vm778, %v1587, 0
        %v1609 = vsel %vm778, %v1588, 0
        %v1612 = vsel %vm778, %v1589, 0
        %v1615 = vsel %vm778, %v1590, 0
        %v1618 = vsel %vm778, %v1591, 0
        %v1621 = vsel %vm778, %v1592, 0
        %v1624 = vsel %vm778, %v1593, 0
        %v1627 = vsel %vm778, %v1594, 0
        %v1630 = vsel %vm778, %v1595, 0
        %v1633 = vsel %vm778, %v1596, 0
        %v1636 = vsel %vm778, %v1597, 0
        %v1639 = vsel %vm778, %v1598, 0
        %v1642 = vsel %vm778, %v1599, 0
        %v1645 = vsel %vm778, %v1600, 0
        %v1648 = vsel %vm778, %v1601, 0
        %v1651 = vsel %vm778, %v1602, 0
        %v1654 = vsel %vm778, %v1603, 0
        %v1657 = vsel %vm778, %v1604, 0
        %1659 = vmatpush.msra.mxu0 0.0
        %1660 = vmatpush.msra.mxu0 0.0
        %1661 = vmatpush.msra.mxu0 0.0
        %1662 = vmatpush.msra.mxu0 0.0
        %1663 = vmatpush.msra.mxu0 0.0
        %1664 = vmatpush.msra.mxu0 0.0
        %1665 = vmatpush.msra.mxu0 0.0
        %1666 = vmatpush.msra.mxu0 0.0
        %1667 = vmatpush.msra.mxu0 %v1586
        %1668 = vmatpush.msra.mxu0 %v1585
        %1669 = vmatpush.msra.mxu0 %v1584
        %1670 = vmatpush.msra.mxu0 %v1583
        %1671 = vmatpush.msra.mxu0 %v1582
        %1672 = vmatpush.msra.mxu0 %v1581
        %1673 = vmatpush.msra.mxu0 %v1580
        %1674 = vmatpush.msra.mxu0 %v1579
        %1675 = vmatmul.f32.gmra.mxu0 %v1606
        %v1676 = vpop.f32.mrf.mxu0
        %v1677 = vadd.f32 0.0, %v1676
        %1678 = vmatmul.f32.gmra.mxu0 %v1609
        %v1679 = vpop.f32.mrf.mxu0
        %v1680 = vadd.f32 0.0, %v1679
        %1681 = vmatmul.f32.gmra.mxu0 %v1612
        %v1682 = vpop.f32.mrf.mxu0
        %v1683 = vadd.f32 0.0, %v1682
        %1684 = vmatmul.f32.gmra.mxu0 %v1615
        %v1685 = vpop.f32.mrf.mxu0
        %v1686 = vadd.f32 0.0, %v1685
        %1687 = vmatmul.f32.gmra.mxu0 %v1618
        %v1688 = vpop.f32.mrf.mxu0
        %v1689 = vadd.f32 0.0, %v1688
        %1690 = vmatmul.f32.gmra.mxu0 %v1621
        %v1691 = vpop.f32.mrf.mxu0
        %v1692 = vadd.f32 0.0, %v1691
        %1693 = vmatmul.f32.gmra.mxu0 %v1624
        %v1694 = vpop.f32.mrf.mxu0
        %v1695 = vadd.f32 0.0, %v1694
        %1696 = vmatmul.f32.gmra.mxu0 %v1627
        %v1697 = vpop.f32.mrf.mxu0
        %v1698 = vadd.f32 0.0, %v1697
        %1699 = vmatmul.f32.gmra.mxu0 %v1630
        %v1700 = vpop.f32.mrf.mxu0
        %v1701 = vadd.f32 0.0, %v1700
        %1702 = vmatmul.f32.gmra.mxu0 %v1633
        %v1703 = vpop.f32.mrf.mxu0
        %v1704 = vadd.f32 0.0, %v1703
        %1705 = vmatmul.f32.gmra.mxu0 %v1636
        %v1706 = vpop.f32.mrf.mxu0
        %v1707 = vadd.f32 0.0, %v1706
        %1708 = vmatmul.f32.gmra.mxu0 %v1639
        %v1709 = vpop.f32.mrf.mxu0
        %v1710 = vadd.f32 0.0, %v1709
        %1711 = vmatmul.f32.gmra.mxu0 %v1642
        %v1712 = vpop.f32.mrf.mxu0
        %v1713 = vadd.f32 0.0, %v1712
        %1714 = vmatmul.f32.gmra.mxu0 %v1645
        %v1715 = vpop.f32.mrf.mxu0
        %v1716 = vadd.f32 0.0, %v1715
        %1717 = vmatmul.f32.gmra.mxu0 %v1648
        %v1718 = vpop.f32.mrf.mxu0
        %v1719 = vadd.f32 0.0, %v1718
        %1720 = vmatmul.f32.gmra.mxu0 %v1651
        %v1721 = vpop.f32.mrf.mxu0
        %v1722 = vadd.f32 0.0, %v1721
        %1723 = vmatmul.f32.gmra.mxu0 %v1654
        %v1724 = vpop.f32.mrf.mxu0
        %v1725 = vadd.f32 0.0, %v1724
        %1726 = vmatmul.f32.gmra.mxu0 %v1657
        %v1727 = vpop.f32.mrf.mxu0
        %v1728 = vadd.f32 0.0, %v1727
        %1729 = vdwg.mxu0
        %v1730 = vld [vmem:[%s6] sm:$0xff]
        %v1731 = vld [vmem:[%s6 + $0x8] sm:$0x1]
        %v1732 = vperm.slane %v1730, 0
        %v1733 = vmul.f32 %v1677, %v1732
        %v1734 = vmul.f32 %v1680, %v1732
        %v1735 = vadd.f32 %v1733, 0.0
        %v1736 = vadd.f32 %v1734, 0.0
        %v1737 = vperm.slane %v1730, 1
        %v1738 = vmul.f32 %v1683, %v1737
        %v1739 = vmul.f32 %v1686, %v1737
        %v1740 = vadd.f32 %v1735, %v1738
        %v1741 = vadd.f32 %v1736, %v1739
        %v1742 = vperm.slane %v1730, 2
        %v1743 = vmul.f32 %v1689, %v1742
        %v1744 = vmul.f32 %v1692, %v1742
        %v1745 = vadd.f32 %v1740, %v1743
        %v1746 = vadd.f32 %v1741, %v1744
        %v1747 = vperm.slane %v1730, 3
        %v1748 = vmul.f32 %v1695, %v1747
        %v1749 = vmul.f32 %v1698, %v1747
        %v1750 = vadd.f32 %v1745, %v1748
        %v1751 = vadd.f32 %v1746, %v1749
        %v1752 = vperm.slane %v1730, 4
        %v1753 = vmul.f32 %v1701, %v1752
        %v1754 = vmul.f32 %v1704, %v1752
        %v1755 = vadd.f32 %v1750, %v1753
        %v1756 = vadd.f32 %v1751, %v1754
        %v1757 = vperm.slane %v1730, 5
        %v1758 = vmul.f32 %v1707, %v1757
        %v1759 = vmul.f32 %v1710, %v1757
        %v1760 = vadd.f32 %v1755, %v1758
        %v1761 = vadd.f32 %v1756, %v1759
        %v1762 = vperm.slane %v1730, 6
        %v1763 = vmul.f32 %v1713, %v1762
        %v1764 = vmul.f32 %v1716, %v1762
        %v1765 = vadd.f32 %v1760, %v1763
        %v1766 = vadd.f32 %v1761, %v1764
        %v1767 = vperm.slane %v1730, 7
        %v1768 = vmul.f32 %v1719, %v1767
        %v1769 = vmul.f32 %v1722, %v1767
        %v1770 = vadd.f32 %v1765, %v1768
        %v1771 = vadd.f32 %v1766, %v1769
        %v1772 = vperm.slane %v1731, 0
        %v1773 = vmul.f32 %v1725, %v1772
        %v1774 = vmul.f32 %v1728, %v1772
        %v1775 = vadd.f32 %v1770, %v1773
        %v1776 = vadd.f32 %v1771, %v1774
        %v1777 = vld [vmem:[%s7] sm:$0x1]
        %v1779 = vperm.slane %v1777, 0
        %v1781 = vadd.f32 %v1775, %v1779
        %v1782 = vadd.f32 %v1776, %v1779
        %1783 = vxpose.xlu0.b32.start [1/16] %v1781, 128
        %1784 = vxpose.xlu0.b32.cont [2/16] %v1782, 128
        %1785 = vxpose.xlu0.b32.cont [3/16] 0.0, 128
        %1786 = vxpose.xlu0.b32.cont [4/16] 0.0, 128
        %1787 = vxpose.xlu0.b32.cont [5/16] 0.0, 128
        %1788 = vxpose.xlu0.b32.cont [6/16] 0.0, 128
        %1789 = vxpose.xlu0.b32.cont [7/16] 0.0, 128
        %1790 = vxpose.xlu0.b32.cont [8/16] 0.0, 128
        %1791 = vxpose.xlu0.b32.cont [9/16] 0.0, 128
        %1792 = vxpose.xlu0.b32.cont [10/16] 0.0, 128
        %1793 = vxpose.xlu0.b32.cont [11/16] 0.0, 128
        %1794 = vxpose.xlu0.b32.cont [12/16] 0.0, 128
        %1795 = vxpose.xlu0.b32.cont [13/16] 0.0, 128
        %1796 = vxpose.xlu0.b32.cont [14/16] 0.0, 128
        %1797 = vxpose.xlu0.b32.cont [15/16] 0.0, 128
        %1798 = vxpose.xlu0.b32.end [16/16] 0.0, 128
        %v1799 = vpop.trf.xlu0
        %v1800 = vpop.trf.xlu0
        %v1801 = vpop.trf.xlu0
        %v1802 = vpop.trf.xlu0
        %v1803 = vpop.trf.xlu0
        %v1804 = vpop.trf.xlu0
        %v1805 = vpop.trf.xlu0
        %v1806 = vpop.trf.xlu0
        %v1807 = vpop.trf.xlu0
        %v1808 = vpop.trf.xlu0
        %v1809 = vpop.trf.xlu0
        %v1810 = vpop.trf.xlu0
        %v1811 = vpop.trf.xlu0
        %v1812 = vpop.trf.xlu0
        %v1813 = vpop.trf.xlu0
        %v1814 = vpop.trf.xlu0
        %v1815 = vld [vmem:[%s8] sm:$0xff]
        %v1816 = vld [vmem:[%s8 + $0x8] sm:$0xff]
        %v1817 = vld [vmem:[%s9] sm:$0x1]
        %v1819 = vperm.slane %v1817, 0
        %vm1821 = vcmask 130048
        %v1823 = vsel %vm1821, %v1799, 0
        %v1826 = vsel %vm1821, %v1800, 0
        %v1829 = vsel %vm1821, %v1801, 0
        %v1832 = vsel %vm1821, %v1802, 0
        %1834 = vmatpush.msra.mxu0 0.0
        %1835 = vmatpush.msra.mxu0 0.0
        %1836 = vmatpush.msra.mxu0 0.0
        %1837 = vmatpush.msra.mxu0 0.0
        %1838 = vmatpush.msra.mxu0 0.0
        %1839 = vmatpush.msra.mxu0 0.0
        %1840 = vmatpush.msra.mxu0 0.0
        %1841 = vmatpush.msra.mxu0 0.0
        %1842 = vmatpush.msra.mxu0 0.0
        %1843 = vmatpush.msra.mxu0 0.0
        %1844 = vmatpush.msra.mxu0 0.0
        %1845 = vmatpush.msra.mxu0 0.0
        %1846 = vmatpush.msra.mxu0 0.0
        %1847 = vmatpush.msra.mxu0 0.0
        %1848 = vmatpush.msra.mxu0 %v1816
        %1849 = vmatpush.msra.mxu0 %v1815
        %1850 = vmatmul.f32.gmra.mxu0 %v1823
        %v1851 = vpop.f32.mrf.mxu0
        %v1852 = vadd.f32 %v1819, %v1851
        %1853 = vmatmul.f32.gmra.mxu0 %v1826
        %v1854 = vpop.f32.mrf.mxu0
        %v1855 = vadd.f32 %v1819, %v1854
        %1856 = vmatmul.f32.gmra.mxu0 %v1829
        %v1857 = vpop.f32.mrf.mxu0
        %v1858 = vadd.f32 %v1819, %v1857
        %1859 = vmatmul.f32.gmra.mxu0 %v1832
        %v1860 = vpop.f32.mrf.mxu0
        %v1861 = vadd.f32 %v1819, %v1860
        %1862 = vdwg.mxu0
        %v1863 = vand.u32 2147483647, %v1852
        %v1864 = vand.u32 2147483647, %v1855
        %v1865 = vand.u32 2147483647, %v1858
        %v1866 = vand.u32 2147483647, %v1861
        %v1867 = vsub.f32 0.0, %v1863
        %v1868 = vsub.f32 0.0, %v1864
        %v1869 = vsub.f32 0.0, %v1865
        %v1870 = vsub.f32 0.0, %v1866
        %v1871 = vmul.f32 %v1867, 1.442695
        %v1872 = vpow.pop %v1871
        %v1873 = vmul.f32 %v1868, 1.442695
        %v1874 = vpow.pop %v1873
        %v1875 = vmul.f32 %v1869, 1.442695
        %v1876 = vpow.pop %v1875
        %v1877 = vmul.f32 %v1870, 1.442695
        %v1878 = vpow.pop %v1877
        %vm1879 = vcmp.ge.f32.partialorder %v1852, 0.0
        %vm1880 = vcmp.ge.f32.partialorder %v1855, 0.0
        %vm1881 = vcmp.ge.f32.partialorder %v1858, 0.0
        %vm1882 = vcmp.ge.f32.partialorder %v1861, 0.0
        %v1883 = vadd.f32 %v1872, 1.0
        %v1884 = vadd.f32 %v1874, 1.0
        %v1885 = vadd.f32 %v1876, 1.0
        %v1886 = vadd.f32 %v1878, 1.0
        %v1887 = vrcp.pop %v1883
        %v1888 = vmul.f32 %v1883, %v1887
        %v1889 = vsub.f32 1.0, %v1888
        %v1890 = vmul.f32 %v1887, %v1889
        %v1891 = vadd.f32 %v1887, %v1890
        %vm1892 = vweird.f32 %v1883
        %vm1893 = vweird.f32 %v1887
        %vm1894 = vmor %vm1892, %vm1893
        %v1895 = vsel %vm1894, %v1887, %v1891
        %v1896 = vand.u32 2147483647, %v1883
        %vm1897 = vcmp.eq.f32.partialorder %v1896, 8.507059e+37
        %v1898 = vand.u32 %v1883, 2147483648
        %v1899 = vor.u32 1.1754944e-38, %v1898
        %v1900 = vsel %vm1897, %v1899, %v1895
        %v1901 = vmul.f32 1.0, %v1900
        %v1902 = vrcp.pop %v1884
        %v1903 = vmul.f32 %v1884, %v1902
        %v1904 = vsub.f32 1.0, %v1903
        %v1905 = vmul.f32 %v1902, %v1904
        %v1906 = vadd.f32 %v1902, %v1905
        %vm1907 = vweird.f32 %v1884
        %vm1908 = vweird.f32 %v1902
        %vm1909 = vmor %vm1907, %vm1908
        %v1910 = vsel %vm1909, %v1902, %v1906
        %v1911 = vand.u32 2147483647, %v1884
        %vm1912 = vcmp.eq.f32.partialorder %v1911, 8.507059e+37
        %v1913 = vand.u32 %v1884, 2147483648
        %v1914 = vor.u32 1.1754944e-38, %v1913
        %v1915 = vsel %vm1912, %v1914, %v1910
        %v1916 = vmul.f32 1.0, %v1915
        %v1917 = vrcp.pop %v1885
        %v1918 = vmul.f32 %v1885, %v1917
        %v1919 = vsub.f32 1.0, %v1918
        %v1920 = vmul.f32 %v1917, %v1919
        %v1921 = vadd.f32 %v1917, %v1920
        %vm1922 = vweird.f32 %v1885
        %vm1923 = vweird.f32 %v1917
        %vm1924 = vmor %vm1922, %vm1923
        %v1925 = vsel %vm1924, %v1917, %v1921
        %v1926 = vand.u32 2147483647, %v1885
        %vm1927 = vcmp.eq.f32.partialorder %v1926, 8.507059e+37
        %v1928 = vand.u32 %v1885, 2147483648
        %v1929 = vor.u32 1.1754944e-38, %v1928
        %v1930 = vsel %vm1927, %v1929, %v1925
        %v1931 = vmul.f32 1.0, %v1930
        %v1932 = vrcp.pop %v1886
        %v1933 = vmul.f32 %v1886, %v1932
        %v1934 = vsub.f32 1.0, %v1933
        %v1935 = vmul.f32 %v1932, %v1934
        %v1936 = vadd.f32 %v1932, %v1935
        %vm1937 = vweird.f32 %v1886
        %vm1938 = vweird.f32 %v1932
        %vm1939 = vmor %vm1937, %vm1938
        %v1940 = vsel %vm1939, %v1932, %v1936
        %v1941 = vand.u32 2147483647, %v1886
        %vm1942 = vcmp.eq.f32.partialorder %v1941, 8.507059e+37
        %v1943 = vand.u32 %v1886, 2147483648
        %v1944 = vor.u32 1.1754944e-38, %v1943
        %v1945 = vsel %vm1942, %v1944, %v1940
        %v1946 = vmul.f32 1.0, %v1945
        %v1947 = vmul.f32 %v1872, %v1900
        %v1948 = vmul.f32 %v1874, %v1915
        %v1949 = vmul.f32 %v1876, %v1930
        %v1950 = vmul.f32 %v1878, %v1945
        %v1951 = vsel %vm1879, %v1901, %v1947
        %v1952 = vsel %vm1880, %v1916, %v1948
        %v1953 = vsel %vm1881, %v1931, %v1949
        %v1954 = vsel %vm1882, %v1946, %v1950
        %v1955 = vmul.f32 %v1852, %v1951
        %v1956 = vmul.f32 %v1855, %v1952
        %v1957 = vmul.f32 %v1858, %v1953
        %v1958 = vmul.f32 %v1861, %v1954
        %v1959 = vld [vmem:[%s10] sm:$0xff]
        %v1960 = vld [vmem:[%s10 + $0x8] sm:$0xff]
        %v1961 = vld [vmem:[%s10 + $0x10] sm:$0xff]
        %v1962 = vld [vmem:[%s10 + $0x18] sm:$0xff]
        %v1964 = vsel %vm640, %v1955, 0
        %v1967 = vsel %vm640, %v1956, 0
        %v1970 = vsel %vm640, %v1957, 0
        %v1973 = vsel %vm640, %v1958, 0
        %v1976 = vsel %vm640, %v1579, 0
        %v1979 = vsel %vm640, %v1580, 0
        %v1982 = vsel %vm640, %v1581, 0
        %v1985 = vsel %vm640, %v1582, 0
        %v1988 = vsel %vm640, %v1583, 0
        %v1991 = vsel %vm640, %v1584, 0
        %v1994 = vsel %vm640, %v1585, 0
        %v1997 = vsel %vm640, %v1586, 0
        %1999 = vmatpush.msra.mxu0 0.0
        %2000 = vmatpush.msra.mxu0 0.0
        %2001 = vmatpush.msra.mxu0 0.0
        %2002 = vmatpush.msra.mxu0 0.0
        %2003 = vmatpush.msra.mxu0 0.0
        %2004 = vmatpush.msra.mxu0 0.0
        %2005 = vmatpush.msra.mxu0 0.0
        %2006 = vmatpush.msra.mxu0 0.0
        %2007 = vmatpush.msra.mxu0 0.0
        %2008 = vmatpush.msra.mxu0 0.0
        %2009 = vmatpush.msra.mxu0 0.0
        %2010 = vmatpush.msra.mxu0 0.0
        %2011 = vmatpush.msra.mxu0 %v1962
        %2012 = vmatpush.msra.mxu0 %v1961
        %2013 = vmatpush.msra.mxu0 %v1960
        %2014 = vmatpush.msra.mxu0 %v1959
        %2015 = vmatmul.f32.gmra.mxu0 %v1964
        %v2016 = vpop.f32.mrf.mxu0
        %v2017 = vadd.f32 0.0, %v2016
        %2018 = vmatmul.f32.gmra.mxu0 %v1967
        %v2019 = vpop.f32.mrf.mxu0
        %v2020 = vadd.f32 0.0, %v2019
        %2021 = vmatmul.f32.gmra.mxu0 %v1970
        %v2022 = vpop.f32.mrf.mxu0
        %v2023 = vadd.f32 0.0, %v2022
        %2024 = vmatmul.f32.gmra.mxu0 %v1973
        %v2025 = vpop.f32.mrf.mxu0
        %v2026 = vadd.f32 0.0, %v2025
        %2027 = vmatmul.f32.gmra.mxu0 %v1976
        %v2028 = vpop.f32.mrf.mxu0
        %v2029 = vadd.f32 0.0, %v2028
        %2030 = vmatmul.f32.gmra.mxu0 %v1979
        %v2031 = vpop.f32.mrf.mxu0
        %v2032 = vadd.f32 0.0, %v2031
        %2033 = vmatmul.f32.gmra.mxu0 %v1982
        %v2034 = vpop.f32.mrf.mxu0
        %v2035 = vadd.f32 0.0, %v2034
        %2036 = vmatmul.f32.gmra.mxu0 %v1985
        %v2037 = vpop.f32.mrf.mxu0
        %v2038 = vadd.f32 0.0, %v2037
        %2039 = vmatmul.f32.gmra.mxu0 %v1988
        %v2040 = vpop.f32.mrf.mxu0
        %v2041 = vadd.f32 0.0, %v2040
        %2042 = vmatmul.f32.gmra.mxu0 %v1991
        %v2043 = vpop.f32.mrf.mxu0
        %v2044 = vadd.f32 0.0, %v2043
        %2045 = vmatmul.f32.gmra.mxu0 %v1994
        %v2046 = vpop.f32.mrf.mxu0
        %v2047 = vadd.f32 0.0, %v2046
        %2048 = vmatmul.f32.gmra.mxu0 %v1997
        %v2049 = vpop.f32.mrf.mxu0
        %v2050 = vadd.f32 0.0, %v2049
        %2051 = vdwg.mxu0
        %v2052 = vld [vmem:[%s11] sm:$0x1]
        %v2054 = vperm.slane %v2052, 0
        %v2056 = vadd.f32 %v2017, %v2054
        %v2057 = vadd.f32 %v2020, %v2054
        %v2058 = vadd.f32 %v2023, %v2054
        %v2059 = vadd.f32 %v2026, %v2054
        %v2060 = vadd.f32 %v2029, %v2054
        %v2061 = vadd.f32 %v2032, %v2054
        %v2062 = vadd.f32 %v2035, %v2054
        %v2063 = vadd.f32 %v2038, %v2054
        %v2064 = vadd.f32 %v2041, %v2054
        %v2065 = vadd.f32 %v2044, %v2054
        %v2066 = vadd.f32 %v2047, %v2054
        %v2067 = vadd.f32 %v2050, %v2054
        %vm2068 = vcmp.gt.f32.partialorder %v2056, 20.0
        %vm2069 = vcmp.gt.f32.partialorder %v2057, 20.0
        %vm2070 = vcmp.gt.f32.partialorder %v2058, 20.0
        %vm2071 = vcmp.gt.f32.partialorder %v2059, 20.0
        %vm2072 = vcmp.gt.f32.partialorder %v2060, 20.0
        %vm2073 = vcmp.gt.f32.partialorder %v2061, 20.0
        %vm2074 = vcmp.gt.f32.partialorder %v2062, 20.0
        %vm2075 = vcmp.gt.f32.partialorder %v2063, 20.0
        %vm2076 = vcmp.gt.f32.partialorder %v2064, 20.0
        %vm2077 = vcmp.gt.f32.partialorder %v2065, 20.0
        %vm2078 = vcmp.gt.f32.partialorder %v2066, 20.0
        %vm2079 = vcmp.gt.f32.partialorder %v2067, 20.0
        %v2080 = vmin.f32 %v2056, 20.0
        %v2081 = vmin.f32 %v2057, 20.0
        %v2082 = vmin.f32 %v2058, 20.0
        %v2083 = vmin.f32 %v2059, 20.0
        %v2084 = vmin.f32 %v2060, 20.0
        %v2085 = vmin.f32 %v2061, 20.0
        %v2086 = vmin.f32 %v2062, 20.0
        %v2087 = vmin.f32 %v2063, 20.0
        %v2088 = vmin.f32 %v2064, 20.0
        %v2089 = vmin.f32 %v2065, 20.0
        %v2090 = vmin.f32 %v2066, 20.0
        %v2091 = vmin.f32 %v2067, 20.0
        %v2092 = vmul.f32 %v2080, 1.442695
        %v2093 = vpow.pop %v2092
        %v2094 = vmul.f32 %v2081, 1.442695
        %v2095 = vpow.pop %v2094
        %v2096 = vmul.f32 %v2082, 1.442695
        %v2097 = vpow.pop %v2096
        %v2098 = vmul.f32 %v2083, 1.442695
        %v2099 = vpow.pop %v2098
        %v2100 = vmul.f32 %v2084, 1.442695
        %v2101 = vpow.pop %v2100
        %v2102 = vmul.f32 %v2085, 1.442695
        %v2103 = vpow.pop %v2102
        %v2104 = vmul.f32 %v2086, 1.442695
        %v2105 = vpow.pop %v2104
        %v2106 = vmul.f32 %v2087, 1.442695
        %v2107 = vpow.pop %v2106
        %v2108 = vmul.f32 %v2088, 1.442695
        %v2109 = vpow.pop %v2108
        %v2110 = vmul.f32 %v2089, 1.442695
        %v2111 = vpow.pop %v2110
        %v2112 = vmul.f32 %v2090, 1.442695
        %v2113 = vpow.pop %v2112
        %v2114 = vmul.f32 %v2091, 1.442695
        %v2115 = vpow.pop %v2114
        %v2116 = vadd.f32 %v2093, 1.0
        %v2117 = vadd.f32 %v2095, 1.0
        %v2118 = vadd.f32 %v2097, 1.0
        %v2119 = vadd.f32 %v2099, 1.0
        %v2120 = vadd.f32 %v2101, 1.0
        %v2121 = vadd.f32 %v2103, 1.0
        %v2122 = vadd.f32 %v2105, 1.0
        %v2123 = vadd.f32 %v2107, 1.0
        %v2124 = vadd.f32 %v2109, 1.0
        %v2125 = vadd.f32 %v2111, 1.0
        %v2126 = vadd.f32 %v2113, 1.0
        %v2127 = vadd.f32 %v2115, 1.0
        %v2128 = vlog2.pop %v2116
        %v2129 = vmul.f32 %v2128, 0.6931472
        %v2130 = vlog2.pop %v2117
        %v2131 = vmul.f32 %v2130, 0.6931472
        %v2132 = vlog2.pop %v2118
        %v2133 = vmul.f32 %v2132, 0.6931472
        %v2134 = vlog2.pop %v2119
        %v2135 = vmul.f32 %v2134, 0.6931472
        %v2136 = vlog2.pop %v2120
        %v2137 = vmul.f32 %v2136, 0.6931472
        %v2138 = vlog2.pop %v2121
        %v2139 = vmul.f32 %v2138, 0.6931472
        %v2140 = vlog2.pop %v2122
        %v2141 = vmul.f32 %v2140, 0.6931472
        %v2142 = vlog2.pop %v2123
        %v2143 = vmul.f32 %v2142, 0.6931472
        %v2144 = vlog2.pop %v2124
        %v2145 = vmul.f32 %v2144, 0.6931472
        %v2146 = vlog2.pop %v2125
        %v2147 = vmul.f32 %v2146, 0.6931472
        %v2148 = vlog2.pop %v2126
        %v2149 = vmul.f32 %v2148, 0.6931472
        %v2150 = vlog2.pop %v2127
        %v2151 = vmul.f32 %v2150, 0.6931472
        %v2152 = vsel %vm2068, %v2056, %v2129
        %v2153 = vsel %vm2069, %v2057, %v2131
        %v2154 = vsel %vm2070, %v2058, %v2133
        %v2155 = vsel %vm2071, %v2059, %v2135
        %v2156 = vsel %vm2072, %v2060, %v2137
        %v2157 = vsel %vm2073, %v2061, %v2139
        %v2158 = vsel %vm2074, %v2062, %v2141
        %v2159 = vsel %vm2075, %v2063, %v2143
        %v2160 = vsel %vm2076, %v2064, %v2145
        %v2161 = vsel %vm2077, %v2065, %v2147
        %v2162 = vsel %vm2078, %v2066, %v2149
        %v2163 = vsel %vm2079, %v2067, %v2151
        %v2164 = vmul.f32 %v2152, %v1955
        %v2165 = vmul.f32 %v2153, %v1956
        %v2166 = vmul.f32 %v2154, %v1957
        %v2167 = vmul.f32 %v2155, %v1958
        %v2168 = vmul.f32 %v2156, %v1579
        %v2169 = vmul.f32 %v2157, %v1580
        %v2170 = vmul.f32 %v2158, %v1581
        %v2171 = vmul.f32 %v2159, %v1582
        %v2172 = vmul.f32 %v2160, %v1583
        %v2173 = vmul.f32 %v2161, %v1584
        %v2174 = vmul.f32 %v2162, %v1585
        %v2175 = vmul.f32 %v2163, %v1586
        %v2176 = vld [vmem:[%s13] sm:$0xff]
        %v2177 = vld [vmem:[%s13 + $0x8] sm:$0xff]
        %v2178 = vld [vmem:[%s13 + $0x10] sm:$0xff]
        %v2179 = vld [vmem:[%s13 + $0x18] sm:$0xff]
        %v2180 = vld [vmem:[%s13 + $0x20] sm:$0xff]
        %v2181 = vld [vmem:[%s13 + $0x28] sm:$0xff]
        %v2182 = vld [vmem:[%s13 + $0x30] sm:$0xff]
        %v2183 = vld [vmem:[%s13 + $0x38] sm:$0xff]
        %v2184 = vld [vmem:[%s13 + $0x40] sm:$0xff]
        %v2185 = vld [vmem:[%s13 + $0x48] sm:$0xff]
        %v2186 = vld [vmem:[%s13 + $0x50] sm:$0xff]
        %v2187 = vld [vmem:[%s13 + $0x58] sm:$0xff]
        %v2188 = vld [vmem:[%s13 + $0x60] sm:$0xff]
        %v2189 = vld [vmem:[%s13 + $0x68] sm:$0xff]
        %v2190 = vld [vmem:[%s13 + $0x70] sm:$0xff]
        %v2191 = vld [vmem:[%s13 + $0x78] sm:$0xff]
        %v2193 = vsel %vm640, %v2152, 0
        %v2196 = vsel %vm640, %v2153, 0
        %v2199 = vsel %vm640, %v2154, 0
        %v2202 = vsel %vm640, %v2155, 0
        %v2205 = vsel %vm640, %v2156, 0
        %v2208 = vsel %vm640, %v2157, 0
        %v2211 = vsel %vm640, %v2158, 0
        %v2214 = vsel %vm640, %v2159, 0
        %v2217 = vsel %vm640, %v2160, 0
        %v2220 = vsel %vm640, %v2161, 0
        %v2223 = vsel %vm640, %v2162, 0
        %v2226 = vsel %vm640, %v2163, 0
        %2228 = vmatpush.msra.mxu0 0.0
        %2229 = vmatpush.msra.mxu0 0.0
        %2230 = vmatpush.msra.mxu0 0.0
        %2231 = vmatpush.msra.mxu0 0.0
        %2232 = vmatpush.msra.mxu0 0.0
        %2233 = vmatpush.msra.mxu0 0.0
        %2234 = vmatpush.msra.mxu0 0.0
        %2235 = vmatpush.msra.mxu0 0.0
        %2236 = vmatpush.msra.mxu0 0.0
        %2237 = vmatpush.msra.mxu0 0.0
        %2238 = vmatpush.msra.mxu0 0.0
        %2239 = vmatpush.msra.mxu0 0.0
        %2240 = vmatpush.msra.mxu0 %v2188
        %2241 = vmatpush.msra.mxu0 %v2184
        %2242 = vmatpush.msra.mxu0 %v2180
        %2243 = vmatpush.msra.mxu0 %v2176
        %2244 = vmatmul.f32.gmra.mxu0 %v2193
        %v2245 = vpop.f32.mrf.mxu0
        %v2246 = vadd.f32 0.0, %v2245
        %2247 = vmatmul.f32.gmra.mxu0 %v2196
        %v2248 = vpop.f32.mrf.mxu0
        %v2249 = vadd.f32 0.0, %v2248
        %2250 = vmatmul.f32.gmra.mxu0 %v2199
        %v2251 = vpop.f32.mrf.mxu0
        %v2252 = vadd.f32 0.0, %v2251
        %2253 = vmatmul.f32.gmra.mxu0 %v2202
        %v2254 = vpop.f32.mrf.mxu0
        %v2255 = vadd.f32 0.0, %v2254
        %2256 = vmatmul.f32.gmra.mxu0 %v2205
        %v2257 = vpop.f32.mrf.mxu0
        %v2258 = vadd.f32 0.0, %v2257
        %2259 = vmatmul.f32.gmra.mxu0 %v2208
        %v2260 = vpop.f32.mrf.mxu0
        %v2261 = vadd.f32 0.0, %v2260
        %2262 = vmatmul.f32.gmra.mxu0 %v2211
        %v2263 = vpop.f32.mrf.mxu0
        %v2264 = vadd.f32 0.0, %v2263
        %2265 = vmatmul.f32.gmra.mxu0 %v2214
        %v2266 = vpop.f32.mrf.mxu0
        %v2267 = vadd.f32 0.0, %v2266
        %2268 = vmatmul.f32.gmra.mxu0 %v2217
        %v2269 = vpop.f32.mrf.mxu0
        %v2270 = vadd.f32 0.0, %v2269
        %2271 = vmatmul.f32.gmra.mxu0 %v2220
        %v2272 = vpop.f32.mrf.mxu0
        %v2273 = vadd.f32 0.0, %v2272
        %2274 = vmatmul.f32.gmra.mxu0 %v2223
        %v2275 = vpop.f32.mrf.mxu0
        %v2276 = vadd.f32 0.0, %v2275
        %2277 = vmatmul.f32.gmra.mxu0 %v2226
        %v2278 = vpop.f32.mrf.mxu0
        %v2279 = vadd.f32 0.0, %v2278
        %2280 = vdwg.mxu0
        %2281 = vmatpush.msra.mxu0 0.0
        %2282 = vmatpush.msra.mxu0 0.0
        %2283 = vmatpush.msra.mxu0 0.0
        %2284 = vmatpush.msra.mxu0 0.0
        %2285 = vmatpush.msra.mxu0 0.0
        %2286 = vmatpush.msra.mxu0 0.0
        %2287 = vmatpush.msra.mxu0 0.0
        %2288 = vmatpush.msra.mxu0 0.0
        %2289 = vmatpush.msra.mxu0 0.0
        %2290 = vmatpush.msra.mxu0 0.0
        %2291 = vmatpush.msra.mxu0 0.0
        %2292 = vmatpush.msra.mxu0 0.0
        %2293 = vmatpush.msra.mxu0 %v2189
        %2294 = vmatpush.msra.mxu0 %v2185
        %2295 = vmatpush.msra.mxu0 %v2181
        %2296 = vmatpush.msra.mxu0 %v2177
        %2297 = vmatmul.f32.gmra.mxu0 %v2193
        %v2298 = vpop.f32.mrf.mxu0
        %v2299 = vadd.f32 0.0, %v2298
        %2300 = vmatmul.f32.gmra.mxu0 %v2196
        %v2301 = vpop.f32.mrf.mxu0
        %v2302 = vadd.f32 0.0, %v2301
        %2303 = vmatmul.f32.gmra.mxu0 %v2199
        %v2304 = vpop.f32.mrf.mxu0
        %v2305 = vadd.f32 0.0, %v2304
        %2306 = vmatmul.f32.gmra.mxu0 %v2202
        %v2307 = vpop.f32.mrf.mxu0
        %v2308 = vadd.f32 0.0, %v2307
        %2309 = vmatmul.f32.gmra.mxu0 %v2205
        %v2310 = vpop.f32.mrf.mxu0
        %v2311 = vadd.f32 0.0, %v2310
        %2312 = vmatmul.f32.gmra.mxu0 %v2208
        %v2313 = vpop.f32.mrf.mxu0
        %v2314 = vadd.f32 0.0, %v2313
        %2315 = vmatmul.f32.gmra.mxu0 %v2211
        %v2316 = vpop.f32.mrf.mxu0
        %v2317 = vadd.f32 0.0, %v2316
        %2318 = vmatmul.f32.gmra.mxu0 %v2214
        %v2319 = vpop.f32.mrf.mxu0
        %v2320 = vadd.f32 0.0, %v2319
        %2321 = vmatmul.f32.gmra.mxu0 %v2217
        %v2322 = vpop.f32.mrf.mxu0
        %v2323 = vadd.f32 0.0, %v2322
        %2324 = vmatmul.f32.gmra.mxu0 %v2220
        %v2325 = vpop.f32.mrf.mxu0
        %v2326 = vadd.f32 0.0, %v2325
        %2327 = vmatmul.f32.gmra.mxu0 %v2223
        %v2328 = vpop.f32.mrf.mxu0
        %v2329 = vadd.f32 0.0, %v2328
        %2330 = vmatmul.f32.gmra.mxu0 %v2226
        %v2331 = vpop.f32.mrf.mxu0
        %v2332 = vadd.f32 0.0, %v2331
        %2333 = vdwg.mxu0
        %2334 = vmatpush.msra.mxu0 0.0
        %2335 = vmatpush.msra.mxu0 0.0
        %2336 = vmatpush.msra.mxu0 0.0
        %2337 = vmatpush.msra.mxu0 0.0
        %2338 = vmatpush.msra.mxu0 0.0
        %2339 = vmatpush.msra.mxu0 0.0
        %2340 = vmatpush.msra.mxu0 0.0
        %2341 = vmatpush.msra.mxu0 0.0
        %2342 = vmatpush.msra.mxu0 0.0
        %2343 = vmatpush.msra.mxu0 0.0
        %2344 = vmatpush.msra.mxu0 0.0
        %2345 = vmatpush.msra.mxu0 0.0
        %2346 = vmatpush.msra.mxu0 %v2190
        %2347 = vmatpush.msra.mxu0 %v2186
        %2348 = vmatpush.msra.mxu0 %v2182
        %2349 = vmatpush.msra.mxu0 %v2178
        %2350 = vmatmul.f32.gmra.mxu0 %v2193
        %v2351 = vpop.f32.mrf.mxu0
        %v2352 = vadd.f32 0.0, %v2351
        %2353 = vmatmul.f32.gmra.mxu0 %v2196
        %v2354 = vpop.f32.mrf.mxu0
        %v2355 = vadd.f32 0.0, %v2354
        %2356 = vmatmul.f32.gmra.mxu0 %v2199
        %v2357 = vpop.f32.mrf.mxu0
        %v2358 = vadd.f32 0.0, %v2357
        %2359 = vmatmul.f32.gmra.mxu0 %v2202
        %v2360 = vpop.f32.mrf.mxu0
        %v2361 = vadd.f32 0.0, %v2360
        %2362 = vmatmul.f32.gmra.mxu0 %v2205
        %v2363 = vpop.f32.mrf.mxu0
        %v2364 = vadd.f32 0.0, %v2363
        %2365 = vmatmul.f32.gmra.mxu0 %v2208
        %v2366 = vpop.f32.mrf.mxu0
        %v2367 = vadd.f32 0.0, %v2366
        %2368 = vmatmul.f32.gmra.mxu0 %v2211
        %v2369 = vpop.f32.mrf.mxu0
        %v2370 = vadd.f32 0.0, %v2369
        %2371 = vmatmul.f32.gmra.mxu0 %v2214
        %v2372 = vpop.f32.mrf.mxu0
        %v2373 = vadd.f32 0.0, %v2372
        %2374 = vmatmul.f32.gmra.mxu0 %v2217
        %v2375 = vpop.f32.mrf.mxu0
        %v2376 = vadd.f32 0.0, %v2375
        %2377 = vmatmul.f32.gmra.mxu0 %v2220
        %v2378 = vpop.f32.mrf.mxu0
        %v2379 = vadd.f32 0.0, %v2378
        %2380 = vmatmul.f32.gmra.mxu0 %v2223
        %v2381 = vpop.f32.mrf.mxu0
        %v2382 = vadd.f32 0.0, %v2381
        %2383 = vmatmul.f32.gmra.mxu0 %v2226
        %v2384 = vpop.f32.mrf.mxu0
        %v2385 = vadd.f32 0.0, %v2384
        %2386 = vdwg.mxu0
        %2387 = vmatpush.msra.mxu0 0.0
        %2388 = vmatpush.msra.mxu0 0.0
        %2389 = vmatpush.msra.mxu0 0.0
        %2390 = vmatpush.msra.mxu0 0.0
        %2391 = vmatpush.msra.mxu0 0.0
        %2392 = vmatpush.msra.mxu0 0.0
        %2393 = vmatpush.msra.mxu0 0.0
        %2394 = vmatpush.msra.mxu0 0.0
        %2395 = vmatpush.msra.mxu0 0.0
        %2396 = vmatpush.msra.mxu0 0.0
        %2397 = vmatpush.msra.mxu0 0.0
        %2398 = vmatpush.msra.mxu0 0.0
        %2399 = vmatpush.msra.mxu0 %v2191
        %2400 = vmatpush.msra.mxu0 %v2187
        %2401 = vmatpush.msra.mxu0 %v2183
        %2402 = vmatpush.msra.mxu0 %v2179
        %2403 = vmatmul.f32.gmra.mxu0 %v2193
        %v2404 = vpop.f32.mrf.mxu0
        %v2405 = vadd.f32 0.0, %v2404
        %2406 = vmatmul.f32.gmra.mxu0 %v2196
        %v2407 = vpop.f32.mrf.mxu0
        %v2408 = vadd.f32 0.0, %v2407
        %2409 = vmatmul.f32.gmra.mxu0 %v2199
        %v2410 = vpop.f32.mrf.mxu0
        %v2411 = vadd.f32 0.0, %v2410
        %2412 = vmatmul.f32.gmra.mxu0 %v2202
        %v2413 = vpop.f32.mrf.mxu0
        %v2414 = vadd.f32 0.0, %v2413
        %2415 = vmatmul.f32.gmra.mxu0 %v2205
        %v2416 = vpop.f32.mrf.mxu0
        %v2417 = vadd.f32 0.0, %v2416
        %2418 = vmatmul.f32.gmra.mxu0 %v2208
        %v2419 = vpop.f32.mrf.mxu0
        %v2420 = vadd.f32 0.0, %v2419
        %2421 = vmatmul.f32.gmra.mxu0 %v2211
        %v2422 = vpop.f32.mrf.mxu0
        %v2423 = vadd.f32 0.0, %v2422
        %2424 = vmatmul.f32.gmra.mxu0 %v2214
        %v2425 = vpop.f32.mrf.mxu0
        %v2426 = vadd.f32 0.0, %v2425
        %2427 = vmatmul.f32.gmra.mxu0 %v2217
        %v2428 = vpop.f32.mrf.mxu0
        %v2429 = vadd.f32 0.0, %v2428
        %2430 = vmatmul.f32.gmra.mxu0 %v2220
        %v2431 = vpop.f32.mrf.mxu0
        %v2432 = vadd.f32 0.0, %v2431
        %2433 = vmatmul.f32.gmra.mxu0 %v2223
        %v2434 = vpop.f32.mrf.mxu0
        %v2435 = vadd.f32 0.0, %v2434
        %2436 = vmatmul.f32.gmra.mxu0 %v2226
        %v2437 = vpop.f32.mrf.mxu0
        %v2438 = vadd.f32 0.0, %v2437
        %2439 = vdwg.mxu0
        %v2441 = vsel %vm640, %v2164, 0
        %v2444 = vsel %vm640, %v2165, 0
        %v2447 = vsel %vm640, %v2166, 0
        %v2450 = vsel %vm640, %v2167, 0
        %v2453 = vsel %vm640, %v2168, 0
        %v2456 = vsel %vm640, %v2169, 0
        %v2459 = vsel %vm640, %v2170, 0
        %v2462 = vsel %vm640, %v2171, 0
        %v2465 = vsel %vm640, %v2172, 0
        %v2468 = vsel %vm640, %v2173, 0
        %v2471 = vsel %vm640, %v2174, 0
        %v2474 = vsel %vm640, %v2175, 0
        %2476 = vmatpush.msra.mxu0 0.0
        %2477 = vmatpush.msra.mxu0 0.0
        %2478 = vmatpush.msra.mxu0 0.0
        %2479 = vmatpush.msra.mxu0 0.0
        %2480 = vmatpush.msra.mxu0 0.0
        %2481 = vmatpush.msra.mxu0 0.0
        %2482 = vmatpush.msra.mxu0 0.0
        %2483 = vmatpush.msra.mxu0 0.0
        %2484 = vmatpush.msra.mxu0 0.0
        %2485 = vmatpush.msra.mxu0 0.0
        %2486 = vmatpush.msra.mxu0 0.0
        %2487 = vmatpush.msra.mxu0 0.0
        %2488 = vmatpush.msra.mxu0 %v2188
        %2489 = vmatpush.msra.mxu0 %v2184
        %2490 = vmatpush.msra.mxu0 %v2180
        %2491 = vmatpush.msra.mxu0 %v2176
        %2492 = vmatmul.f32.gmra.mxu0 %v2441
        %v2493 = vpop.f32.mrf.mxu0
        %v2494 = vadd.f32 0.0, %v2493
        %2495 = vmatmul.f32.gmra.mxu0 %v2444
        %v2496 = vpop.f32.mrf.mxu0
        %v2497 = vadd.f32 0.0, %v2496
        %2498 = vmatmul.f32.gmra.mxu0 %v2447
        %v2499 = vpop.f32.mrf.mxu0
        %v2500 = vadd.f32 0.0, %v2499
        %2501 = vmatmul.f32.gmra.mxu0 %v2450
        %v2502 = vpop.f32.mrf.mxu0
        %v2503 = vadd.f32 0.0, %v2502
        %2504 = vmatmul.f32.gmra.mxu0 %v2453
        %v2505 = vpop.f32.mrf.mxu0
        %v2506 = vadd.f32 0.0, %v2505
        %2507 = vmatmul.f32.gmra.mxu0 %v2456
        %v2508 = vpop.f32.mrf.mxu0
        %v2509 = vadd.f32 0.0, %v2508
        %2510 = vmatmul.f32.gmra.mxu0 %v2459
        %v2511 = vpop.f32.mrf.mxu0
        %v2512 = vadd.f32 0.0, %v2511
        %2513 = vmatmul.f32.gmra.mxu0 %v2462
        %v2514 = vpop.f32.mrf.mxu0
        %v2515 = vadd.f32 0.0, %v2514
        %2516 = vmatmul.f32.gmra.mxu0 %v2465
        %v2517 = vpop.f32.mrf.mxu0
        %v2518 = vadd.f32 0.0, %v2517
        %2519 = vmatmul.f32.gmra.mxu0 %v2468
        %v2520 = vpop.f32.mrf.mxu0
        %v2521 = vadd.f32 0.0, %v2520
        %2522 = vmatmul.f32.gmra.mxu0 %v2471
        %v2523 = vpop.f32.mrf.mxu0
        %v2524 = vadd.f32 0.0, %v2523
        %2525 = vmatmul.f32.gmra.mxu0 %v2474
        %v2526 = vpop.f32.mrf.mxu0
        %v2527 = vadd.f32 0.0, %v2526
        %2528 = vdwg.mxu0
        %2529 = vmatpush.msra.mxu0 0.0
        %2530 = vmatpush.msra.mxu0 0.0
        %2531 = vmatpush.msra.mxu0 0.0
        %2532 = vmatpush.msra.mxu0 0.0
        %2533 = vmatpush.msra.mxu0 0.0
        %2534 = vmatpush.msra.mxu0 0.0
        %2535 = vmatpush.msra.mxu0 0.0
        %2536 = vmatpush.msra.mxu0 0.0
        %2537 = vmatpush.msra.mxu0 0.0
        %2538 = vmatpush.msra.mxu0 0.0
        %2539 = vmatpush.msra.mxu0 0.0
        %2540 = vmatpush.msra.mxu0 0.0
        %2541 = vmatpush.msra.mxu0 %v2189
        %2542 = vmatpush.msra.mxu0 %v2185
        %2543 = vmatpush.msra.mxu0 %v2181
        %2544 = vmatpush.msra.mxu0 %v2177
        %2545 = vmatmul.f32.gmra.mxu0 %v2441
        %v2546 = vpop.f32.mrf.mxu0
        %v2547 = vadd.f32 0.0, %v2546
        %2548 = vmatmul.f32.gmra.mxu0 %v2444
        %v2549 = vpop.f32.mrf.mxu0
        %v2550 = vadd.f32 0.0, %v2549
        %2551 = vmatmul.f32.gmra.mxu0 %v2447
        %v2552 = vpop.f32.mrf.mxu0
        %v2553 = vadd.f32 0.0, %v2552
        %2554 = vmatmul.f32.gmra.mxu0 %v2450
        %v2555 = vpop.f32.mrf.mxu0
        %v2556 = vadd.f32 0.0, %v2555
        %2557 = vmatmul.f32.gmra.mxu0 %v2453
        %v2558 = vpop.f32.mrf.mxu0
        %v2559 = vadd.f32 0.0, %v2558
        %2560 = vmatmul.f32.gmra.mxu0 %v2456
        %v2561 = vpop.f32.mrf.mxu0
        %v2562 = vadd.f32 0.0, %v2561
        %2563 = vmatmul.f32.gmra.mxu0 %v2459
        %v2564 = vpop.f32.mrf.mxu0
        %v2565 = vadd.f32 0.0, %v2564
        %2566 = vmatmul.f32.gmra.mxu0 %v2462
        %v2567 = vpop.f32.mrf.mxu0
        %v2568 = vadd.f32 0.0, %v2567
        %2569 = vmatmul.f32.gmra.mxu0 %v2465
        %v2570 = vpop.f32.mrf.mxu0
        %v2571 = vadd.f32 0.0, %v2570
        %2572 = vmatmul.f32.gmra.mxu0 %v2468
        %v2573 = vpop.f32.mrf.mxu0
        %v2574 = vadd.f32 0.0, %v2573
        %2575 = vmatmul.f32.gmra.mxu0 %v2471
        %v2576 = vpop.f32.mrf.mxu0
        %v2577 = vadd.f32 0.0, %v2576
        %2578 = vmatmul.f32.gmra.mxu0 %v2474
        %v2579 = vpop.f32.mrf.mxu0
        %v2580 = vadd.f32 0.0, %v2579
        %2581 = vdwg.mxu0
        %2582 = vmatpush.msra.mxu0 0.0
        %2583 = vmatpush.msra.mxu0 0.0
        %2584 = vmatpush.msra.mxu0 0.0
        %2585 = vmatpush.msra.mxu0 0.0
        %2586 = vmatpush.msra.mxu0 0.0
        %2587 = vmatpush.msra.mxu0 0.0
        %2588 = vmatpush.msra.mxu0 0.0
        %2589 = vmatpush.msra.mxu0 0.0
        %2590 = vmatpush.msra.mxu0 0.0
        %2591 = vmatpush.msra.mxu0 0.0
        %2592 = vmatpush.msra.mxu0 0.0
        %2593 = vmatpush.msra.mxu0 0.0
        %2594 = vmatpush.msra.mxu0 %v2190
        %2595 = vmatpush.msra.mxu0 %v2186
        %2596 = vmatpush.msra.mxu0 %v2182
        %2597 = vmatpush.msra.mxu0 %v2178
        %2598 = vmatmul.f32.gmra.mxu0 %v2441
        %v2599 = vpop.f32.mrf.mxu0
        %v2600 = vadd.f32 0.0, %v2599
        %2601 = vmatmul.f32.gmra.mxu0 %v2444
        %v2602 = vpop.f32.mrf.mxu0
        %v2603 = vadd.f32 0.0, %v2602
        %2604 = vmatmul.f32.gmra.mxu0 %v2447
        %v2605 = vpop.f32.mrf.mxu0
        %v2606 = vadd.f32 0.0, %v2605
        %2607 = vmatmul.f32.gmra.mxu0 %v2450
        %v2608 = vpop.f32.mrf.mxu0
        %v2609 = vadd.f32 0.0, %v2608
        %2610 = vmatmul.f32.gmra.mxu0 %v2453
        %v2611 = vpop.f32.mrf.mxu0
        %v2612 = vadd.f32 0.0, %v2611
        %2613 = vmatmul.f32.gmra.mxu0 %v2456
        %v2614 = vpop.f32.mrf.mxu0
        %v2615 = vadd.f32 0.0, %v2614
        %2616 = vmatmul.f32.gmra.mxu0 %v2459
        %v2617 = vpop.f32.mrf.mxu0
        %v2618 = vadd.f32 0.0, %v2617
        %2619 = vmatmul.f32.gmra.mxu0 %v2462
        %v2620 = vpop.f32.mrf.mxu0
        %v2621 = vadd.f32 0.0, %v2620
        %2622 = vmatmul.f32.gmra.mxu0 %v2465
        %v2623 = vpop.f32.mrf.mxu0
        %v2624 = vadd.f32 0.0, %v2623
        %2625 = vmatmul.f32.gmra.mxu0 %v2468
        %v2626 = vpop.f32.mrf.mxu0
        %v2627 = vadd.f32 0.0, %v2626
        %2628 = vmatmul.f32.gmra.mxu0 %v2471
        %v2629 = vpop.f32.mrf.mxu0
        %v2630 = vadd.f32 0.0, %v2629
        %2631 = vmatmul.f32.gmra.mxu0 %v2474
        %v2632 = vpop.f32.mrf.mxu0
        %v2633 = vadd.f32 0.0, %v2632
        %2634 = vdwg.mxu0
        %2635 = vmatpush.msra.mxu0 0.0
        %2636 = vmatpush.msra.mxu0 0.0
        %2637 = vmatpush.msra.mxu0 0.0
        %2638 = vmatpush.msra.mxu0 0.0
        %2639 = vmatpush.msra.mxu0 0.0
        %2640 = vmatpush.msra.mxu0 0.0
        %2641 = vmatpush.msra.mxu0 0.0
        %2642 = vmatpush.msra.mxu0 0.0
        %2643 = vmatpush.msra.mxu0 0.0
        %2644 = vmatpush.msra.mxu0 0.0
        %2645 = vmatpush.msra.mxu0 0.0
        %2646 = vmatpush.msra.mxu0 0.0
        %2647 = vmatpush.msra.mxu0 %v2191
        %2648 = vmatpush.msra.mxu0 %v2187
        %2649 = vmatpush.msra.mxu0 %v2183
        %2650 = vmatpush.msra.mxu0 %v2179
        %2651 = vmatmul.f32.gmra.mxu0 %v2441
        %v2652 = vpop.f32.mrf.mxu0
        %v2653 = vadd.f32 0.0, %v2652
        %2654 = vmatmul.f32.gmra.mxu0 %v2444
        %v2655 = vpop.f32.mrf.mxu0
        %v2656 = vadd.f32 0.0, %v2655
        %2657 = vmatmul.f32.gmra.mxu0 %v2447
        %v2658 = vpop.f32.mrf.mxu0
        %v2659 = vadd.f32 0.0, %v2658
        %2660 = vmatmul.f32.gmra.mxu0 %v2450
        %v2661 = vpop.f32.mrf.mxu0
        %v2662 = vadd.f32 0.0, %v2661
        %2663 = vmatmul.f32.gmra.mxu0 %v2453
        %v2664 = vpop.f32.mrf.mxu0
        %v2665 = vadd.f32 0.0, %v2664
        %2666 = vmatmul.f32.gmra.mxu0 %v2456
        %v2667 = vpop.f32.mrf.mxu0
        %v2668 = vadd.f32 0.0, %v2667
        %2669 = vmatmul.f32.gmra.mxu0 %v2459
        %v2670 = vpop.f32.mrf.mxu0
        %v2671 = vadd.f32 0.0, %v2670
        %2672 = vmatmul.f32.gmra.mxu0 %v2462
        %v2673 = vpop.f32.mrf.mxu0
        %v2674 = vadd.f32 0.0, %v2673
        %2675 = vmatmul.f32.gmra.mxu0 %v2465
        %v2676 = vpop.f32.mrf.mxu0
        %v2677 = vadd.f32 0.0, %v2676
        %2678 = vmatmul.f32.gmra.mxu0 %v2468
        %v2679 = vpop.f32.mrf.mxu0
        %v2680 = vadd.f32 0.0, %v2679
        %2681 = vmatmul.f32.gmra.mxu0 %v2471
        %v2682 = vpop.f32.mrf.mxu0
        %v2683 = vadd.f32 0.0, %v2682
        %2684 = vmatmul.f32.gmra.mxu0 %v2474
        %v2685 = vpop.f32.mrf.mxu0
        %v2686 = vadd.f32 0.0, %v2685
        %2687 = vdwg.mxu0
        %v2688 = vld [vmem:[%s14] sm:$0xff]
        %v2689 = vld [vmem:[%s14 + $0x8] sm:$0xff]
        %v2690 = vld [vmem:[%s14 + $0x10] sm:$0xff]
        %v2691 = vld [vmem:[%s14 + $0x18] sm:$0xff]
        %v2692 = vld [vmem:[%s14 + $0x20] sm:$0xff]
        %v2693 = vld [vmem:[%s14 + $0x28] sm:$0xff]
        %v2694 = vld [vmem:[%s14 + $0x30] sm:$0xff]
        %v2695 = vld [vmem:[%s14 + $0x38] sm:$0xff]
        %2708 = vrot.lane.b32.xlu0 %v2017, 96
        %v2709 = vpop.permute.xlu0 %2708
        %2710 = vrot.lane.b32.xlu0 %v2020, 96
        %v2711 = vpop.permute.xlu0 %2710
        %2712 = vrot.lane.b32.xlu0 %v2023, 96
        %v2713 = vpop.permute.xlu0 %2712
        %2714 = vrot.lane.b32.xlu0 %v2026, 96
        %v2715 = vpop.permute.xlu0 %2714
        %2716 = vrot.lane.b32.xlu0 %v2029, 96
        %v2717 = vpop.permute.xlu0 %2716
        %2718 = vrot.lane.b32.xlu0 %v2032, 96
        %v2719 = vpop.permute.xlu0 %2718
        %2720 = vrot.lane.b32.xlu0 %v2035, 96
        %v2721 = vpop.permute.xlu0 %2720
        %2722 = vrot.lane.b32.xlu0 %v2038, 96
        %v2723 = vpop.permute.xlu0 %2722
        %2724 = vrot.lane.b32.xlu0 %v2041, 96
        %v2725 = vpop.permute.xlu0 %2724
        %2726 = vrot.lane.b32.xlu0 %v2044, 96
        %v2727 = vpop.permute.xlu0 %2726
        %2728 = vrot.lane.b32.xlu0 %v2047, 96
        %v2729 = vpop.permute.xlu0 %2728
        %2730 = vrot.lane.b32.xlu0 %v2050, 96
        %v2731 = vpop.permute.xlu0 %2730
        %v2732 = vsel %vm1821, %v2709, 0
        %v2734 = vsel %vm1821, %v2711, 0
        %v2736 = vsel %vm1821, %v2713, 0
        %v2738 = vsel %vm1821, %v2715, 0
        %v2740 = vsel %vm1821, %v2717, 0
        %v2742 = vsel %vm1821, %v2719, 0
        %v2744 = vsel %vm1821, %v2721, 0
        %v2746 = vsel %vm1821, %v2723, 0
        %v2748 = vsel %vm1821, %v2725, 0
        %v2750 = vsel %vm1821, %v2727, 0
        %v2752 = vsel %vm1821, %v2729, 0
        %v2754 = vsel %vm1821, %v2731, 0
        %2756 = vmatpush.msra.mxu0 0.0
        %2757 = vmatpush.msra.mxu0 0.0
        %2758 = vmatpush.msra.mxu0 0.0
        %2759 = vmatpush.msra.mxu0 0.0
        %2760 = vmatpush.msra.mxu0 0.0
        %2761 = vmatpush.msra.mxu0 0.0
        %2762 = vmatpush.msra.mxu0 0.0
        %2763 = vmatpush.msra.mxu0 0.0
        %2764 = vmatpush.msra.mxu0 0.0
        %2765 = vmatpush.msra.mxu0 0.0
        %2766 = vmatpush.msra.mxu0 0.0
        %2767 = vmatpush.msra.mxu0 0.0
        %2768 = vmatpush.msra.mxu0 0.0
        %2769 = vmatpush.msra.mxu0 0.0
        %2770 = vmatpush.msra.mxu0 %v2692
        %2771 = vmatpush.msra.mxu0 %v2688
        %2772 = vmatmul.f32.gmra.mxu0 %v2732
        %v2773 = vpop.f32.mrf.mxu0
        %v2774 = vadd.f32 0.0, %v2773
        %2775 = vmatmul.f32.gmra.mxu0 %v2734
        %v2776 = vpop.f32.mrf.mxu0
        %v2777 = vadd.f32 0.0, %v2776
        %2778 = vmatmul.f32.gmra.mxu0 %v2736
        %v2779 = vpop.f32.mrf.mxu0
        %v2780 = vadd.f32 0.0, %v2779
        %2781 = vmatmul.f32.gmra.mxu0 %v2738
        %v2782 = vpop.f32.mrf.mxu0
        %v2783 = vadd.f32 0.0, %v2782
        %2784 = vmatmul.f32.gmra.mxu0 %v2740
        %v2785 = vpop.f32.mrf.mxu0
        %v2786 = vadd.f32 0.0, %v2785
        %2787 = vmatmul.f32.gmra.mxu0 %v2742
        %v2788 = vpop.f32.mrf.mxu0
        %v2789 = vadd.f32 0.0, %v2788
        %2790 = vmatmul.f32.gmra.mxu0 %v2744
        %v2791 = vpop.f32.mrf.mxu0
        %v2792 = vadd.f32 0.0, %v2791
        %2793 = vmatmul.f32.gmra.mxu0 %v2746
        %v2794 = vpop.f32.mrf.mxu0
        %v2795 = vadd.f32 0.0, %v2794
        %2796 = vmatmul.f32.gmra.mxu0 %v2748
        %v2797 = vpop.f32.mrf.mxu0
        %v2798 = vadd.f32 0.0, %v2797
        %2799 = vmatmul.f32.gmra.mxu0 %v2750
        %v2800 = vpop.f32.mrf.mxu0
        %v2801 = vadd.f32 0.0, %v2800
        %2802 = vmatmul.f32.gmra.mxu0 %v2752
        %v2803 = vpop.f32.mrf.mxu0
        %v2804 = vadd.f32 0.0, %v2803
        %2805 = vmatmul.f32.gmra.mxu0 %v2754
        %v2806 = vpop.f32.mrf.mxu0
        %v2807 = vadd.f32 0.0, %v2806
        %2808 = vdwg.mxu0
        %2809 = vmatpush.msra.mxu0 0.0
        %2810 = vmatpush.msra.mxu0 0.0
        %2811 = vmatpush.msra.mxu0 0.0
        %2812 = vmatpush.msra.mxu0 0.0
        %2813 = vmatpush.msra.mxu0 0.0
        %2814 = vmatpush.msra.mxu0 0.0
        %2815 = vmatpush.msra.mxu0 0.0
        %2816 = vmatpush.msra.mxu0 0.0
        %2817 = vmatpush.msra.mxu0 0.0
        %2818 = vmatpush.msra.mxu0 0.0
        %2819 = vmatpush.msra.mxu0 0.0
        %2820 = vmatpush.msra.mxu0 0.0
        %2821 = vmatpush.msra.mxu0 0.0
        %2822 = vmatpush.msra.mxu0 0.0
        %2823 = vmatpush.msra.mxu0 %v2693
        %2824 = vmatpush.msra.mxu0 %v2689
        %2825 = vmatmul.f32.gmra.mxu0 %v2732
        %v2826 = vpop.f32.mrf.mxu0
        %v2827 = vadd.f32 0.0, %v2826
        %2828 = vmatmul.f32.gmra.mxu0 %v2734
        %v2829 = vpop.f32.mrf.mxu0
        %v2830 = vadd.f32 0.0, %v2829
        %2831 = vmatmul.f32.gmra.mxu0 %v2736
        %v2832 = vpop.f32.mrf.mxu0
        %v2833 = vadd.f32 0.0, %v2832
        %2834 = vmatmul.f32.gmra.mxu0 %v2738
        %v2835 = vpop.f32.mrf.mxu0
        %v2836 = vadd.f32 0.0, %v2835
        %2837 = vmatmul.f32.gmra.mxu0 %v2740
        %v2838 = vpop.f32.mrf.mxu0
        %v2839 = vadd.f32 0.0, %v2838
        %2840 = vmatmul.f32.gmra.mxu0 %v2742
        %v2841 = vpop.f32.mrf.mxu0
        %v2842 = vadd.f32 0.0, %v2841
        %2843 = vmatmul.f32.gmra.mxu0 %v2744
        %v2844 = vpop.f32.mrf.mxu0
        %v2845 = vadd.f32 0.0, %v2844
        %2846 = vmatmul.f32.gmra.mxu0 %v2746
        %v2847 = vpop.f32.mrf.mxu0
        %v2848 = vadd.f32 0.0, %v2847
        %2849 = vmatmul.f32.gmra.mxu0 %v2748
        %v2850 = vpop.f32.mrf.mxu0
        %v2851 = vadd.f32 0.0, %v2850
        %2852 = vmatmul.f32.gmra.mxu0 %v2750
        %v2853 = vpop.f32.mrf.mxu0
        %v2854 = vadd.f32 0.0, %v2853
        %2855 = vmatmul.f32.gmra.mxu0 %v2752
        %v2856 = vpop.f32.mrf.mxu0
        %v2857 = vadd.f32 0.0, %v2856
        %2858 = vmatmul.f32.gmra.mxu0 %v2754
        %v2859 = vpop.f32.mrf.mxu0
        %v2860 = vadd.f32 0.0, %v2859
        %2861 = vdwg.mxu0
        %2862 = vmatpush.msra.mxu0 0.0
        %2863 = vmatpush.msra.mxu0 0.0
        %2864 = vmatpush.msra.mxu0 0.0
        %2865 = vmatpush.msra.mxu0 0.0
        %2866 = vmatpush.msra.mxu0 0.0
        %2867 = vmatpush.msra.mxu0 0.0
        %2868 = vmatpush.msra.mxu0 0.0
        %2869 = vmatpush.msra.mxu0 0.0
        %2870 = vmatpush.msra.mxu0 0.0
        %2871 = vmatpush.msra.mxu0 0.0
        %2872 = vmatpush.msra.mxu0 0.0
        %2873 = vmatpush.msra.mxu0 0.0
        %2874 = vmatpush.msra.mxu0 0.0
        %2875 = vmatpush.msra.mxu0 0.0
        %2876 = vmatpush.msra.mxu0 %v2694
        %2877 = vmatpush.msra.mxu0 %v2690
        %2878 = vmatmul.f32.gmra.mxu0 %v2732
        %v2879 = vpop.f32.mrf.mxu0
        %v2880 = vadd.f32 0.0, %v2879
        %2881 = vmatmul.f32.gmra.mxu0 %v2734
        %v2882 = vpop.f32.mrf.mxu0
        %v2883 = vadd.f32 0.0, %v2882
        %2884 = vmatmul.f32.gmra.mxu0 %v2736
        %v2885 = vpop.f32.mrf.mxu0
        %v2886 = vadd.f32 0.0, %v2885
        %2887 = vmatmul.f32.gmra.mxu0 %v2738
        %v2888 = vpop.f32.mrf.mxu0
        %v2889 = vadd.f32 0.0, %v2888
        %2890 = vmatmul.f32.gmra.mxu0 %v2740
        %v2891 = vpop.f32.mrf.mxu0
        %v2892 = vadd.f32 0.0, %v2891
        %2893 = vmatmul.f32.gmra.mxu0 %v2742
        %v2894 = vpop.f32.mrf.mxu0
        %v2895 = vadd.f32 0.0, %v2894
        %2896 = vmatmul.f32.gmra.mxu0 %v2744
        %v2897 = vpop.f32.mrf.mxu0
        %v2898 = vadd.f32 0.0, %v2897
        %2899 = vmatmul.f32.gmra.mxu0 %v2746
        %v2900 = vpop.f32.mrf.mxu0
        %v2901 = vadd.f32 0.0, %v2900
        %2902 = vmatmul.f32.gmra.mxu0 %v2748
        %v2903 = vpop.f32.mrf.mxu0
        %v2904 = vadd.f32 0.0, %v2903
        %2905 = vmatmul.f32.gmra.mxu0 %v2750
        %v2906 = vpop.f32.mrf.mxu0
        %v2907 = vadd.f32 0.0, %v2906
        %2908 = vmatmul.f32.gmra.mxu0 %v2752
        %v2909 = vpop.f32.mrf.mxu0
        %v2910 = vadd.f32 0.0, %v2909
        %2911 = vmatmul.f32.gmra.mxu0 %v2754
        %v2912 = vpop.f32.mrf.mxu0
        %v2913 = vadd.f32 0.0, %v2912
        %2914 = vdwg.mxu0
        %2915 = vmatpush.msra.mxu0 0.0
        %2916 = vmatpush.msra.mxu0 0.0
        %2917 = vmatpush.msra.mxu0 0.0
        %2918 = vmatpush.msra.mxu0 0.0
        %2919 = vmatpush.msra.mxu0 0.0
        %2920 = vmatpush.msra.mxu0 0.0
        %2921 = vmatpush.msra.mxu0 0.0
        %2922 = vmatpush.msra.mxu0 0.0
        %2923 = vmatpush.msra.mxu0 0.0
        %2924 = vmatpush.msra.mxu0 0.0
        %2925 = vmatpush.msra.mxu0 0.0
        %2926 = vmatpush.msra.mxu0 0.0
        %2927 = vmatpush.msra.mxu0 0.0
        %2928 = vmatpush.msra.mxu0 0.0
        %2929 = vmatpush.msra.mxu0 %v2695
        %2930 = vmatpush.msra.mxu0 %v2691
        %2931 = vmatmul.f32.gmra.mxu0 %v2732
        %v2932 = vpop.f32.mrf.mxu0
        %v2933 = vadd.f32 0.0, %v2932
        %2934 = vmatmul.f32.gmra.mxu0 %v2734
        %v2935 = vpop.f32.mrf.mxu0
        %v2936 = vadd.f32 0.0, %v2935
        %2937 = vmatmul.f32.gmra.mxu0 %v2736
        %v2938 = vpop.f32.mrf.mxu0
        %v2939 = vadd.f32 0.0, %v2938
        %2940 = vmatmul.f32.gmra.mxu0 %v2738
        %v2941 = vpop.f32.mrf.mxu0
        %v2942 = vadd.f32 0.0, %v2941
        %2943 = vmatmul.f32.gmra.mxu0 %v2740
        %v2944 = vpop.f32.mrf.mxu0
        %v2945 = vadd.f32 0.0, %v2944
        %2946 = vmatmul.f32.gmra.mxu0 %v2742
        %v2947 = vpop.f32.mrf.mxu0
        %v2948 = vadd.f32 0.0, %v2947
        %2949 = vmatmul.f32.gmra.mxu0 %v2744
        %v2950 = vpop.f32.mrf.mxu0
        %v2951 = vadd.f32 0.0, %v2950
        %2952 = vmatmul.f32.gmra.mxu0 %v2746
        %v2953 = vpop.f32.mrf.mxu0
        %v2954 = vadd.f32 0.0, %v2953
        %2955 = vmatmul.f32.gmra.mxu0 %v2748
        %v2956 = vpop.f32.mrf.mxu0
        %v2957 = vadd.f32 0.0, %v2956
        %2958 = vmatmul.f32.gmra.mxu0 %v2750
        %v2959 = vpop.f32.mrf.mxu0
        %v2960 = vadd.f32 0.0, %v2959
        %2961 = vmatmul.f32.gmra.mxu0 %v2752
        %v2962 = vpop.f32.mrf.mxu0
        %v2963 = vadd.f32 0.0, %v2962
        %2964 = vmatmul.f32.gmra.mxu0 %v2754
        %v2965 = vpop.f32.mrf.mxu0
        %v2966 = vadd.f32 0.0, %v2965
        %2967 = vdwg.mxu0
        %v2968 = vld [vmem:[%s12] sm:$0xf]
        %v2970 = vperm.slane %v2968, 0
        %v2971 = vperm.slane %v2968, 1
        %v2972 = vperm.slane %v2968, 2
        %v2973 = vperm.slane %v2968, 3
        %v2978 = vmul.f32 %v2246, %v2970
        %v2979 = vmul.f32 %v2299, %v2971
        %v2980 = vmul.f32 %v2352, %v2972
        %v2981 = vmul.f32 %v2405, %v2973
        %v2982 = vmul.f32 %v2249, %v2970
        %v2983 = vmul.f32 %v2302, %v2971
        %v2984 = vmul.f32 %v2355, %v2972
        %v2985 = vmul.f32 %v2408, %v2973
        %v2986 = vmul.f32 %v2252, %v2970
        %v2987 = vmul.f32 %v2305, %v2971
        %v2988 = vmul.f32 %v2358, %v2972
        %v2989 = vmul.f32 %v2411, %v2973
        %v2990 = vmul.f32 %v2255, %v2970
        %v2991 = vmul.f32 %v2308, %v2971
        %v2992 = vmul.f32 %v2361, %v2972
        %v2993 = vmul.f32 %v2414, %v2973
        %v2994 = vmul.f32 %v2258, %v2970
        %v2995 = vmul.f32 %v2311, %v2971
        %v2996 = vmul.f32 %v2364, %v2972
        %v2997 = vmul.f32 %v2417, %v2973
        %v2998 = vmul.f32 %v2261, %v2970
        %v2999 = vmul.f32 %v2314, %v2971
        %v3000 = vmul.f32 %v2367, %v2972
        %v3001 = vmul.f32 %v2420, %v2973
        %v3002 = vmul.f32 %v2264, %v2970
        %v3003 = vmul.f32 %v2317, %v2971
        %v3004 = vmul.f32 %v2370, %v2972
        %v3005 = vmul.f32 %v2423, %v2973
        %v3006 = vmul.f32 %v2267, %v2970
        %v3007 = vmul.f32 %v2320, %v2971
        %v3008 = vmul.f32 %v2373, %v2972
        %v3009 = vmul.f32 %v2426, %v2973
        %v3010 = vmul.f32 %v2270, %v2970
        %v3011 = vmul.f32 %v2323, %v2971
        %v3012 = vmul.f32 %v2376, %v2972
        %v3013 = vmul.f32 %v2429, %v2973
        %v3014 = vmul.f32 %v2273, %v2970
        %v3015 = vmul.f32 %v2326, %v2971
        %v3016 = vmul.f32 %v2379, %v2972
        %v3017 = vmul.f32 %v2432, %v2973
        %v3018 = vmul.f32 %v2276, %v2970
        %v3019 = vmul.f32 %v2329, %v2971
        %v3020 = vmul.f32 %v2382, %v2972
        %v3021 = vmul.f32 %v2435, %v2973
        %v3022 = vmul.f32 %v2279, %v2970
        %v3023 = vmul.f32 %v2332, %v2971
        %v3024 = vmul.f32 %v2385, %v2972
        %v3025 = vmul.f32 %v2438, %v2973
        %v3026 = vmul.f32 %v2978, 1.442695
        %v3027 = vpow.pop %v3026
        %v3028 = vmul.f32 %v2979, 1.442695
        %v3029 = vpow.pop %v3028
        %v3030 = vmul.f32 %v2980, 1.442695
        %v3031 = vpow.pop %v3030
        %v3032 = vmul.f32 %v2981, 1.442695
        %v3033 = vpow.pop %v3032
        %v3034 = vmul.f32 %v2982, 1.442695
        %v3035 = vpow.pop %v3034
        %v3036 = vmul.f32 %v2983, 1.442695
        %v3037 = vpow.pop %v3036
        %v3038 = vmul.f32 %v2984, 1.442695
        %v3039 = vpow.pop %v3038
        %v3040 = vmul.f32 %v2985, 1.442695
        %v3041 = vpow.pop %v3040
        %v3042 = vmul.f32 %v2986, 1.442695
        %v3043 = vpow.pop %v3042
        %v3044 = vmul.f32 %v2987, 1.442695
        %v3045 = vpow.pop %v3044
        %v3046 = vmul.f32 %v2988, 1.442695
        %v3047 = vpow.pop %v3046
        %v3048 = vmul.f32 %v2989, 1.442695
        %v3049 = vpow.pop %v3048
        %v3050 = vmul.f32 %v2990, 1.442695
        %v3051 = vpow.pop %v3050
        %v3052 = vmul.f32 %v2991, 1.442695
        %v3053 = vpow.pop %v3052
        %v3054 = vmul.f32 %v2992, 1.442695
        %v3055 = vpow.pop %v3054
        %v3056 = vmul.f32 %v2993, 1.442695
        %v3057 = vpow.pop %v3056
        %v3058 = vmul.f32 %v2994, 1.442695
        %v3059 = vpow.pop %v3058
        %v3060 = vmul.f32 %v2995, 1.442695
        %v3061 = vpow.pop %v3060
        %v3062 = vmul.f32 %v2996, 1.442695
        %v3063 = vpow.pop %v3062
        %v3064 = vmul.f32 %v2997, 1.442695
        %v3065 = vpow.pop %v3064
        %v3066 = vmul.f32 %v2998, 1.442695
        %v3067 = vpow.pop %v3066
        %v3068 = vmul.f32 %v2999, 1.442695
        %v3069 = vpow.pop %v3068
        %v3070 = vmul.f32 %v3000, 1.442695
        %v3071 = vpow.pop %v3070
        %v3072 = vmul.f32 %v3001, 1.442695
        %v3073 = vpow.pop %v3072
        %v3074 = vmul.f32 %v3002, 1.442695
        %v3075 = vpow.pop %v3074
        %v3076 = vmul.f32 %v3003, 1.442695
        %v3077 = vpow.pop %v3076
        %v3078 = vmul.f32 %v3004, 1.442695
        %v3079 = vpow.pop %v3078
        %v3080 = vmul.f32 %v3005, 1.442695
        %v3081 = vpow.pop %v3080
        %v3082 = vmul.f32 %v3006, 1.442695
        %v3083 = vpow.pop %v3082
        %v3084 = vmul.f32 %v3007, 1.442695
        %v3085 = vpow.pop %v3084
        %v3086 = vmul.f32 %v3008, 1.442695
        %v3087 = vpow.pop %v3086
        %v3088 = vmul.f32 %v3009, 1.442695
        %v3089 = vpow.pop %v3088
        %v3090 = vmul.f32 %v3010, 1.442695
        %v3091 = vpow.pop %v3090
        %v3092 = vmul.f32 %v3011, 1.442695
        %v3093 = vpow.pop %v3092
        %v3094 = vmul.f32 %v3012, 1.442695
        %v3095 = vpow.pop %v3094
        %v3096 = vmul.f32 %v3013, 1.442695
        %v3097 = vpow.pop %v3096
        %v3098 = vmul.f32 %v3014, 1.442695
        %v3099 = vpow.pop %v3098
        %v3100 = vmul.f32 %v3015, 1.442695
        %v3101 = vpow.pop %v3100
        %v3102 = vmul.f32 %v3016, 1.442695
        %v3103 = vpow.pop %v3102
        %v3104 = vmul.f32 %v3017, 1.442695
        %v3105 = vpow.pop %v3104
        %v3106 = vmul.f32 %v3018, 1.442695
        %v3107 = vpow.pop %v3106
        %v3108 = vmul.f32 %v3019, 1.442695
        %v3109 = vpow.pop %v3108
        %v3110 = vmul.f32 %v3020, 1.442695
        %v3111 = vpow.pop %v3110
        %v3112 = vmul.f32 %v3021, 1.442695
        %v3113 = vpow.pop %v3112
        %v3114 = vmul.f32 %v3022, 1.442695
        %v3115 = vpow.pop %v3114
        %v3116 = vmul.f32 %v3023, 1.442695
        %v3117 = vpow.pop %v3116
        %v3118 = vmul.f32 %v3024, 1.442695
        %v3119 = vpow.pop %v3118
        %v3120 = vmul.f32 %v3025, 1.442695
        %v3121 = vpow.pop %v3120
        %v3122 = vmul.f32 %v2494, %v2774
        %v3123 = vmul.f32 %v2547, %v2827
        %v3124 = vmul.f32 %v2600, %v2880
        %v3125 = vmul.f32 %v2653, %v2933
        %v3126 = vmul.f32 %v2497, %v2777
        %v3127 = vmul.f32 %v2550, %v2830
        %v3128 = vmul.f32 %v2603, %v2883
        %v3129 = vmul.f32 %v2656, %v2936
        %v3130 = vmul.f32 %v2500, %v2780
        %v3131 = vmul.f32 %v2553, %v2833
        %v3132 = vmul.f32 %v2606, %v2886
        %v3133 = vmul.f32 %v2659, %v2939
        %v3134 = vmul.f32 %v2503, %v2783
        %v3135 = vmul.f32 %v2556, %v2836
        %v3136 = vmul.f32 %v2609, %v2889
        %v3137 = vmul.f32 %v2662, %v2942
        %v3138 = vmul.f32 %v2506, %v2786
        %v3139 = vmul.f32 %v2559, %v2839
        %v3140 = vmul.f32 %v2612, %v2892
        %v3141 = vmul.f32 %v2665, %v2945
        %v3142 = vmul.f32 %v2509, %v2789
        %v3143 = vmul.f32 %v2562, %v2842
        %v3144 = vmul.f32 %v2615, %v2895
        %v3145 = vmul.f32 %v2668, %v2948
        %v3146 = vmul.f32 %v2512, %v2792
        %v3147 = vmul.f32 %v2565, %v2845
        %v3148 = vmul.f32 %v2618, %v2898
        %v3149 = vmul.f32 %v2671, %v2951
        %v3150 = vmul.f32 %v2515, %v2795
        %v3151 = vmul.f32 %v2568, %v2848
        %v3152 = vmul.f32 %v2621, %v2901
        %v3153 = vmul.f32 %v2674, %v2954
        %v3154 = vmul.f32 %v2518, %v2798
        %v3155 = vmul.f32 %v2571, %v2851
        %v3156 = vmul.f32 %v2624, %v2904
        %v3157 = vmul.f32 %v2677, %v2957
        %v3158 = vmul.f32 %v2521, %v2801
        %v3159 = vmul.f32 %v2574, %v2854
        %v3160 = vmul.f32 %v2627, %v2907
        %v3161 = vmul.f32 %v2680, %v2960
        %v3162 = vmul.f32 %v2524, %v2804
        %v3163 = vmul.f32 %v2577, %v2857
        %v3164 = vmul.f32 %v2630, %v2910
        %v3165 = vmul.f32 %v2683, %v2963
        %v3166 = vmul.f32 %v2527, %v2807
        %v3167 = vmul.f32 %v2580, %v2860
        %v3168 = vmul.f32 %v2633, %v2913
        %v3169 = vmul.f32 %v2686, %v2966
        %vm3218 = vcmask 1040384
        %v3219 = vrot.slane %v3122, 7
        %v3220 = vrot.slane %v3123, 7
        %v3221 = vrot.slane %v3124, 7
        %v3222 = vrot.slane %v3125, 7
        %v3223 = vrot.slane %v3126, 7
        %v3224 = vsel %vm3218, %v3219, %v3223
        %v3225 = vrot.slane %v3127, 7
        %v3226 = vsel %vm3218, %v3220, %v3225
        %v3227 = vrot.slane %v3128, 7
        %v3228 = vsel %vm3218, %v3221, %v3227
        %v3229 = vrot.slane %v3129, 7
        %v3230 = vsel %vm3218, %v3222, %v3229
        %v3231 = vrot.slane %v3130, 7
        %v3232 = vsel %vm3218, %v3223, %v3231
        %v3233 = vrot.slane %v3131, 7
        %v3234 = vsel %vm3218, %v3225, %v3233
        %v3235 = vrot.slane %v3132, 7
        %v3236 = vsel %vm3218, %v3227, %v3235
        %v3237 = vrot.slane %v3133, 7
        %v3238 = vsel %vm3218, %v3229, %v3237
        %v3239 = vrot.slane %v3134, 7
        %v3240 = vsel %vm3218, %v3231, %v3239
        %v3241 = vrot.slane %v3135, 7
        %v3242 = vsel %vm3218, %v3233, %v3241
        %v3243 = vrot.slane %v3136, 7
        %v3244 = vsel %vm3218, %v3235, %v3243
        %v3245 = vrot.slane %v3137, 7
        %v3246 = vsel %vm3218, %v3237, %v3245
        %v3247 = vrot.slane %v3138, 7
        %v3248 = vsel %vm3218, %v3239, %v3247
        %v3249 = vrot.slane %v3139, 7
        %v3250 = vsel %vm3218, %v3241, %v3249
        %v3251 = vrot.slane %v3140, 7
        %v3252 = vsel %vm3218, %v3243, %v3251
        %v3253 = vrot.slane %v3141, 7
        %v3254 = vsel %vm3218, %v3245, %v3253
        %v3255 = vrot.slane %v3142, 7
        %v3256 = vsel %vm3218, %v3247, %v3255
        %v3257 = vrot.slane %v3143, 7
        %v3258 = vsel %vm3218, %v3249, %v3257
        %v3259 = vrot.slane %v3144, 7
        %v3260 = vsel %vm3218, %v3251, %v3259
        %v3261 = vrot.slane %v3145, 7
        %v3262 = vsel %vm3218, %v3253, %v3261
        %v3263 = vrot.slane %v3146, 7
        %v3264 = vsel %vm3218, %v3255, %v3263
        %v3265 = vrot.slane %v3147, 7
        %v3266 = vsel %vm3218, %v3257, %v3265
        %v3267 = vrot.slane %v3148, 7
        %v3268 = vsel %vm3218, %v3259, %v3267
        %v3269 = vrot.slane %v3149, 7
        %v3270 = vsel %vm3218, %v3261, %v3269
        %v3271 = vrot.slane %v3150, 7
        %v3272 = vsel %vm3218, %v3263, %v3271
        %v3273 = vrot.slane %v3151, 7
        %v3274 = vsel %vm3218, %v3265, %v3273
        %v3275 = vrot.slane %v3152, 7
        %v3276 = vsel %vm3218, %v3267, %v3275
        %v3277 = vrot.slane %v3153, 7
        %v3278 = vsel %vm3218, %v3269, %v3277
        %v3279 = vrot.slane %v3154, 7
        %v3280 = vsel %vm3218, %v3271, %v3279
        %v3281 = vrot.slane %v3155, 7
        %v3282 = vsel %vm3218, %v3273, %v3281
        %v3283 = vrot.slane %v3156, 7
        %v3284 = vsel %vm3218, %v3275, %v3283
        %v3285 = vrot.slane %v3157, 7
        %v3286 = vsel %vm3218, %v3277, %v3285
        %v3287 = vrot.slane %v3158, 7
        %v3288 = vsel %vm3218, %v3279, %v3287
        %v3289 = vrot.slane %v3159, 7
        %v3290 = vsel %vm3218, %v3281, %v3289
        %v3291 = vrot.slane %v3160, 7
        %v3292 = vsel %vm3218, %v3283, %v3291
        %v3293 = vrot.slane %v3161, 7
        %v3294 = vsel %vm3218, %v3285, %v3293
        %v3295 = vrot.slane %v3162, 7
        %v3296 = vsel %vm3218, %v3287, %v3295
        %v3297 = vrot.slane %v3163, 7
        %v3298 = vsel %vm3218, %v3289, %v3297
        %v3299 = vrot.slane %v3164, 7
        %v3300 = vsel %vm3218, %v3291, %v3299
        %v3301 = vrot.slane %v3165, 7
        %v3302 = vsel %vm3218, %v3293, %v3301
        %v3303 = vrot.slane %v3166, 7
        %v3304 = vsel %vm3218, %v3295, %v3303
        %v3305 = vrot.slane %v3167, 7
        %v3306 = vsel %vm3218, %v3297, %v3305
        %v3307 = vrot.slane %v3168, 7
        %v3308 = vsel %vm3218, %v3299, %v3307
        %v3309 = vrot.slane %v3169, 7
        %v3310 = vsel %vm3218, %v3301, %v3309
        %v3359 = vsel %vm3218, 0.0, %v3219
        %v3360 = vsel %vm3218, 0.0, %v3220
        %v3361 = vsel %vm3218, 0.0, %v3221
        %v3362 = vsel %vm3218, 0.0, %v3222
        %v3363 = vmul.f32 %v3027, %v3359
        %v3364 = vmul.f32 %v3029, %v3360
        %v3365 = vmul.f32 %v3031, %v3361
        %v3366 = vmul.f32 %v3033, %v3362
        %v3367 = vmul.f32 %v3035, %v3224
        %v3368 = vmul.f32 %v3037, %v3226
        %v3369 = vmul.f32 %v3039, %v3228
        %v3370 = vmul.f32 %v3041, %v3230
        %v3371 = vmul.f32 %v3043, %v3232
        %v3372 = vmul.f32 %v3045, %v3234
        %v3373 = vmul.f32 %v3047, %v3236
        %v3374 = vmul.f32 %v3049, %v3238
        %v3375 = vmul.f32 %v3051, %v3240
        %v3376 = vmul.f32 %v3053, %v3242
        %v3377 = vmul.f32 %v3055, %v3244
        %v3378 = vmul.f32 %v3057, %v3246
        %v3379 = vmul.f32 %v3059, %v3248
        %v3380 = vmul.f32 %v3061, %v3250
        %v3381 = vmul.f32 %v3063, %v3252
        %v3382 = vmul.f32 %v3065, %v3254
        %v3383 = vmul.f32 %v3067, %v3256
        %v3384 = vmul.f32 %v3069, %v3258
        %v3385 = vmul.f32 %v3071, %v3260
        %v3386 = vmul.f32 %v3073, %v3262
        %v3387 = vmul.f32 %v3075, %v3264
        %v3388 = vmul.f32 %v3077, %v3266
        %v3389 = vmul.f32 %v3079, %v3268
        %v3390 = vmul.f32 %v3081, %v3270
        %v3391 = vmul.f32 %v3083, %v3272
        %v3392 = vmul.f32 %v3085, %v3274
        %v3393 = vmul.f32 %v3087, %v3276
        %v3394 = vmul.f32 %v3089, %v3278
        %v3395 = vmul.f32 %v3091, %v3280
        %v3396 = vmul.f32 %v3093, %v3282
        %v3397 = vmul.f32 %v3095, %v3284
        %v3398 = vmul.f32 %v3097, %v3286
        %v3399 = vmul.f32 %v3099, %v3288
        %v3400 = vmul.f32 %v3101, %v3290
        %v3401 = vmul.f32 %v3103, %v3292
        %v3402 = vmul.f32 %v3105, %v3294
        %v3403 = vmul.f32 %v3107, %v3296
        %v3404 = vmul.f32 %v3109, %v3298
        %v3405 = vmul.f32 %v3111, %v3300
        %v3406 = vmul.f32 %v3113, %v3302
        %v3407 = vmul.f32 %v3115, %v3304
        %v3408 = vmul.f32 %v3117, %v3306
        %v3409 = vmul.f32 %v3119, %v3308
        %v3410 = vmul.f32 %v3121, %v3310
        %v3411 = vadd.f32 %v3363, %v3122
        %v3412 = vadd.f32 %v3364, %v3123
        %v3413 = vadd.f32 %v3365, %v3124
        %v3414 = vadd.f32 %v3366, %v3125
        %v3415 = vadd.f32 %v3367, %v3126
        %v3416 = vadd.f32 %v3368, %v3127
        %v3417 = vadd.f32 %v3369, %v3128
        %v3418 = vadd.f32 %v3370, %v3129
        %v3419 = vadd.f32 %v3371, %v3130
        %v3420 = vadd.f32 %v3372, %v3131
        %v3421 = vadd.f32 %v3373, %v3132
        %v3422 = vadd.f32 %v3374, %v3133
        %v3423 = vadd.f32 %v3375, %v3134
        %v3424 = vadd.f32 %v3376, %v3135
        %v3425 = vadd.f32 %v3377, %v3136
        %v3426 = vadd.f32 %v3378, %v3137
        %v3427 = vadd.f32 %v3379, %v3138
        %v3428 = vadd.f32 %v3380, %v3139
        %v3429 = vadd.f32 %v3381, %v3140
        %v3430 = vadd.f32 %v3382, %v3141
        %v3431 = vadd.f32 %v3383, %v3142
        %v3432 = vadd.f32 %v3384, %v3143
        %v3433 = vadd.f32 %v3385, %v3144
        %v3434 = vadd.f32 %v3386, %v3145
        %v3435 = vadd.f32 %v3387, %v3146
        %v3436 = vadd.f32 %v3388, %v3147
        %v3437 = vadd.f32 %v3389, %v3148
        %v3438 = vadd.f32 %v3390, %v3149
        %v3439 = vadd.f32 %v3391, %v3150
        %v3440 = vadd.f32 %v3392, %v3151
        %v3441 = vadd.f32 %v3393, %v3152
        %v3442 = vadd.f32 %v3394, %v3153
        %v3443 = vadd.f32 %v3395, %v3154
        %v3444 = vadd.f32 %v3396, %v3155
        %v3445 = vadd.f32 %v3397, %v3156
        %v3446 = vadd.f32 %v3398, %v3157
        %v3447 = vadd.f32 %v3399, %v3158
        %v3448 = vadd.f32 %v3400, %v3159
        %v3449 = vadd.f32 %v3401, %v3160
        %v3450 = vadd.f32 %v3402, %v3161
        %v3451 = vadd.f32 %v3403, %v3162
        %v3452 = vadd.f32 %v3404, %v3163
        %v3453 = vadd.f32 %v3405, %v3164
        %v3454 = vadd.f32 %v3406, %v3165
        %v3455 = vadd.f32 %v3407, %v3166
        %v3456 = vadd.f32 %v3408, %v3167
        %v3457 = vadd.f32 %v3409, %v3168
        %v3458 = vadd.f32 %v3410, %v3169
        %v3507 = vrot.slane %v3027, 7
        %v3508 = vrot.slane %v3029, 7
        %v3509 = vrot.slane %v3031, 7
        %v3510 = vrot.slane %v3033, 7
        %v3511 = vrot.slane %v3035, 7
        %v3512 = vsel %vm3218, %v3507, %v3511
        %v3513 = vrot.slane %v3037, 7
        %v3514 = vsel %vm3218, %v3508, %v3513
        %v3515 = vrot.slane %v3039, 7
        %v3516 = vsel %vm3218, %v3509, %v3515
        %v3517 = vrot.slane %v3041, 7
        %v3518 = vsel %vm3218, %v3510, %v3517
        %v3519 = vrot.slane %v3043, 7
        %v3520 = vsel %vm3218, %v3511, %v3519
        %v3521 = vrot.slane %v3045, 7
        %v3522 = vsel %vm3218, %v3513, %v3521
        %v3523 = vrot.slane %v3047, 7
        %v3524 = vsel %vm3218, %v3515, %v3523
        %v3525 = vrot.slane %v3049, 7
        %v3526 = vsel %vm3218, %v3517, %v3525
        %v3527 = vrot.slane %v3051, 7
        %v3528 = vsel %vm3218, %v3519, %v3527
        %v3529 = vrot.slane %v3053, 7
        %v3530 = vsel %vm3218, %v3521, %v3529
        %v3531 = vrot.slane %v3055, 7
        %v3532 = vsel %vm3218, %v3523, %v3531
        %v3533 = vrot.slane %v3057, 7
        %v3534 = vsel %vm3218, %v3525, %v3533
        %v3535 = vrot.slane %v3059, 7
        %v3536 = vsel %vm3218, %v3527, %v3535
        %v3537 = vrot.slane %v3061, 7
        %v3538 = vsel %vm3218, %v3529, %v3537
        %v3539 = vrot.slane %v3063, 7
        %v3540 = vsel %vm3218, %v3531, %v3539
        %v3541 = vrot.slane %v3065, 7
        %v3542 = vsel %vm3218, %v3533, %v3541
        %v3543 = vrot.slane %v3067, 7
        %v3544 = vsel %vm3218, %v3535, %v3543
        %v3545 = vrot.slane %v3069, 7
        %v3546 = vsel %vm3218, %v3537, %v3545
        %v3547 = vrot.slane %v3071, 7
        %v3548 = vsel %vm3218, %v3539, %v3547
        %v3549 = vrot.slane %v3073, 7
        %v3550 = vsel %vm3218, %v3541, %v3549
        %v3551 = vrot.slane %v3075, 7
        %v3552 = vsel %vm3218, %v3543, %v3551
        %v3553 = vrot.slane %v3077, 7
        %v3554 = vsel %vm3218, %v3545, %v3553
        %v3555 = vrot.slane %v3079, 7
        %v3556 = vsel %vm3218, %v3547, %v3555
        %v3557 = vrot.slane %v3081, 7
        %v3558 = vsel %vm3218, %v3549, %v3557
        %v3559 = vrot.slane %v3083, 7
        %v3560 = vsel %vm3218, %v3551, %v3559
        %v3561 = vrot.slane %v3085, 7
        %v3562 = vsel %vm3218, %v3553, %v3561
        %v3563 = vrot.slane %v3087, 7
        %v3564 = vsel %vm3218, %v3555, %v3563
        %v3565 = vrot.slane %v3089, 7
        %v3566 = vsel %vm3218, %v3557, %v3565
        %v3567 = vrot.slane %v3091, 7
        %v3568 = vsel %vm3218, %v3559, %v3567
        %v3569 = vrot.slane %v3093, 7
        %v3570 = vsel %vm3218, %v3561, %v3569
        %v3571 = vrot.slane %v3095, 7
        %v3572 = vsel %vm3218, %v3563, %v3571
        %v3573 = vrot.slane %v3097, 7
        %v3574 = vsel %vm3218, %v3565, %v3573
        %v3575 = vrot.slane %v3099, 7
        %v3576 = vsel %vm3218, %v3567, %v3575
        %v3577 = vrot.slane %v3101, 7
        %v3578 = vsel %vm3218, %v3569, %v3577
        %v3579 = vrot.slane %v3103, 7
        %v3580 = vsel %vm3218, %v3571, %v3579
        %v3581 = vrot.slane %v3105, 7
        %v3582 = vsel %vm3218, %v3573, %v3581
        %v3583 = vrot.slane %v3107, 7
        %v3584 = vsel %vm3218, %v3575, %v3583
        %v3585 = vrot.slane %v3109, 7
        %v3586 = vsel %vm3218, %v3577, %v3585
        %v3587 = vrot.slane %v3111, 7
        %v3588 = vsel %vm3218, %v3579, %v3587
        %v3589 = vrot.slane %v3113, 7
        %v3590 = vsel %vm3218, %v3581, %v3589
        %v3591 = vrot.slane %v3115, 7
        %v3592 = vsel %vm3218, %v3583, %v3591
        %v3593 = vrot.slane %v3117, 7
        %v3594 = vsel %vm3218, %v3585, %v3593
        %v3595 = vrot.slane %v3119, 7
        %v3596 = vsel %vm3218, %v3587, %v3595
        %v3597 = vrot.slane %v3121, 7
        %v3598 = vsel %vm3218, %v3589, %v3597
        %v3647 = vsel %vm3218, 1.0, %v3507
        %v3648 = vsel %vm3218, 1.0, %v3508
        %v3649 = vsel %vm3218, 1.0, %v3509
        %v3650 = vsel %vm3218, 1.0, %v3510
        %v3651 = vmul.f32 %v3027, %v3647
        %v3652 = vmul.f32 %v3029, %v3648
        %v3653 = vmul.f32 %v3031, %v3649
        %v3654 = vmul.f32 %v3033, %v3650
        %v3655 = vmul.f32 %v3035, %v3512
        %v3656 = vmul.f32 %v3037, %v3514
        %v3657 = vmul.f32 %v3039, %v3516
        %v3658 = vmul.f32 %v3041, %v3518
        %v3659 = vmul.f32 %v3043, %v3520
        %v3660 = vmul.f32 %v3045, %v3522
        %v3661 = vmul.f32 %v3047, %v3524
        %v3662 = vmul.f32 %v3049, %v3526
        %v3663 = vmul.f32 %v3051, %v3528
        %v3664 = vmul.f32 %v3053, %v3530
        %v3665 = vmul.f32 %v3055, %v3532
        %v3666 = vmul.f32 %v3057, %v3534
        %v3667 = vmul.f32 %v3059, %v3536
        %v3668 = vmul.f32 %v3061, %v3538
        %v3669 = vmul.f32 %v3063, %v3540
        %v3670 = vmul.f32 %v3065, %v3542
        %v3671 = vmul.f32 %v3067, %v3544
        %v3672 = vmul.f32 %v3069, %v3546
        %v3673 = vmul.f32 %v3071, %v3548
        %v3674 = vmul.f32 %v3073, %v3550
        %v3675 = vmul.f32 %v3075, %v3552
        %v3676 = vmul.f32 %v3077, %v3554
        %v3677 = vmul.f32 %v3079, %v3556
        %v3678 = vmul.f32 %v3081, %v3558
        %v3679 = vmul.f32 %v3083, %v3560
        %v3680 = vmul.f32 %v3085, %v3562
        %v3681 = vmul.f32 %v3087, %v3564
        %v3682 = vmul.f32 %v3089, %v3566
        %v3683 = vmul.f32 %v3091, %v3568
        %v3684 = vmul.f32 %v3093, %v3570
        %v3685 = vmul.f32 %v3095, %v3572
        %v3686 = vmul.f32 %v3097, %v3574
        %v3687 = vmul.f32 %v3099, %v3576
        %v3688 = vmul.f32 %v3101, %v3578
        %v3689 = vmul.f32 %v3103, %v3580
        %v3690 = vmul.f32 %v3105, %v3582
        %v3691 = vmul.f32 %v3107, %v3584
        %v3692 = vmul.f32 %v3109, %v3586
        %v3693 = vmul.f32 %v3111, %v3588
        %v3694 = vmul.f32 %v3113, %v3590
        %v3695 = vmul.f32 %v3115, %v3592
        %v3696 = vmul.f32 %v3117, %v3594
        %v3697 = vmul.f32 %v3119, %v3596
        %v3698 = vmul.f32 %v3121, %v3598
        %vm3747 = vcmask 1041408
        %v3748 = vrot.slane %v3411, 6
        %v3749 = vrot.slane %v3412, 6
        %v3750 = vrot.slane %v3413, 6
        %v3751 = vrot.slane %v3414, 6
        %v3752 = vrot.slane %v3415, 6
        %v3753 = vsel %vm3747, %v3748, %v3752
        %v3754 = vrot.slane %v3416, 6
        %v3755 = vsel %vm3747, %v3749, %v3754
        %v3756 = vrot.slane %v3417, 6
        %v3757 = vsel %vm3747, %v3750, %v3756
        %v3758 = vrot.slane %v3418, 6
        %v3759 = vsel %vm3747, %v3751, %v3758
        %v3760 = vrot.slane %v3419, 6
        %v3761 = vsel %vm3747, %v3752, %v3760
        %v3762 = vrot.slane %v3420, 6
        %v3763 = vsel %vm3747, %v3754, %v3762
        %v3764 = vrot.slane %v3421, 6
        %v3765 = vsel %vm3747, %v3756, %v3764
        %v3766 = vrot.slane %v3422, 6
        %v3767 = vsel %vm3747, %v3758, %v3766
        %v3768 = vrot.slane %v3423, 6
        %v3769 = vsel %vm3747, %v3760, %v3768
        %v3770 = vrot.slane %v3424, 6
        %v3771 = vsel %vm3747, %v3762, %v3770
        %v3772 = vrot.slane %v3425, 6
        %v3773 = vsel %vm3747, %v3764, %v3772
        %v3774 = vrot.slane %v3426, 6
        %v3775 = vsel %vm3747, %v3766, %v3774
        %v3776 = vrot.slane %v3427, 6
        %v3777 = vsel %vm3747, %v3768, %v3776
        %v3778 = vrot.slane %v3428, 6
        %v3779 = vsel %vm3747, %v3770, %v3778
        %v3780 = vrot.slane %v3429, 6
        %v3781 = vsel %vm3747, %v3772, %v3780
        %v3782 = vrot.slane %v3430, 6
        %v3783 = vsel %vm3747, %v3774, %v3782
        %v3784 = vrot.slane %v3431, 6
        %v3785 = vsel %vm3747, %v3776, %v3784
        %v3786 = vrot.slane %v3432, 6
        %v3787 = vsel %vm3747, %v3778, %v3786
        %v3788 = vrot.slane %v3433, 6
        %v3789 = vsel %vm3747, %v3780, %v3788
        %v3790 = vrot.slane %v3434, 6
        %v3791 = vsel %vm3747, %v3782, %v3790
        %v3792 = vrot.slane %v3435, 6
        %v3793 = vsel %vm3747, %v3784, %v3792
        %v3794 = vrot.slane %v3436, 6
        %v3795 = vsel %vm3747, %v3786, %v3794
        %v3796 = vrot.slane %v3437, 6
        %v3797 = vsel %vm3747, %v3788, %v3796
        %v3798 = vrot.slane %v3438, 6
        %v3799 = vsel %vm3747, %v3790, %v3798
        %v3800 = vrot.slane %v3439, 6
        %v3801 = vsel %vm3747, %v3792, %v3800
        %v3802 = vrot.slane %v3440, 6
        %v3803 = vsel %vm3747, %v3794, %v3802
        %v3804 = vrot.slane %v3441, 6
        %v3805 = vsel %vm3747, %v3796, %v3804
        %v3806 = vrot.slane %v3442, 6
        %v3807 = vsel %vm3747, %v3798, %v3806
        %v3808 = vrot.slane %v3443, 6
        %v3809 = vsel %vm3747, %v3800, %v3808
        %v3810 = vrot.slane %v3444, 6
        %v3811 = vsel %vm3747, %v3802, %v3810
        %v3812 = vrot.slane %v3445, 6
        %v3813 = vsel %vm3747, %v3804, %v3812
        %v3814 = vrot.slane %v3446, 6
        %v3815 = vsel %vm3747, %v3806, %v3814
        %v3816 = vrot.slane %v3447, 6
        %v3817 = vsel %vm3747, %v3808, %v3816
        %v3818 = vrot.slane %v3448, 6
        %v3819 = vsel %vm3747, %v3810, %v3818
        %v3820 = vrot.slane %v3449, 6
        %v3821 = vsel %vm3747, %v3812, %v3820
        %v3822 = vrot.slane %v3450, 6
        %v3823 = vsel %vm3747, %v3814, %v3822
        %v3824 = vrot.slane %v3451, 6
        %v3825 = vsel %vm3747, %v3816, %v3824
        %v3826 = vrot.slane %v3452, 6
        %v3827 = vsel %vm3747, %v3818, %v3826
        %v3828 = vrot.slane %v3453, 6
        %v3829 = vsel %vm3747, %v3820, %v3828
        %v3830 = vrot.slane %v3454, 6
        %v3831 = vsel %vm3747, %v3822, %v3830
        %v3832 = vrot.slane %v3455, 6
        %v3833 = vsel %vm3747, %v3824, %v3832
        %v3834 = vrot.slane %v3456, 6
        %v3835 = vsel %vm3747, %v3826, %v3834
        %v3836 = vrot.slane %v3457, 6
        %v3837 = vsel %vm3747, %v3828, %v3836
        %v3838 = vrot.slane %v3458, 6
        %v3839 = vsel %vm3747, %v3830, %v3838
        %v3888 = vsel %vm3747, 0.0, %v3748
        %v3889 = vsel %vm3747, 0.0, %v3749
        %v3890 = vsel %vm3747, 0.0, %v3750
        %v3891 = vsel %vm3747, 0.0, %v3751
        %v3892 = vmul.f32 %v3651, %v3888
        %v3893 = vmul.f32 %v3652, %v3889
        %v3894 = vmul.f32 %v3653, %v3890
        %v3895 = vmul.f32 %v3654, %v3891
        %v3896 = vmul.f32 %v3655, %v3753
        %v3897 = vmul.f32 %v3656, %v3755
        %v3898 = vmul.f32 %v3657, %v3757
        %v3899 = vmul.f32 %v3658, %v3759
        %v3900 = vmul.f32 %v3659, %v3761
        %v3901 = vmul.f32 %v3660, %v3763
        %v3902 = vmul.f32 %v3661, %v3765
        %v3903 = vmul.f32 %v3662, %v3767
        %v3904 = vmul.f32 %v3663, %v3769
        %v3905 = vmul.f32 %v3664, %v3771
        %v3906 = vmul.f32 %v3665, %v3773
        %v3907 = vmul.f32 %v3666, %v3775
        %v3908 = vmul.f32 %v3667, %v3777
        %v3909 = vmul.f32 %v3668, %v3779
        %v3910 = vmul.f32 %v3669, %v3781
        %v3911 = vmul.f32 %v3670, %v3783
        %v3912 = vmul.f32 %v3671, %v3785
        %v3913 = vmul.f32 %v3672, %v3787
        %v3914 = vmul.f32 %v3673, %v3789
        %v3915 = vmul.f32 %v3674, %v3791
        %v3916 = vmul.f32 %v3675, %v3793
        %v3917 = vmul.f32 %v3676, %v3795
        %v3918 = vmul.f32 %v3677, %v3797
        %v3919 = vmul.f32 %v3678, %v3799
        %v3920 = vmul.f32 %v3679, %v3801
        %v3921 = vmul.f32 %v3680, %v3803
        %v3922 = vmul.f32 %v3681, %v3805
        %v3923 = vmul.f32 %v3682, %v3807
        %v3924 = vmul.f32 %v3683, %v3809
        %v3925 = vmul.f32 %v3684, %v3811
        %v3926 = vmul.f32 %v3685, %v3813
        %v3927 = vmul.f32 %v3686, %v3815
        %v3928 = vmul.f32 %v3687, %v3817
        %v3929 = vmul.f32 %v3688, %v3819
        %v3930 = vmul.f32 %v3689, %v3821
        %v3931 = vmul.f32 %v3690, %v3823
        %v3932 = vmul.f32 %v3691, %v3825
        %v3933 = vmul.f32 %v3692, %v3827
        %v3934 = vmul.f32 %v3693, %v3829
        %v3935 = vmul.f32 %v3694, %v3831
        %v3936 = vmul.f32 %v3695, %v3833
        %v3937 = vmul.f32 %v3696, %v3835
        %v3938 = vmul.f32 %v3697, %v3837
        %v3939 = vmul.f32 %v3698, %v3839
        %v3940 = vadd.f32 %v3892, %v3411
        %v3941 = vadd.f32 %v3893, %v3412
        %v3942 = vadd.f32 %v3894, %v3413
        %v3943 = vadd.f32 %v3895, %v3414
        %v3944 = vadd.f32 %v3896, %v3415
        %v3945 = vadd.f32 %v3897, %v3416
        %v3946 = vadd.f32 %v3898, %v3417
        %v3947 = vadd.f32 %v3899, %v3418
        %v3948 = vadd.f32 %v3900, %v3419
        %v3949 = vadd.f32 %v3901, %v3420
        %v3950 = vadd.f32 %v3902, %v3421
        %v3951 = vadd.f32 %v3903, %v3422
        %v3952 = vadd.f32 %v3904, %v3423
        %v3953 = vadd.f32 %v3905, %v3424
        %v3954 = vadd.f32 %v3906, %v3425
        %v3955 = vadd.f32 %v3907, %v3426
        %v3956 = vadd.f32 %v3908, %v3427
        %v3957 = vadd.f32 %v3909, %v3428
        %v3958 = vadd.f32 %v3910, %v3429
        %v3959 = vadd.f32 %v3911, %v3430
        %v3960 = vadd.f32 %v3912, %v3431
        %v3961 = vadd.f32 %v3913, %v3432
        %v3962 = vadd.f32 %v3914, %v3433
        %v3963 = vadd.f32 %v3915, %v3434
        %v3964 = vadd.f32 %v3916, %v3435
        %v3965 = vadd.f32 %v3917, %v3436
        %v3966 = vadd.f32 %v3918, %v3437
        %v3967 = vadd.f32 %v3919, %v3438
        %v3968 = vadd.f32 %v3920, %v3439
        %v3969 = vadd.f32 %v3921, %v3440
        %v3970 = vadd.f32 %v3922, %v3441
        %v3971 = vadd.f32 %v3923, %v3442
        %v3972 = vadd.f32 %v3924, %v3443
        %v3973 = vadd.f32 %v3925, %v3444
        %v3974 = vadd.f32 %v3926, %v3445
        %v3975 = vadd.f32 %v3927, %v3446
        %v3976 = vadd.f32 %v3928, %v3447
        %v3977 = vadd.f32 %v3929, %v3448
        %v3978 = vadd.f32 %v3930, %v3449
        %v3979 = vadd.f32 %v3931, %v3450
        %v3980 = vadd.f32 %v3932, %v3451
        %v3981 = vadd.f32 %v3933, %v3452
        %v3982 = vadd.f32 %v3934, %v3453
        %v3983 = vadd.f32 %v3935, %v3454
        %v3984 = vadd.f32 %v3936, %v3455
        %v3985 = vadd.f32 %v3937, %v3456
        %v3986 = vadd.f32 %v3938, %v3457
        %v3987 = vadd.f32 %v3939, %v3458
        %v4036 = vrot.slane %v3651, 6
        %v4037 = vrot.slane %v3652, 6
        %v4038 = vrot.slane %v3653, 6
        %v4039 = vrot.slane %v3654, 6
        %v4040 = vrot.slane %v3655, 6
        %v4041 = vsel %vm3747, %v4036, %v4040
        %v4042 = vrot.slane %v3656, 6
        %v4043 = vsel %vm3747, %v4037, %v4042
        %v4044 = vrot.slane %v3657, 6
        %v4045 = vsel %vm3747, %v4038, %v4044
        %v4046 = vrot.slane %v3658, 6
        %v4047 = vsel %vm3747, %v4039, %v4046
        %v4048 = vrot.slane %v3659, 6
        %v4049 = vsel %vm3747, %v4040, %v4048
        %v4050 = vrot.slane %v3660, 6
        %v4051 = vsel %vm3747, %v4042, %v4050
        %v4052 = vrot.slane %v3661, 6
        %v4053 = vsel %vm3747, %v4044, %v4052
        %v4054 = vrot.slane %v3662, 6
        %v4055 = vsel %vm3747, %v4046, %v4054
        %v4056 = vrot.slane %v3663, 6
        %v4057 = vsel %vm3747, %v4048, %v4056
        %v4058 = vrot.slane %v3664, 6
        %v4059 = vsel %vm3747, %v4050, %v4058
        %v4060 = vrot.slane %v3665, 6
        %v4061 = vsel %vm3747, %v4052, %v4060
        %v4062 = vrot.slane %v3666, 6
        %v4063 = vsel %vm3747, %v4054, %v4062
        %v4064 = vrot.slane %v3667, 6
        %v4065 = vsel %vm3747, %v4056, %v4064
        %v4066 = vrot.slane %v3668, 6
        %v4067 = vsel %vm3747, %v4058, %v4066
        %v4068 = vrot.slane %v3669, 6
        %v4069 = vsel %vm3747, %v4060, %v4068
        %v4070 = vrot.slane %v3670, 6
        %v4071 = vsel %vm3747, %v4062, %v4070
        %v4072 = vrot.slane %v3671, 6
        %v4073 = vsel %vm3747, %v4064, %v4072
        %v4074 = vrot.slane %v3672, 6
        %v4075 = vsel %vm3747, %v4066, %v4074
        %v4076 = vrot.slane %v3673, 6
        %v4077 = vsel %vm3747, %v4068, %v4076
        %v4078 = vrot.slane %v3674, 6
        %v4079 = vsel %vm3747, %v4070, %v4078
        %v4080 = vrot.slane %v3675, 6
        %v4081 = vsel %vm3747, %v4072, %v4080
        %v4082 = vrot.slane %v3676, 6
        %v4083 = vsel %vm3747, %v4074, %v4082
        %v4084 = vrot.slane %v3677, 6
        %v4085 = vsel %vm3747, %v4076, %v4084
        %v4086 = vrot.slane %v3678, 6
        %v4087 = vsel %vm3747, %v4078, %v4086
        %v4088 = vrot.slane %v3679, 6
        %v4089 = vsel %vm3747, %v4080, %v4088
        %v4090 = vrot.slane %v3680, 6
        %v4091 = vsel %vm3747, %v4082, %v4090
        %v4092 = vrot.slane %v3681, 6
        %v4093 = vsel %vm3747, %v4084, %v4092
        %v4094 = vrot.slane %v3682, 6
        %v4095 = vsel %vm3747, %v4086, %v4094
        %v4096 = vrot.slane %v3683, 6
        %v4097 = vsel %vm3747, %v4088, %v4096
        %v4098 = vrot.slane %v3684, 6
        %v4099 = vsel %vm3747, %v4090, %v4098
        %v4100 = vrot.slane %v3685, 6
        %v4101 = vsel %vm3747, %v4092, %v4100
        %v4102 = vrot.slane %v3686, 6
        %v4103 = vsel %vm3747, %v4094, %v4102
        %v4104 = vrot.slane %v3687, 6
        %v4105 = vsel %vm3747, %v4096, %v4104
        %v4106 = vrot.slane %v3688, 6
        %v4107 = vsel %vm3747, %v4098, %v4106
        %v4108 = vrot.slane %v3689, 6
        %v4109 = vsel %vm3747, %v4100, %v4108
        %v4110 = vrot.slane %v3690, 6
        %v4111 = vsel %vm3747, %v4102, %v4110
        %v4112 = vrot.slane %v3691, 6
        %v4113 = vsel %vm3747, %v4104, %v4112
        %v4114 = vrot.slane %v3692, 6
        %v4115 = vsel %vm3747, %v4106, %v4114
        %v4116 = vrot.slane %v3693, 6
        %v4117 = vsel %vm3747, %v4108, %v4116
        %v4118 = vrot.slane %v3694, 6
        %v4119 = vsel %vm3747, %v4110, %v4118
        %v4120 = vrot.slane %v3695, 6
        %v4121 = vsel %vm3747, %v4112, %v4120
        %v4122 = vrot.slane %v3696, 6
        %v4123 = vsel %vm3747, %v4114, %v4122
        %v4124 = vrot.slane %v3697, 6
        %v4125 = vsel %vm3747, %v4116, %v4124
        %v4126 = vrot.slane %v3698, 6
        %v4127 = vsel %vm3747, %v4118, %v4126
        %v4176 = vsel %vm3747, 1.0, %v4036
        %v4177 = vsel %vm3747, 1.0, %v4037
        %v4178 = vsel %vm3747, 1.0, %v4038
        %v4179 = vsel %vm3747, 1.0, %v4039
        %v4180 = vmul.f32 %v3651, %v4176
        %v4181 = vmul.f32 %v3652, %v4177
        %v4182 = vmul.f32 %v3653, %v4178
        %v4183 = vmul.f32 %v3654, %v4179
        %v4184 = vmul.f32 %v3655, %v4041
        %v4185 = vmul.f32 %v3656, %v4043
        %v4186 = vmul.f32 %v3657, %v4045
        %v4187 = vmul.f32 %v3658, %v4047
        %v4188 = vmul.f32 %v3659, %v4049
        %v4189 = vmul.f32 %v3660, %v4051
        %v4190 = vmul.f32 %v3661, %v4053
        %v4191 = vmul.f32 %v3662, %v4055
        %v4192 = vmul.f32 %v3663, %v4057
        %v4193 = vmul.f32 %v3664, %v4059
        %v4194 = vmul.f32 %v3665, %v4061
        %v4195 = vmul.f32 %v3666, %v4063
        %v4196 = vmul.f32 %v3667, %v4065
        %v4197 = vmul.f32 %v3668, %v4067
        %v4198 = vmul.f32 %v3669, %v4069
        %v4199 = vmul.f32 %v3670, %v4071
        %v4200 = vmul.f32 %v3671, %v4073
        %v4201 = vmul.f32 %v3672, %v4075
        %v4202 = vmul.f32 %v3673, %v4077
        %v4203 = vmul.f32 %v3674, %v4079
        %v4204 = vmul.f32 %v3675, %v4081
        %v4205 = vmul.f32 %v3676, %v4083
        %v4206 = vmul.f32 %v3677, %v4085
        %v4207 = vmul.f32 %v3678, %v4087
        %v4208 = vmul.f32 %v3679, %v4089
        %v4209 = vmul.f32 %v3680, %v4091
        %v4210 = vmul.f32 %v3681, %v4093
        %v4211 = vmul.f32 %v3682, %v4095
        %v4212 = vmul.f32 %v3683, %v4097
        %v4213 = vmul.f32 %v3684, %v4099
        %v4214 = vmul.f32 %v3685, %v4101
        %v4215 = vmul.f32 %v3686, %v4103
        %v4216 = vmul.f32 %v3687, %v4105
        %v4217 = vmul.f32 %v3688, %v4107
        %v4218 = vmul.f32 %v3689, %v4109
        %v4219 = vmul.f32 %v3690, %v4111
        %v4220 = vmul.f32 %v3691, %v4113
        %v4221 = vmul.f32 %v3692, %v4115
        %v4222 = vmul.f32 %v3693, %v4117
        %v4223 = vmul.f32 %v3694, %v4119
        %v4224 = vmul.f32 %v3695, %v4121
        %v4225 = vmul.f32 %v3696, %v4123
        %v4226 = vmul.f32 %v3697, %v4125
        %v4227 = vmul.f32 %v3698, %v4127
        %vm4276 = vcmask 1043456
        %v4277 = vrot.slane %v3940, 4
        %v4278 = vrot.slane %v3941, 4
        %v4279 = vrot.slane %v3942, 4
        %v4280 = vrot.slane %v3943, 4
        %v4281 = vrot.slane %v3944, 4
        %v4282 = vsel %vm4276, %v4277, %v4281
        %v4283 = vrot.slane %v3945, 4
        %v4284 = vsel %vm4276, %v4278, %v4283
        %v4285 = vrot.slane %v3946, 4
        %v4286 = vsel %vm4276, %v4279, %v4285
        %v4287 = vrot.slane %v3947, 4
        %v4288 = vsel %vm4276, %v4280, %v4287
        %v4289 = vrot.slane %v3948, 4
        %v4290 = vsel %vm4276, %v4281, %v4289
        %v4291 = vrot.slane %v3949, 4
        %v4292 = vsel %vm4276, %v4283, %v4291
        %v4293 = vrot.slane %v3950, 4
        %v4294 = vsel %vm4276, %v4285, %v4293
        %v4295 = vrot.slane %v3951, 4
        %v4296 = vsel %vm4276, %v4287, %v4295
        %v4297 = vrot.slane %v3952, 4
        %v4298 = vsel %vm4276, %v4289, %v4297
        %v4299 = vrot.slane %v3953, 4
        %v4300 = vsel %vm4276, %v4291, %v4299
        %v4301 = vrot.slane %v3954, 4
        %v4302 = vsel %vm4276, %v4293, %v4301
        %v4303 = vrot.slane %v3955, 4
        %v4304 = vsel %vm4276, %v4295, %v4303
        %v4305 = vrot.slane %v3956, 4
        %v4306 = vsel %vm4276, %v4297, %v4305
        %v4307 = vrot.slane %v3957, 4
        %v4308 = vsel %vm4276, %v4299, %v4307
        %v4309 = vrot.slane %v3958, 4
        %v4310 = vsel %vm4276, %v4301, %v4309
        %v4311 = vrot.slane %v3959, 4
        %v4312 = vsel %vm4276, %v4303, %v4311
        %v4313 = vrot.slane %v3960, 4
        %v4314 = vsel %vm4276, %v4305, %v4313
        %v4315 = vrot.slane %v3961, 4
        %v4316 = vsel %vm4276, %v4307, %v4315
        %v4317 = vrot.slane %v3962, 4
        %v4318 = vsel %vm4276, %v4309, %v4317
        %v4319 = vrot.slane %v3963, 4
        %v4320 = vsel %vm4276, %v4311, %v4319
        %v4321 = vrot.slane %v3964, 4
        %v4322 = vsel %vm4276, %v4313, %v4321
        %v4323 = vrot.slane %v3965, 4
        %v4324 = vsel %vm4276, %v4315, %v4323
        %v4325 = vrot.slane %v3966, 4
        %v4326 = vsel %vm4276, %v4317, %v4325
        %v4327 = vrot.slane %v3967, 4
        %v4328 = vsel %vm4276, %v4319, %v4327
        %v4329 = vrot.slane %v3968, 4
        %v4330 = vsel %vm4276, %v4321, %v4329
        %v4331 = vrot.slane %v3969, 4
        %v4332 = vsel %vm4276, %v4323, %v4331
        %v4333 = vrot.slane %v3970, 4
        %v4334 = vsel %vm4276, %v4325, %v4333
        %v4335 = vrot.slane %v3971, 4
        %v4336 = vsel %vm4276, %v4327, %v4335
        %v4337 = vrot.slane %v3972, 4
        %v4338 = vsel %vm4276, %v4329, %v4337
        %v4339 = vrot.slane %v3973, 4
        %v4340 = vsel %vm4276, %v4331, %v4339
        %v4341 = vrot.slane %v3974, 4
        %v4342 = vsel %vm4276, %v4333, %v4341
        %v4343 = vrot.slane %v3975, 4
        %v4344 = vsel %vm4276, %v4335, %v4343
        %v4345 = vrot.slane %v3976, 4
        %v4346 = vsel %vm4276, %v4337, %v4345
        %v4347 = vrot.slane %v3977, 4
        %v4348 = vsel %vm4276, %v4339, %v4347
        %v4349 = vrot.slane %v3978, 4
        %v4350 = vsel %vm4276, %v4341, %v4349
        %v4351 = vrot.slane %v3979, 4
        %v4352 = vsel %vm4276, %v4343, %v4351
        %v4353 = vrot.slane %v3980, 4
        %v4354 = vsel %vm4276, %v4345, %v4353
        %v4355 = vrot.slane %v3981, 4
        %v4356 = vsel %vm4276, %v4347, %v4355
        %v4357 = vrot.slane %v3982, 4
        %v4358 = vsel %vm4276, %v4349, %v4357
        %v4359 = vrot.slane %v3983, 4
        %v4360 = vsel %vm4276, %v4351, %v4359
        %v4361 = vrot.slane %v3984, 4
        %v4362 = vsel %vm4276, %v4353, %v4361
        %v4363 = vrot.slane %v3985, 4
        %v4364 = vsel %vm4276, %v4355, %v4363
        %v4365 = vrot.slane %v3986, 4
        %v4366 = vsel %vm4276, %v4357, %v4365
        %v4367 = vrot.slane %v3987, 4
        %v4368 = vsel %vm4276, %v4359, %v4367
        %v4417 = vsel %vm4276, 0.0, %v4277
        %v4418 = vsel %vm4276, 0.0, %v4278
        %v4419 = vsel %vm4276, 0.0, %v4279
        %v4420 = vsel %vm4276, 0.0, %v4280
        %v4421 = vmul.f32 %v4180, %v4417
        %v4422 = vmul.f32 %v4181, %v4418
        %v4423 = vmul.f32 %v4182, %v4419
        %v4424 = vmul.f32 %v4183, %v4420
        %v4425 = vmul.f32 %v4184, %v4282
        %v4426 = vmul.f32 %v4185, %v4284
        %v4427 = vmul.f32 %v4186, %v4286
        %v4428 = vmul.f32 %v4187, %v4288
        %v4429 = vmul.f32 %v4188, %v4290
        %v4430 = vmul.f32 %v4189, %v4292
        %v4431 = vmul.f32 %v4190, %v4294
        %v4432 = vmul.f32 %v4191, %v4296
        %v4433 = vmul.f32 %v4192, %v4298
        %v4434 = vmul.f32 %v4193, %v4300
        %v4435 = vmul.f32 %v4194, %v4302
        %v4436 = vmul.f32 %v4195, %v4304
        %v4437 = vmul.f32 %v4196, %v4306
        %v4438 = vmul.f32 %v4197, %v4308
        %v4439 = vmul.f32 %v4198, %v4310
        %v4440 = vmul.f32 %v4199, %v4312
        %v4441 = vmul.f32 %v4200, %v4314
        %v4442 = vmul.f32 %v4201, %v4316
        %v4443 = vmul.f32 %v4202, %v4318
        %v4444 = vmul.f32 %v4203, %v4320
        %v4445 = vmul.f32 %v4204, %v4322
        %v4446 = vmul.f32 %v4205, %v4324
        %v4447 = vmul.f32 %v4206, %v4326
        %v4448 = vmul.f32 %v4207, %v4328
        %v4449 = vmul.f32 %v4208, %v4330
        %v4450 = vmul.f32 %v4209, %v4332
        %v4451 = vmul.f32 %v4210, %v4334
        %v4452 = vmul.f32 %v4211, %v4336
        %v4453 = vmul.f32 %v4212, %v4338
        %v4454 = vmul.f32 %v4213, %v4340
        %v4455 = vmul.f32 %v4214, %v4342
        %v4456 = vmul.f32 %v4215, %v4344
        %v4457 = vmul.f32 %v4216, %v4346
        %v4458 = vmul.f32 %v4217, %v4348
        %v4459 = vmul.f32 %v4218, %v4350
        %v4460 = vmul.f32 %v4219, %v4352
        %v4461 = vmul.f32 %v4220, %v4354
        %v4462 = vmul.f32 %v4221, %v4356
        %v4463 = vmul.f32 %v4222, %v4358
        %v4464 = vmul.f32 %v4223, %v4360
        %v4465 = vmul.f32 %v4224, %v4362
        %v4466 = vmul.f32 %v4225, %v4364
        %v4467 = vmul.f32 %v4226, %v4366
        %v4468 = vmul.f32 %v4227, %v4368
        %v4469 = vadd.f32 %v4421, %v3940
        %v4470 = vadd.f32 %v4422, %v3941
        %v4471 = vadd.f32 %v4423, %v3942
        %v4472 = vadd.f32 %v4424, %v3943
        %v4473 = vadd.f32 %v4425, %v3944
        %v4474 = vadd.f32 %v4426, %v3945
        %v4475 = vadd.f32 %v4427, %v3946
        %v4476 = vadd.f32 %v4428, %v3947
        %v4477 = vadd.f32 %v4429, %v3948
        %v4478 = vadd.f32 %v4430, %v3949
        %v4479 = vadd.f32 %v4431, %v3950
        %v4480 = vadd.f32 %v4432, %v3951
        %v4481 = vadd.f32 %v4433, %v3952
        %v4482 = vadd.f32 %v4434, %v3953
        %v4483 = vadd.f32 %v4435, %v3954
        %v4484 = vadd.f32 %v4436, %v3955
        %v4485 = vadd.f32 %v4437, %v3956
        %v4486 = vadd.f32 %v4438, %v3957
        %v4487 = vadd.f32 %v4439, %v3958
        %v4488 = vadd.f32 %v4440, %v3959
        %v4489 = vadd.f32 %v4441, %v3960
        %v4490 = vadd.f32 %v4442, %v3961
        %v4491 = vadd.f32 %v4443, %v3962
        %v4492 = vadd.f32 %v4444, %v3963
        %v4493 = vadd.f32 %v4445, %v3964
        %v4494 = vadd.f32 %v4446, %v3965
        %v4495 = vadd.f32 %v4447, %v3966
        %v4496 = vadd.f32 %v4448, %v3967
        %v4497 = vadd.f32 %v4449, %v3968
        %v4498 = vadd.f32 %v4450, %v3969
        %v4499 = vadd.f32 %v4451, %v3970
        %v4500 = vadd.f32 %v4452, %v3971
        %v4501 = vadd.f32 %v4453, %v3972
        %v4502 = vadd.f32 %v4454, %v3973
        %v4503 = vadd.f32 %v4455, %v3974
        %v4504 = vadd.f32 %v4456, %v3975
        %v4505 = vadd.f32 %v4457, %v3976
        %v4506 = vadd.f32 %v4458, %v3977
        %v4507 = vadd.f32 %v4459, %v3978
        %v4508 = vadd.f32 %v4460, %v3979
        %v4509 = vadd.f32 %v4461, %v3980
        %v4510 = vadd.f32 %v4462, %v3981
        %v4511 = vadd.f32 %v4463, %v3982
        %v4512 = vadd.f32 %v4464, %v3983
        %v4513 = vadd.f32 %v4465, %v3984
        %v4514 = vadd.f32 %v4466, %v3985
        %v4515 = vadd.f32 %v4467, %v3986
        %v4516 = vadd.f32 %v4468, %v3987
        %v4565 = vrot.slane %v4180, 4
        %v4566 = vrot.slane %v4181, 4
        %v4567 = vrot.slane %v4182, 4
        %v4568 = vrot.slane %v4183, 4
        %v4569 = vrot.slane %v4184, 4
        %v4570 = vsel %vm4276, %v4565, %v4569
        %v4571 = vrot.slane %v4185, 4
        %v4572 = vsel %vm4276, %v4566, %v4571
        %v4573 = vrot.slane %v4186, 4
        %v4574 = vsel %vm4276, %v4567, %v4573
        %v4575 = vrot.slane %v4187, 4
        %v4576 = vsel %vm4276, %v4568, %v4575
        %v4577 = vrot.slane %v4188, 4
        %v4578 = vsel %vm4276, %v4569, %v4577
        %v4579 = vrot.slane %v4189, 4
        %v4580 = vsel %vm4276, %v4571, %v4579
        %v4581 = vrot.slane %v4190, 4
        %v4582 = vsel %vm4276, %v4573, %v4581
        %v4583 = vrot.slane %v4191, 4
        %v4584 = vsel %vm4276, %v4575, %v4583
        %v4585 = vrot.slane %v4192, 4
        %v4586 = vsel %vm4276, %v4577, %v4585
        %v4587 = vrot.slane %v4193, 4
        %v4588 = vsel %vm4276, %v4579, %v4587
        %v4589 = vrot.slane %v4194, 4
        %v4590 = vsel %vm4276, %v4581, %v4589
        %v4591 = vrot.slane %v4195, 4
        %v4592 = vsel %vm4276, %v4583, %v4591
        %v4593 = vrot.slane %v4196, 4
        %v4594 = vsel %vm4276, %v4585, %v4593
        %v4595 = vrot.slane %v4197, 4
        %v4596 = vsel %vm4276, %v4587, %v4595
        %v4597 = vrot.slane %v4198, 4
        %v4598 = vsel %vm4276, %v4589, %v4597
        %v4599 = vrot.slane %v4199, 4
        %v4600 = vsel %vm4276, %v4591, %v4599
        %v4601 = vrot.slane %v4200, 4
        %v4602 = vsel %vm4276, %v4593, %v4601
        %v4603 = vrot.slane %v4201, 4
        %v4604 = vsel %vm4276, %v4595, %v4603
        %v4605 = vrot.slane %v4202, 4
        %v4606 = vsel %vm4276, %v4597, %v4605
        %v4607 = vrot.slane %v4203, 4
        %v4608 = vsel %vm4276, %v4599, %v4607
        %v4609 = vrot.slane %v4204, 4
        %v4610 = vsel %vm4276, %v4601, %v4609
        %v4611 = vrot.slane %v4205, 4
        %v4612 = vsel %vm4276, %v4603, %v4611
        %v4613 = vrot.slane %v4206, 4
        %v4614 = vsel %vm4276, %v4605, %v4613
        %v4615 = vrot.slane %v4207, 4
        %v4616 = vsel %vm4276, %v4607, %v4615
        %v4617 = vrot.slane %v4208, 4
        %v4618 = vsel %vm4276, %v4609, %v4617
        %v4619 = vrot.slane %v4209, 4
        %v4620 = vsel %vm4276, %v4611, %v4619
        %v4621 = vrot.slane %v4210, 4
        %v4622 = vsel %vm4276, %v4613, %v4621
        %v4623 = vrot.slane %v4211, 4
        %v4624 = vsel %vm4276, %v4615, %v4623
        %v4625 = vrot.slane %v4212, 4
        %v4626 = vsel %vm4276, %v4617, %v4625
        %v4627 = vrot.slane %v4213, 4
        %v4628 = vsel %vm4276, %v4619, %v4627
        %v4629 = vrot.slane %v4214, 4
        %v4630 = vsel %vm4276, %v4621, %v4629
        %v4631 = vrot.slane %v4215, 4
        %v4632 = vsel %vm4276, %v4623, %v4631
        %v4633 = vrot.slane %v4216, 4
        %v4634 = vsel %vm4276, %v4625, %v4633
        %v4635 = vrot.slane %v4217, 4
        %v4636 = vsel %vm4276, %v4627, %v4635
        %v4637 = vrot.slane %v4218, 4
        %v4638 = vsel %vm4276, %v4629, %v4637
        %v4639 = vrot.slane %v4219, 4
        %v4640 = vsel %vm4276, %v4631, %v4639
        %v4641 = vrot.slane %v4220, 4
        %v4642 = vsel %vm4276, %v4633, %v4641
        %v4643 = vrot.slane %v4221, 4
        %v4644 = vsel %vm4276, %v4635, %v4643
        %v4645 = vrot.slane %v4222, 4
        %v4646 = vsel %vm4276, %v4637, %v4645
        %v4647 = vrot.slane %v4223, 4
        %v4648 = vsel %vm4276, %v4639, %v4647
        %v4649 = vrot.slane %v4224, 4
        %v4650 = vsel %vm4276, %v4641, %v4649
        %v4651 = vrot.slane %v4225, 4
        %v4652 = vsel %vm4276, %v4643, %v4651
        %v4653 = vrot.slane %v4226, 4
        %v4654 = vsel %vm4276, %v4645, %v4653
        %v4655 = vrot.slane %v4227, 4
        %v4656 = vsel %vm4276, %v4647, %v4655
        %v4705 = vsel %vm4276, 1.0, %v4565
        %v4706 = vsel %vm4276, 1.0, %v4566
        %v4707 = vsel %vm4276, 1.0, %v4567
        %v4708 = vsel %vm4276, 1.0, %v4568
        %v4709 = vmul.f32 %v4180, %v4705
        %v4710 = vmul.f32 %v4181, %v4706
        %v4711 = vmul.f32 %v4182, %v4707
        %v4712 = vmul.f32 %v4183, %v4708
        %v4713 = vmul.f32 %v4184, %v4570
        %v4714 = vmul.f32 %v4185, %v4572
        %v4715 = vmul.f32 %v4186, %v4574
        %v4716 = vmul.f32 %v4187, %v4576
        %v4717 = vmul.f32 %v4188, %v4578
        %v4718 = vmul.f32 %v4189, %v4580
        %v4719 = vmul.f32 %v4190, %v4582
        %v4720 = vmul.f32 %v4191, %v4584
        %v4721 = vmul.f32 %v4192, %v4586
        %v4722 = vmul.f32 %v4193, %v4588
        %v4723 = vmul.f32 %v4194, %v4590
        %v4724 = vmul.f32 %v4195, %v4592
        %v4725 = vmul.f32 %v4196, %v4594
        %v4726 = vmul.f32 %v4197, %v4596
        %v4727 = vmul.f32 %v4198, %v4598
        %v4728 = vmul.f32 %v4199, %v4600
        %v4729 = vmul.f32 %v4200, %v4602
        %v4730 = vmul.f32 %v4201, %v4604
        %v4731 = vmul.f32 %v4202, %v4606
        %v4732 = vmul.f32 %v4203, %v4608
        %v4733 = vmul.f32 %v4204, %v4610
        %v4734 = vmul.f32 %v4205, %v4612
        %v4735 = vmul.f32 %v4206, %v4614
        %v4736 = vmul.f32 %v4207, %v4616
        %v4737 = vmul.f32 %v4208, %v4618
        %v4738 = vmul.f32 %v4209, %v4620
        %v4739 = vmul.f32 %v4210, %v4622
        %v4740 = vmul.f32 %v4211, %v4624
        %v4741 = vmul.f32 %v4212, %v4626
        %v4742 = vmul.f32 %v4213, %v4628
        %v4743 = vmul.f32 %v4214, %v4630
        %v4744 = vmul.f32 %v4215, %v4632
        %v4745 = vmul.f32 %v4216, %v4634
        %v4746 = vmul.f32 %v4217, %v4636
        %v4747 = vmul.f32 %v4218, %v4638
        %v4748 = vmul.f32 %v4219, %v4640
        %v4749 = vmul.f32 %v4220, %v4642
        %v4750 = vmul.f32 %v4221, %v4644
        %v4751 = vmul.f32 %v4222, %v4646
        %v4752 = vmul.f32 %v4223, %v4648
        %v4753 = vmul.f32 %v4224, %v4650
        %v4754 = vmul.f32 %v4225, %v4652
        %v4755 = vmul.f32 %v4226, %v4654
        %v4756 = vmul.f32 %v4227, %v4656
        %v4757 = vmul.f32 %v4709, 0.0
        %v4758 = vmul.f32 %v4710, 0.0
        %v4759 = vmul.f32 %v4711, 0.0
        %v4760 = vmul.f32 %v4712, 0.0
        %v4761 = vmul.f32 %v4713, %v4469
        %v4762 = vmul.f32 %v4714, %v4470
        %v4763 = vmul.f32 %v4715, %v4471
        %v4764 = vmul.f32 %v4716, %v4472
        %v4765 = vmul.f32 %v4717, %v4473
        %v4766 = vmul.f32 %v4718, %v4474
        %v4767 = vmul.f32 %v4719, %v4475
        %v4768 = vmul.f32 %v4720, %v4476
        %v4769 = vmul.f32 %v4721, %v4477
        %v4770 = vmul.f32 %v4722, %v4478
        %v4771 = vmul.f32 %v4723, %v4479
        %v4772 = vmul.f32 %v4724, %v4480
        %v4773 = vmul.f32 %v4725, %v4481
        %v4774 = vmul.f32 %v4726, %v4482
        %v4775 = vmul.f32 %v4727, %v4483
        %v4776 = vmul.f32 %v4728, %v4484
        %v4777 = vmul.f32 %v4729, %v4485
        %v4778 = vmul.f32 %v4730, %v4486
        %v4779 = vmul.f32 %v4731, %v4487
        %v4780 = vmul.f32 %v4732, %v4488
        %v4781 = vmul.f32 %v4733, %v4489
        %v4782 = vmul.f32 %v4734, %v4490
        %v4783 = vmul.f32 %v4735, %v4491
        %v4784 = vmul.f32 %v4736, %v4492
        %v4785 = vmul.f32 %v4737, %v4493
        %v4786 = vmul.f32 %v4738, %v4494
        %v4787 = vmul.f32 %v4739, %v4495
        %v4788 = vmul.f32 %v4740, %v4496
        %v4789 = vmul.f32 %v4741, %v4497
        %v4790 = vmul.f32 %v4742, %v4498
        %v4791 = vmul.f32 %v4743, %v4499
        %v4792 = vmul.f32 %v4744, %v4500
        %v4793 = vmul.f32 %v4745, %v4501
        %v4794 = vmul.f32 %v4746, %v4502
        %v4795 = vmul.f32 %v4747, %v4503
        %v4796 = vmul.f32 %v4748, %v4504
        %v4797 = vmul.f32 %v4749, %v4505
        %v4798 = vmul.f32 %v4750, %v4506
        %v4799 = vmul.f32 %v4751, %v4507
        %v4800 = vmul.f32 %v4752, %v4508
        %v4801 = vmul.f32 %v4753, %v4509
        %v4802 = vmul.f32 %v4754, %v4510
        %v4803 = vmul.f32 %v4755, %v4511
        %v4804 = vmul.f32 %v4756, %v4512
        %v4805 = vadd.f32 %v4757, %v4469
        %v4806 = vadd.f32 %v4758, %v4470
        %v4807 = vadd.f32 %v4759, %v4471
        %v4808 = vadd.f32 %v4760, %v4472
        %v4809 = vadd.f32 %v4761, %v4473
        %v4810 = vadd.f32 %v4762, %v4474
        %v4811 = vadd.f32 %v4763, %v4475
        %v4812 = vadd.f32 %v4764, %v4476
        %v4813 = vadd.f32 %v4765, %v4477
        %v4814 = vadd.f32 %v4766, %v4478
        %v4815 = vadd.f32 %v4767, %v4479
        %v4816 = vadd.f32 %v4768, %v4480
        %v4817 = vadd.f32 %v4769, %v4481
        %v4818 = vadd.f32 %v4770, %v4482
        %v4819 = vadd.f32 %v4771, %v4483
        %v4820 = vadd.f32 %v4772, %v4484
        %v4821 = vadd.f32 %v4773, %v4485
        %v4822 = vadd.f32 %v4774, %v4486
        %v4823 = vadd.f32 %v4775, %v4487
        %v4824 = vadd.f32 %v4776, %v4488
        %v4825 = vadd.f32 %v4777, %v4489
        %v4826 = vadd.f32 %v4778, %v4490
        %v4827 = vadd.f32 %v4779, %v4491
        %v4828 = vadd.f32 %v4780, %v4492
        %v4829 = vadd.f32 %v4781, %v4493
        %v4830 = vadd.f32 %v4782, %v4494
        %v4831 = vadd.f32 %v4783, %v4495
        %v4832 = vadd.f32 %v4784, %v4496
        %v4833 = vadd.f32 %v4785, %v4497
        %v4834 = vadd.f32 %v4786, %v4498
        %v4835 = vadd.f32 %v4787, %v4499
        %v4836 = vadd.f32 %v4788, %v4500
        %v4837 = vadd.f32 %v4789, %v4501
        %v4838 = vadd.f32 %v4790, %v4502
        %v4839 = vadd.f32 %v4791, %v4503
        %v4840 = vadd.f32 %v4792, %v4504
        %v4841 = vadd.f32 %v4793, %v4505
        %v4842 = vadd.f32 %v4794, %v4506
        %v4843 = vadd.f32 %v4795, %v4507
        %v4844 = vadd.f32 %v4796, %v4508
        %v4845 = vadd.f32 %v4797, %v4509
        %v4846 = vadd.f32 %v4798, %v4510
        %v4847 = vadd.f32 %v4799, %v4511
        %v4848 = vadd.f32 %v4800, %v4512
        %v4849 = vadd.f32 %v4801, %v4513
        %v4850 = vadd.f32 %v4802, %v4514
        %v4851 = vadd.f32 %v4803, %v4515
        %v4852 = vadd.f32 %v4804, %v4516
        %v4853 = vmul.f32 %v4713, %v4709
        %v4854 = vmul.f32 %v4714, %v4710
        %v4855 = vmul.f32 %v4715, %v4711
        %v4856 = vmul.f32 %v4716, %v4712
        %v4857 = vmul.f32 %v4717, %v4713
        %v4858 = vmul.f32 %v4718, %v4714
        %v4859 = vmul.f32 %v4719, %v4715
        %v4860 = vmul.f32 %v4720, %v4716
        %v4861 = vmul.f32 %v4721, %v4717
        %v4862 = vmul.f32 %v4722, %v4718
        %v4863 = vmul.f32 %v4723, %v4719
        %v4864 = vmul.f32 %v4724, %v4720
        %v4865 = vmul.f32 %v4725, %v4721
        %v4866 = vmul.f32 %v4726, %v4722
        %v4867 = vmul.f32 %v4727, %v4723
        %v4868 = vmul.f32 %v4728, %v4724
        %v4869 = vmul.f32 %v4729, %v4725
        %v4870 = vmul.f32 %v4730, %v4726
        %v4871 = vmul.f32 %v4731, %v4727
        %v4872 = vmul.f32 %v4732, %v4728
        %v4873 = vmul.f32 %v4733, %v4729
        %v4874 = vmul.f32 %v4734, %v4730
        %v4875 = vmul.f32 %v4735, %v4731
        %v4876 = vmul.f32 %v4736, %v4732
        %v4877 = vmul.f32 %v4737, %v4733
        %v4878 = vmul.f32 %v4738, %v4734
        %v4879 = vmul.f32 %v4739, %v4735
        %v4880 = vmul.f32 %v4740, %v4736
        %v4881 = vmul.f32 %v4741, %v4737
        %v4882 = vmul.f32 %v4742, %v4738
        %v4883 = vmul.f32 %v4743, %v4739
        %v4884 = vmul.f32 %v4744, %v4740
        %v4885 = vmul.f32 %v4745, %v4741
        %v4886 = vmul.f32 %v4746, %v4742
        %v4887 = vmul.f32 %v4747, %v4743
        %v4888 = vmul.f32 %v4748, %v4744
        %v4889 = vmul.f32 %v4749, %v4745
        %v4890 = vmul.f32 %v4750, %v4746
        %v4891 = vmul.f32 %v4751, %v4747
        %v4892 = vmul.f32 %v4752, %v4748
        %v4893 = vmul.f32 %v4753, %v4749
        %v4894 = vmul.f32 %v4754, %v4750
        %v4895 = vmul.f32 %v4755, %v4751
        %v4896 = vmul.f32 %v4756, %v4752
        %v4897 = vmul.f32 %v4853, 0.0
        %v4898 = vmul.f32 %v4854, 0.0
        %v4899 = vmul.f32 %v4855, 0.0
        %v4900 = vmul.f32 %v4856, 0.0
        %v4901 = vmul.f32 %v4857, %v4805
        %v4902 = vmul.f32 %v4858, %v4806
        %v4903 = vmul.f32 %v4859, %v4807
        %v4904 = vmul.f32 %v4860, %v4808
        %v4905 = vmul.f32 %v4861, %v4809
        %v4906 = vmul.f32 %v4862, %v4810
        %v4907 = vmul.f32 %v4863, %v4811
        %v4908 = vmul.f32 %v4864, %v4812
        %v4909 = vmul.f32 %v4865, %v4813
        %v4910 = vmul.f32 %v4866, %v4814
        %v4911 = vmul.f32 %v4867, %v4815
        %v4912 = vmul.f32 %v4868, %v4816
        %v4913 = vmul.f32 %v4869, %v4817
        %v4914 = vmul.f32 %v4870, %v4818
        %v4915 = vmul.f32 %v4871, %v4819
        %v4916 = vmul.f32 %v4872, %v4820
        %v4917 = vmul.f32 %v4873, %v4821
        %v4918 = vmul.f32 %v4874, %v4822
        %v4919 = vmul.f32 %v4875, %v4823
        %v4920 = vmul.f32 %v4876, %v4824
        %v4921 = vmul.f32 %v4877, %v4825
        %v4922 = vmul.f32 %v4878, %v4826
        %v4923 = vmul.f32 %v4879, %v4827
        %v4924 = vmul.f32 %v4880, %v4828
        %v4925 = vmul.f32 %v4881, %v4829
        %v4926 = vmul.f32 %v4882, %v4830
        %v4927 = vmul.f32 %v4883, %v4831
        %v4928 = vmul.f32 %v4884, %v4832
        %v4929 = vmul.f32 %v4885, %v4833
        %v4930 = vmul.f32 %v4886, %v4834
        %v4931 = vmul.f32 %v4887, %v4835
        %v4932 = vmul.f32 %v4888, %v4836
        %v4933 = vmul.f32 %v4889, %v4837
        %v4934 = vmul.f32 %v4890, %v4838
        %v4935 = vmul.f32 %v4891, %v4839
        %v4936 = vmul.f32 %v4892, %v4840
        %v4937 = vmul.f32 %v4893, %v4841
        %v4938 = vmul.f32 %v4894, %v4842
        %v4939 = vmul.f32 %v4895, %v4843
        %v4940 = vmul.f32 %v4896, %v4844
        %v4941 = vadd.f32 %v4757, %v4805
        %v4942 = vadd.f32 %v4758, %v4806
        %v4943 = vadd.f32 %v4759, %v4807
        %v4944 = vadd.f32 %v4760, %v4808
        %v4945 = vadd.f32 %v4897, %v4809
        %v4946 = vadd.f32 %v4898, %v4810
        %v4947 = vadd.f32 %v4899, %v4811
        %v4948 = vadd.f32 %v4900, %v4812
        %v4949 = vadd.f32 %v4901, %v4813
        %v4950 = vadd.f32 %v4902, %v4814
        %v4951 = vadd.f32 %v4903, %v4815
        %v4952 = vadd.f32 %v4904, %v4816
        %v4953 = vadd.f32 %v4905, %v4817
        %v4954 = vadd.f32 %v4906, %v4818
        %v4955 = vadd.f32 %v4907, %v4819
        %v4956 = vadd.f32 %v4908, %v4820
        %v4957 = vadd.f32 %v4909, %v4821
        %v4958 = vadd.f32 %v4910, %v4822
        %v4959 = vadd.f32 %v4911, %v4823
        %v4960 = vadd.f32 %v4912, %v4824
        %v4961 = vadd.f32 %v4913, %v4825
        %v4962 = vadd.f32 %v4914, %v4826
        %v4963 = vadd.f32 %v4915, %v4827
        %v4964 = vadd.f32 %v4916, %v4828
        %v4965 = vadd.f32 %v4917, %v4829
        %v4966 = vadd.f32 %v4918, %v4830
        %v4967 = vadd.f32 %v4919, %v4831
        %v4968 = vadd.f32 %v4920, %v4832
        %v4969 = vadd.f32 %v4921, %v4833
        %v4970 = vadd.f32 %v4922, %v4834
        %v4971 = vadd.f32 %v4923, %v4835
        %v4972 = vadd.f32 %v4924, %v4836
        %v4973 = vadd.f32 %v4925, %v4837
        %v4974 = vadd.f32 %v4926, %v4838
        %v4975 = vadd.f32 %v4927, %v4839
        %v4976 = vadd.f32 %v4928, %v4840
        %v4977 = vadd.f32 %v4929, %v4841
        %v4978 = vadd.f32 %v4930, %v4842
        %v4979 = vadd.f32 %v4931, %v4843
        %v4980 = vadd.f32 %v4932, %v4844
        %v4981 = vadd.f32 %v4933, %v4845
        %v4982 = vadd.f32 %v4934, %v4846
        %v4983 = vadd.f32 %v4935, %v4847
        %v4984 = vadd.f32 %v4936, %v4848
        %v4985 = vadd.f32 %v4937, %v4849
        %v4986 = vadd.f32 %v4938, %v4850
        %v4987 = vadd.f32 %v4939, %v4851
        %v4988 = vadd.f32 %v4940, %v4852
        %v4989 = vmul.f32 %v4857, %v4709
        %v4990 = vmul.f32 %v4858, %v4710
        %v4991 = vmul.f32 %v4859, %v4711
        %v4992 = vmul.f32 %v4860, %v4712
        %v4993 = vmul.f32 %v4861, %v4853
        %v4994 = vmul.f32 %v4862, %v4854
        %v4995 = vmul.f32 %v4863, %v4855
        %v4996 = vmul.f32 %v4864, %v4856
        %v4997 = vmul.f32 %v4865, %v4857
        %v4998 = vmul.f32 %v4866, %v4858
        %v4999 = vmul.f32 %v4867, %v4859
        %v5000 = vmul.f32 %v4868, %v4860
        %v5001 = vmul.f32 %v4869, %v4861
        %v5002 = vmul.f32 %v4870, %v4862
        %v5003 = vmul.f32 %v4871, %v4863
        %v5004 = vmul.f32 %v4872, %v4864
        %v5005 = vmul.f32 %v4873, %v4865
        %v5006 = vmul.f32 %v4874, %v4866
        %v5007 = vmul.f32 %v4875, %v4867
        %v5008 = vmul.f32 %v4876, %v4868
        %v5009 = vmul.f32 %v4877, %v4869
        %v5010 = vmul.f32 %v4878, %v4870
        %v5011 = vmul.f32 %v4879, %v4871
        %v5012 = vmul.f32 %v4880, %v4872
        %v5013 = vmul.f32 %v4881, %v4873
        %v5014 = vmul.f32 %v4882, %v4874
        %v5015 = vmul.f32 %v4883, %v4875
        %v5016 = vmul.f32 %v4884, %v4876
        %v5017 = vmul.f32 %v4885, %v4877
        %v5018 = vmul.f32 %v4886, %v4878
        %v5019 = vmul.f32 %v4887, %v4879
        %v5020 = vmul.f32 %v4888, %v4880
        %v5021 = vmul.f32 %v4889, %v4881
        %v5022 = vmul.f32 %v4890, %v4882
        %v5023 = vmul.f32 %v4891, %v4883
        %v5024 = vmul.f32 %v4892, %v4884
        %v5025 = vmul.f32 %v4893, %v4885
        %v5026 = vmul.f32 %v4894, %v4886
        %v5027 = vmul.f32 %v4895, %v4887
        %v5028 = vmul.f32 %v4896, %v4888
        %v5029 = vmul.f32 %v4989, 0.0
        %v5030 = vmul.f32 %v4990, 0.0
        %v5031 = vmul.f32 %v4991, 0.0
        %v5032 = vmul.f32 %v4992, 0.0
        %v5033 = vmul.f32 %v4993, 0.0
        %v5034 = vmul.f32 %v4994, 0.0
        %v5035 = vmul.f32 %v4995, 0.0
        %v5036 = vmul.f32 %v4996, 0.0
        %v5037 = vmul.f32 %v4997, %v4941
        %v5038 = vmul.f32 %v4998, %v4942
        %v5039 = vmul.f32 %v4999, %v4943
        %v5040 = vmul.f32 %v5000, %v4944
        %v5041 = vmul.f32 %v5001, %v4945
        %v5042 = vmul.f32 %v5002, %v4946
        %v5043 = vmul.f32 %v5003, %v4947
        %v5044 = vmul.f32 %v5004, %v4948
        %v5045 = vmul.f32 %v5005, %v4949
        %v5046 = vmul.f32 %v5006, %v4950
        %v5047 = vmul.f32 %v5007, %v4951
        %v5048 = vmul.f32 %v5008, %v4952
        %v5049 = vmul.f32 %v5009, %v4953
        %v5050 = vmul.f32 %v5010, %v4954
        %v5051 = vmul.f32 %v5011, %v4955
        %v5052 = vmul.f32 %v5012, %v4956
        %v5053 = vmul.f32 %v5013, %v4957
        %v5054 = vmul.f32 %v5014, %v4958
        %v5055 = vmul.f32 %v5015, %v4959
        %v5056 = vmul.f32 %v5016, %v4960
        %v5057 = vmul.f32 %v5017, %v4961
        %v5058 = vmul.f32 %v5018, %v4962
        %v5059 = vmul.f32 %v5019, %v4963
        %v5060 = vmul.f32 %v5020, %v4964
        %v5061 = vmul.f32 %v5021, %v4965
        %v5062 = vmul.f32 %v5022, %v4966
        %v5063 = vmul.f32 %v5023, %v4967
        %v5064 = vmul.f32 %v5024, %v4968
        %v5065 = vmul.f32 %v5025, %v4969
        %v5066 = vmul.f32 %v5026, %v4970
        %v5067 = vmul.f32 %v5027, %v4971
        %v5068 = vmul.f32 %v5028, %v4972
        %v5069 = vadd.f32 %v4757, %v4941
        %v5070 = vadd.f32 %v4758, %v4942
        %v5071 = vadd.f32 %v4759, %v4943
        %v5072 = vadd.f32 %v4760, %v4944
        %v5073 = vadd.f32 %v4897, %v4945
        %v5074 = vadd.f32 %v4898, %v4946
        %v5075 = vadd.f32 %v4899, %v4947
        %v5076 = vadd.f32 %v4900, %v4948
        %v5077 = vadd.f32 %v5029, %v4949
        %v5078 = vadd.f32 %v5030, %v4950
        %v5079 = vadd.f32 %v5031, %v4951
        %v5080 = vadd.f32 %v5032, %v4952
        %v5081 = vadd.f32 %v5033, %v4953
        %v5082 = vadd.f32 %v5034, %v4954
        %v5083 = vadd.f32 %v5035, %v4955
        %v5084 = vadd.f32 %v5036, %v4956
        %v5085 = vadd.f32 %v5037, %v4957
        %v5086 = vadd.f32 %v5038, %v4958
        %v5087 = vadd.f32 %v5039, %v4959
        %v5088 = vadd.f32 %v5040, %v4960
        %v5089 = vadd.f32 %v5041, %v4961
        %v5090 = vadd.f32 %v5042, %v4962
        %v5091 = vadd.f32 %v5043, %v4963
        %v5092 = vadd.f32 %v5044, %v4964
        %v5093 = vadd.f32 %v5045, %v4965
        %v5094 = vadd.f32 %v5046, %v4966
        %v5095 = vadd.f32 %v5047, %v4967
        %v5096 = vadd.f32 %v5048, %v4968
        %v5097 = vadd.f32 %v5049, %v4969
        %v5098 = vadd.f32 %v5050, %v4970
        %v5099 = vadd.f32 %v5051, %v4971
        %v5100 = vadd.f32 %v5052, %v4972
        %v5101 = vadd.f32 %v5053, %v4973
        %v5102 = vadd.f32 %v5054, %v4974
        %v5103 = vadd.f32 %v5055, %v4975
        %v5104 = vadd.f32 %v5056, %v4976
        %v5105 = vadd.f32 %v5057, %v4977
        %v5106 = vadd.f32 %v5058, %v4978
        %v5107 = vadd.f32 %v5059, %v4979
        %v5108 = vadd.f32 %v5060, %v4980
        %v5109 = vadd.f32 %v5061, %v4981
        %v5110 = vadd.f32 %v5062, %v4982
        %v5111 = vadd.f32 %v5063, %v4983
        %v5112 = vadd.f32 %v5064, %v4984
        %v5113 = vadd.f32 %v5065, %v4985
        %v5114 = vadd.f32 %v5066, %v4986
        %v5115 = vadd.f32 %v5067, %v4987
        %v5116 = vadd.f32 %v5068, %v4988
        %v5117 = vmul.f32 %v4997, %v4709
        %v5118 = vmul.f32 %v4998, %v4710
        %v5119 = vmul.f32 %v4999, %v4711
        %v5120 = vmul.f32 %v5000, %v4712
        %v5121 = vmul.f32 %v5001, %v4853
        %v5122 = vmul.f32 %v5002, %v4854
        %v5123 = vmul.f32 %v5003, %v4855
        %v5124 = vmul.f32 %v5004, %v4856
        %v5125 = vmul.f32 %v5005, %v4989
        %v5126 = vmul.f32 %v5006, %v4990
        %v5127 = vmul.f32 %v5007, %v4991
        %v5128 = vmul.f32 %v5008, %v4992
        %v5129 = vmul.f32 %v5009, %v4993
        %v5130 = vmul.f32 %v5010, %v4994
        %v5131 = vmul.f32 %v5011, %v4995
        %v5132 = vmul.f32 %v5012, %v4996
        %v5133 = vmul.f32 %v5013, %v4997
        %v5134 = vmul.f32 %v5014, %v4998
        %v5135 = vmul.f32 %v5015, %v4999
        %v5136 = vmul.f32 %v5016, %v5000
        %v5137 = vmul.f32 %v5017, %v5001
        %v5138 = vmul.f32 %v5018, %v5002
        %v5139 = vmul.f32 %v5019, %v5003
        %v5140 = vmul.f32 %v5020, %v5004
        %v5141 = vmul.f32 %v5021, %v5005
        %v5142 = vmul.f32 %v5022, %v5006
        %v5143 = vmul.f32 %v5023, %v5007
        %v5144 = vmul.f32 %v5024, %v5008
        %v5145 = vmul.f32 %v5025, %v5009
        %v5146 = vmul.f32 %v5026, %v5010
        %v5147 = vmul.f32 %v5027, %v5011
        %v5148 = vmul.f32 %v5028, %v5012
        %v5149 = vmul.f32 %v5117, 0.0
        %v5150 = vmul.f32 %v5118, 0.0
        %v5151 = vmul.f32 %v5119, 0.0
        %v5152 = vmul.f32 %v5120, 0.0
        %v5153 = vmul.f32 %v5121, 0.0
        %v5154 = vmul.f32 %v5122, 0.0
        %v5155 = vmul.f32 %v5123, 0.0
        %v5156 = vmul.f32 %v5124, 0.0
        %v5157 = vmul.f32 %v5125, 0.0
        %v5158 = vmul.f32 %v5126, 0.0
        %v5159 = vmul.f32 %v5127, 0.0
        %v5160 = vmul.f32 %v5128, 0.0
        %v5161 = vmul.f32 %v5129, 0.0
        %v5162 = vmul.f32 %v5130, 0.0
        %v5163 = vmul.f32 %v5131, 0.0
        %v5164 = vmul.f32 %v5132, 0.0
        %v5165 = vmul.f32 %v5133, %v5069
        %v5166 = vmul.f32 %v5134, %v5070
        %v5167 = vmul.f32 %v5135, %v5071
        %v5168 = vmul.f32 %v5136, %v5072
        %v5169 = vmul.f32 %v5137, %v5073
        %v5170 = vmul.f32 %v5138, %v5074
        %v5171 = vmul.f32 %v5139, %v5075
        %v5172 = vmul.f32 %v5140, %v5076
        %v5173 = vmul.f32 %v5141, %v5077
        %v5174 = vmul.f32 %v5142, %v5078
        %v5175 = vmul.f32 %v5143, %v5079
        %v5176 = vmul.f32 %v5144, %v5080
        %v5177 = vmul.f32 %v5145, %v5081
        %v5178 = vmul.f32 %v5146, %v5082
        %v5179 = vmul.f32 %v5147, %v5083
        %v5180 = vmul.f32 %v5148, %v5084
        %v5181 = vadd.f32 %v5149, %v5085
        %v5182 = vadd.f32 %v5150, %v5086
        %v5183 = vadd.f32 %v5151, %v5087
        %v5184 = vadd.f32 %v5152, %v5088
        %v5185 = vadd.f32 %v5153, %v5089
        %v5186 = vadd.f32 %v5154, %v5090
        %v5187 = vadd.f32 %v5155, %v5091
        %v5188 = vadd.f32 %v5156, %v5092
        %v5189 = vadd.f32 %v5157, %v5093
        %v5190 = vadd.f32 %v5158, %v5094
        %v5191 = vadd.f32 %v5159, %v5095
        %v5192 = vadd.f32 %v5160, %v5096
        %v5193 = vadd.f32 %v5161, %v5097
        %v5194 = vadd.f32 %v5162, %v5098
        %v5195 = vadd.f32 %v5163, %v5099
        %v5196 = vadd.f32 %v5164, %v5100
        %v5197 = vadd.f32 %v5165, %v5101
        %v5198 = vadd.f32 %v5166, %v5102
        %v5199 = vadd.f32 %v5167, %v5103
        %v5200 = vadd.f32 %v5168, %v5104
        %v5201 = vadd.f32 %v5169, %v5105
        %v5202 = vadd.f32 %v5170, %v5106
        %v5203 = vadd.f32 %v5171, %v5107
        %v5204 = vadd.f32 %v5172, %v5108
        %v5205 = vadd.f32 %v5173, %v5109
        %v5206 = vadd.f32 %v5174, %v5110
        %v5207 = vadd.f32 %v5175, %v5111
        %v5208 = vadd.f32 %v5176, %v5112
        %v5209 = vadd.f32 %v5177, %v5113
        %v5210 = vadd.f32 %v5178, %v5114
        %v5211 = vadd.f32 %v5179, %v5115
        %v5212 = vadd.f32 %v5180, %v5116
        %5213 = vrot.lane.b32.xlu0 %v2029, 80
        %v5214 = vpop.permute.xlu0 %5213
        %5215 = vrot.lane.b32.xlu0 %v2032, 80
        %v5216 = vpop.permute.xlu0 %5215
        %5217 = vrot.lane.b32.xlu0 %v2035, 80
        %v5218 = vpop.permute.xlu0 %5217
        %5219 = vrot.lane.b32.xlu0 %v2038, 80
        %v5220 = vpop.permute.xlu0 %5219
        %5221 = vrot.lane.b32.xlu0 %v2041, 80
        %v5222 = vpop.permute.xlu0 %5221
        %5223 = vrot.lane.b32.xlu0 %v2044, 80
        %v5224 = vpop.permute.xlu0 %5223
        %5225 = vrot.lane.b32.xlu0 %v2047, 80
        %v5226 = vpop.permute.xlu0 %5225
        %5227 = vrot.lane.b32.xlu0 %v2050, 80
        %v5228 = vpop.permute.xlu0 %5227
        %v5229 = vsel %vm1821, %v5214, 0
        %v5231 = vsel %vm1821, %v5216, 0
        %v5233 = vsel %vm1821, %v5218, 0
        %v5235 = vsel %vm1821, %v5220, 0
        %v5237 = vsel %vm1821, %v5222, 0
        %v5239 = vsel %vm1821, %v5224, 0
        %v5241 = vsel %vm1821, %v5226, 0
        %v5243 = vsel %vm1821, %v5228, 0
        %5245 = vmatpush.msra.mxu0 0.0
        %5246 = vmatpush.msra.mxu0 0.0
        %5247 = vmatpush.msra.mxu0 0.0
        %5248 = vmatpush.msra.mxu0 0.0
        %5249 = vmatpush.msra.mxu0 0.0
        %5250 = vmatpush.msra.mxu0 0.0
        %5251 = vmatpush.msra.mxu0 0.0
        %5252 = vmatpush.msra.mxu0 0.0
        %5253 = vmatpush.msra.mxu0 0.0
        %5254 = vmatpush.msra.mxu0 0.0
        %5255 = vmatpush.msra.mxu0 0.0
        %5256 = vmatpush.msra.mxu0 0.0
        %5257 = vmatpush.msra.mxu0 0.0
        %5258 = vmatpush.msra.mxu0 0.0
        %5259 = vmatpush.msra.mxu0 %v2692
        %5260 = vmatpush.msra.mxu0 %v2688
        %5261 = vmatmul.f32.gmra.mxu0 %v5229
        %v5262 = vpop.f32.mrf.mxu0
        %v5263 = vadd.f32 0.0, %v5262
        %5264 = vmatmul.f32.gmra.mxu0 %v5231
        %v5265 = vpop.f32.mrf.mxu0
        %v5266 = vadd.f32 0.0, %v5265
        %5267 = vmatmul.f32.gmra.mxu0 %v5233
        %v5268 = vpop.f32.mrf.mxu0
        %v5269 = vadd.f32 0.0, %v5268
        %5270 = vmatmul.f32.gmra.mxu0 %v5235
        %v5271 = vpop.f32.mrf.mxu0
        %v5272 = vadd.f32 0.0, %v5271
        %5273 = vmatmul.f32.gmra.mxu0 %v5237
        %v5274 = vpop.f32.mrf.mxu0
        %v5275 = vadd.f32 0.0, %v5274
        %5276 = vmatmul.f32.gmra.mxu0 %v5239
        %v5277 = vpop.f32.mrf.mxu0
        %v5278 = vadd.f32 0.0, %v5277
        %5279 = vmatmul.f32.gmra.mxu0 %v5241
        %v5280 = vpop.f32.mrf.mxu0
        %v5281 = vadd.f32 0.0, %v5280
        %5282 = vmatmul.f32.gmra.mxu0 %v5243
        %v5283 = vpop.f32.mrf.mxu0
        %v5284 = vadd.f32 0.0, %v5283
        %5285 = vdwg.mxu0
        %5286 = vmatpush.msra.mxu0 0.0
        %5287 = vmatpush.msra.mxu0 0.0
        %5288 = vmatpush.msra.mxu0 0.0
        %5289 = vmatpush.msra.mxu0 0.0
        %5290 = vmatpush.msra.mxu0 0.0
        %5291 = vmatpush.msra.mxu0 0.0
        %5292 = vmatpush.msra.mxu0 0.0
        %5293 = vmatpush.msra.mxu0 0.0
        %5294 = vmatpush.msra.mxu0 0.0
        %5295 = vmatpush.msra.mxu0 0.0
        %5296 = vmatpush.msra.mxu0 0.0
        %5297 = vmatpush.msra.mxu0 0.0
        %5298 = vmatpush.msra.mxu0 0.0
        %5299 = vmatpush.msra.mxu0 0.0
        %5300 = vmatpush.msra.mxu0 %v2693
        %5301 = vmatpush.msra.mxu0 %v2689
        %5302 = vmatmul.f32.gmra.mxu0 %v5229
        %v5303 = vpop.f32.mrf.mxu0
        %v5304 = vadd.f32 0.0, %v5303
        %5305 = vmatmul.f32.gmra.mxu0 %v5231
        %v5306 = vpop.f32.mrf.mxu0
        %v5307 = vadd.f32 0.0, %v5306
        %5308 = vmatmul.f32.gmra.mxu0 %v5233
        %v5309 = vpop.f32.mrf.mxu0
        %v5310 = vadd.f32 0.0, %v5309
        %5311 = vmatmul.f32.gmra.mxu0 %v5235
        %v5312 = vpop.f32.mrf.mxu0
        %v5313 = vadd.f32 0.0, %v5312
        %5314 = vmatmul.f32.gmra.mxu0 %v5237
        %v5315 = vpop.f32.mrf.mxu0
        %v5316 = vadd.f32 0.0, %v5315
        %5317 = vmatmul.f32.gmra.mxu0 %v5239
        %v5318 = vpop.f32.mrf.mxu0
        %v5319 = vadd.f32 0.0, %v5318
        %5320 = vmatmul.f32.gmra.mxu0 %v5241
        %v5321 = vpop.f32.mrf.mxu0
        %v5322 = vadd.f32 0.0, %v5321
        %5323 = vmatmul.f32.gmra.mxu0 %v5243
        %v5324 = vpop.f32.mrf.mxu0
        %v5325 = vadd.f32 0.0, %v5324
        %5326 = vdwg.mxu0
        %5327 = vmatpush.msra.mxu0 0.0
        %5328 = vmatpush.msra.mxu0 0.0
        %5329 = vmatpush.msra.mxu0 0.0
        %5330 = vmatpush.msra.mxu0 0.0
        %5331 = vmatpush.msra.mxu0 0.0
        %5332 = vmatpush.msra.mxu0 0.0
        %5333 = vmatpush.msra.mxu0 0.0
        %5334 = vmatpush.msra.mxu0 0.0
        %5335 = vmatpush.msra.mxu0 0.0
        %5336 = vmatpush.msra.mxu0 0.0
        %5337 = vmatpush.msra.mxu0 0.0
        %5338 = vmatpush.msra.mxu0 0.0
        %5339 = vmatpush.msra.mxu0 0.0
        %5340 = vmatpush.msra.mxu0 0.0
        %5341 = vmatpush.msra.mxu0 %v2694
        %5342 = vmatpush.msra.mxu0 %v2690
        %5343 = vmatmul.f32.gmra.mxu0 %v5229
        %v5344 = vpop.f32.mrf.mxu0
        %v5345 = vadd.f32 0.0, %v5344
        %5346 = vmatmul.f32.gmra.mxu0 %v5231
        %v5347 = vpop.f32.mrf.mxu0
        %v5348 = vadd.f32 0.0, %v5347
        %5349 = vmatmul.f32.gmra.mxu0 %v5233
        %v5350 = vpop.f32.mrf.mxu0
        %v5351 = vadd.f32 0.0, %v5350
        %5352 = vmatmul.f32.gmra.mxu0 %v5235
        %v5353 = vpop.f32.mrf.mxu0
        %v5354 = vadd.f32 0.0, %v5353
        %5355 = vmatmul.f32.gmra.mxu0 %v5237
        %v5356 = vpop.f32.mrf.mxu0
        %v5357 = vadd.f32 0.0, %v5356
        %5358 = vmatmul.f32.gmra.mxu0 %v5239
        %v5359 = vpop.f32.mrf.mxu0
        %v5360 = vadd.f32 0.0, %v5359
        %5361 = vmatmul.f32.gmra.mxu0 %v5241
        %v5362 = vpop.f32.mrf.mxu0
        %v5363 = vadd.f32 0.0, %v5362
        %5364 = vmatmul.f32.gmra.mxu0 %v5243
        %v5365 = vpop.f32.mrf.mxu0
        %v5366 = vadd.f32 0.0, %v5365
        %5367 = vdwg.mxu0
        %5368 = vmatpush.msra.mxu0 0.0
        %5369 = vmatpush.msra.mxu0 0.0
        %5370 = vmatpush.msra.mxu0 0.0
        %5371 = vmatpush.msra.mxu0 0.0
        %5372 = vmatpush.msra.mxu0 0.0
        %5373 = vmatpush.msra.mxu0 0.0
        %5374 = vmatpush.msra.mxu0 0.0
        %5375 = vmatpush.msra.mxu0 0.0
        %5376 = vmatpush.msra.mxu0 0.0
        %5377 = vmatpush.msra.mxu0 0.0
        %5378 = vmatpush.msra.mxu0 0.0
        %5379 = vmatpush.msra.mxu0 0.0
        %5380 = vmatpush.msra.mxu0 0.0
        %5381 = vmatpush.msra.mxu0 0.0
        %5382 = vmatpush.msra.mxu0 %v2695
        %5383 = vmatpush.msra.mxu0 %v2691
        %5384 = vmatmul.f32.gmra.mxu0 %v5229
        %v5385 = vpop.f32.mrf.mxu0
        %v5386 = vadd.f32 0.0, %v5385
        %5387 = vmatmul.f32.gmra.mxu0 %v5231
        %v5388 = vpop.f32.mrf.mxu0
        %v5389 = vadd.f32 0.0, %v5388
        %5390 = vmatmul.f32.gmra.mxu0 %v5233
        %v5391 = vpop.f32.mrf.mxu0
        %v5392 = vadd.f32 0.0, %v5391
        %5393 = vmatmul.f32.gmra.mxu0 %v5235
        %v5394 = vpop.f32.mrf.mxu0
        %v5395 = vadd.f32 0.0, %v5394
        %5396 = vmatmul.f32.gmra.mxu0 %v5237
        %v5397 = vpop.f32.mrf.mxu0
        %v5398 = vadd.f32 0.0, %v5397
        %5399 = vmatmul.f32.gmra.mxu0 %v5239
        %v5400 = vpop.f32.mrf.mxu0
        %v5401 = vadd.f32 0.0, %v5400
        %5402 = vmatmul.f32.gmra.mxu0 %v5241
        %v5403 = vpop.f32.mrf.mxu0
        %v5404 = vadd.f32 0.0, %v5403
        %5405 = vmatmul.f32.gmra.mxu0 %v5243
        %v5406 = vpop.f32.mrf.mxu0
        %v5407 = vadd.f32 0.0, %v5406
        %5408 = vdwg.mxu0
        %v5409 = vmul.f32 %v5263, %v5181
        %v5410 = vmul.f32 %v5304, %v5182
        %v5411 = vmul.f32 %v5345, %v5183
        %v5412 = vmul.f32 %v5386, %v5184
        %v5413 = vmul.f32 %v5266, %v5185
        %v5414 = vmul.f32 %v5307, %v5186
        %v5415 = vmul.f32 %v5348, %v5187
        %v5416 = vmul.f32 %v5389, %v5188
        %v5417 = vmul.f32 %v5269, %v5189
        %v5418 = vmul.f32 %v5310, %v5190
        %v5419 = vmul.f32 %v5351, %v5191
        %v5420 = vmul.f32 %v5392, %v5192
        %v5421 = vmul.f32 %v5272, %v5193
        %v5422 = vmul.f32 %v5313, %v5194
        %v5423 = vmul.f32 %v5354, %v5195
        %v5424 = vmul.f32 %v5395, %v5196
        %v5425 = vmul.f32 %v5275, %v5197
        %v5426 = vmul.f32 %v5316, %v5198
        %v5427 = vmul.f32 %v5357, %v5199
        %v5428 = vmul.f32 %v5398, %v5200
        %v5429 = vmul.f32 %v5278, %v5201
        %v5430 = vmul.f32 %v5319, %v5202
        %v5431 = vmul.f32 %v5360, %v5203
        %v5432 = vmul.f32 %v5401, %v5204
        %v5433 = vmul.f32 %v5281, %v5205
        %v5434 = vmul.f32 %v5322, %v5206
        %v5435 = vmul.f32 %v5363, %v5207
        %v5436 = vmul.f32 %v5404, %v5208
        %v5437 = vmul.f32 %v5284, %v5209
        %v5438 = vmul.f32 %v5325, %v5210
        %v5439 = vmul.f32 %v5366, %v5211
        %v5440 = vmul.f32 %v5407, %v5212
        %v5441 = vld [vmem:[%s15] sm:$0xff]
        %v5442 = vld [vmem:[%s15 + $0x8] sm:$0xff]
        %v5443 = vld [vmem:[%s15 + $0x10] sm:$0xff]
        %v5444 = vld [vmem:[%s15 + $0x18] sm:$0xff]
        %v5445 = vld [vmem:[%s15 + $0x20] sm:$0xff]
        %v5446 = vld [vmem:[%s15 + $0x28] sm:$0xff]
        %v5447 = vld [vmem:[%s15 + $0x30] sm:$0xff]
        %v5448 = vld [vmem:[%s15 + $0x38] sm:$0xff]
        %v5449 = vld [vmem:[%s15 + $0x40] sm:$0xff]
        %v5450 = vld [vmem:[%s15 + $0x48] sm:$0xff]
        %v5451 = vld [vmem:[%s15 + $0x50] sm:$0xff]
        %v5452 = vld [vmem:[%s15 + $0x58] sm:$0xff]
        %v5453 = vld [vmem:[%s15 + $0x60] sm:$0xff]
        %v5454 = vld [vmem:[%s15 + $0x68] sm:$0xff]
        %v5455 = vld [vmem:[%s15 + $0x70] sm:$0xff]
        %v5456 = vld [vmem:[%s15 + $0x78] sm:$0xff]
        %v5457 = vld [vmem:[%s15 + $0x80] sm:$0xff]
        %v5458 = vld [vmem:[%s15 + $0x88] sm:$0xff]
        %v5459 = vld [vmem:[%s15 + $0x90] sm:$0xff]
        %v5460 = vld [vmem:[%s15 + $0x98] sm:$0xff]
        %v5461 = vld [vmem:[%s15 + $0xa0] sm:$0xff]
        %v5462 = vld [vmem:[%s15 + $0xa8] sm:$0xff]
        %v5463 = vld [vmem:[%s15 + $0xb0] sm:$0xff]
        %v5464 = vld [vmem:[%s15 + $0xb8] sm:$0xff]
        %v5465 = vld [vmem:[%s15 + $0xc0] sm:$0xff]
        %v5466 = vld [vmem:[%s15 + $0xc8] sm:$0xff]
        %v5467 = vld [vmem:[%s15 + $0xd0] sm:$0xff]
        %v5468 = vld [vmem:[%s15 + $0xd8] sm:$0xff]
        %v5469 = vld [vmem:[%s15 + $0xe0] sm:$0xff]
        %v5470 = vld [vmem:[%s15 + $0xe8] sm:$0xff]
        %v5471 = vld [vmem:[%s15 + $0xf0] sm:$0xff]
        %v5472 = vld [vmem:[%s15 + $0xf8] sm:$0xff]
        %v5473 = vld [vmem:[%s15 + $0x100] sm:$0xff]
        %v5474 = vld [vmem:[%s15 + $0x108] sm:$0xff]
        %v5475 = vld [vmem:[%s15 + $0x110] sm:$0xff]
        %v5476 = vld [vmem:[%s15 + $0x118] sm:$0xff]
        %v5477 = vld [vmem:[%s15 + $0x120] sm:$0xff]
        %v5478 = vld [vmem:[%s15 + $0x128] sm:$0xff]
        %v5479 = vld [vmem:[%s15 + $0x130] sm:$0xff]
        %v5480 = vld [vmem:[%s15 + $0x138] sm:$0xff]
        %v5481 = vld [vmem:[%s15 + $0x140] sm:$0xff]
        %v5482 = vld [vmem:[%s15 + $0x148] sm:$0xff]
        %v5483 = vld [vmem:[%s15 + $0x150] sm:$0xff]
        %v5484 = vld [vmem:[%s15 + $0x158] sm:$0xff]
        %v5485 = vld [vmem:[%s15 + $0x160] sm:$0xff]
        %v5486 = vld [vmem:[%s15 + $0x168] sm:$0xff]
        %v5487 = vld [vmem:[%s15 + $0x170] sm:$0xff]
        %v5488 = vld [vmem:[%s15 + $0x178] sm:$0xff]
        %v5489 = vld [vmem:[%s15 + $0x180] sm:$0xff]
        %v5490 = vld [vmem:[%s15 + $0x188] sm:$0xff]
        %v5491 = vld [vmem:[%s15 + $0x190] sm:$0xff]
        %v5492 = vld [vmem:[%s15 + $0x198] sm:$0xff]
        %v5493 = vld [vmem:[%s15 + $0x1a0] sm:$0xff]
        %v5494 = vld [vmem:[%s15 + $0x1a8] sm:$0xff]
        %v5495 = vld [vmem:[%s15 + $0x1b0] sm:$0xff]
        %v5496 = vld [vmem:[%s15 + $0x1b8] sm:$0xff]
        %v5497 = vld [vmem:[%s15 + $0x1c0] sm:$0xff]
        %v5498 = vld [vmem:[%s15 + $0x1c8] sm:$0xff]
        %v5499 = vld [vmem:[%s15 + $0x1d0] sm:$0xff]
        %v5500 = vld [vmem:[%s15 + $0x1d8] sm:$0xff]
        %v5501 = vld [vmem:[%s15 + $0x1e0] sm:$0xff]
        %v5502 = vld [vmem:[%s15 + $0x1e8] sm:$0xff]
        %v5503 = vld [vmem:[%s15 + $0x1f0] sm:$0xff]
        %v5504 = vld [vmem:[%s15 + $0x1f8] sm:$0xff]
        %v5505 = vld [vmem:[%s16] sm:$0x1]
        %v5507 = vperm.slane %v5505, 0
        %v5509 = vmul.f32 %v1579, %v5507
        %v5510 = vmul.f32 %v1580, %v5507
        %v5511 = vmul.f32 %v1581, %v5507
        %v5512 = vmul.f32 %v1582, %v5507
        %v5513 = vmul.f32 %v1583, %v5507
        %v5514 = vmul.f32 %v1584, %v5507
        %v5515 = vmul.f32 %v1585, %v5507
        %v5516 = vmul.f32 %v1586, %v5507
        %5517 = vmatpush.msra.mxu0 %v5456
        %5518 = vmatpush.msra.mxu0 %v5455
        %5519 = vmatpush.msra.mxu0 %v5454
        %5520 = vmatpush.msra.mxu0 %v5453
        %5521 = vmatpush.msra.mxu0 %v5452
        %5522 = vmatpush.msra.mxu0 %v5451
        %5523 = vmatpush.msra.mxu0 %v5450
        %5524 = vmatpush.msra.mxu0 %v5449
        %5525 = vmatpush.msra.mxu0 %v5448
        %5526 = vmatpush.msra.mxu0 %v5447
        %5527 = vmatpush.msra.mxu0 %v5446
        %5528 = vmatpush.msra.mxu0 %v5445
        %5529 = vmatpush.msra.mxu0 %v5444
        %5530 = vmatpush.msra.mxu0 %v5443
        %5531 = vmatpush.msra.mxu0 %v5442
        %5532 = vmatpush.msra.mxu0 %v5441
        %5533 = vmatmul.f32.gmra.mxu0 %v5409
        %v5534 = vpop.f32.mrf.mxu0
        %v5535 = vadd.f32 %v5509, %v5534
        %5536 = vmatmul.f32.gmra.mxu0 %v5413
        %v5537 = vpop.f32.mrf.mxu0
        %v5538 = vadd.f32 %v5510, %v5537
        %5539 = vmatmul.f32.gmra.mxu0 %v5417
        %v5540 = vpop.f32.mrf.mxu0
        %v5541 = vadd.f32 %v5511, %v5540
        %5542 = vmatmul.f32.gmra.mxu0 %v5421
        %v5543 = vpop.f32.mrf.mxu0
        %v5544 = vadd.f32 %v5512, %v5543
        %5545 = vmatmul.f32.gmra.mxu0 %v5425
        %v5546 = vpop.f32.mrf.mxu0
        %v5547 = vadd.f32 %v5513, %v5546
        %5548 = vmatmul.f32.gmra.mxu0 %v5429
        %v5549 = vpop.f32.mrf.mxu0
        %v5550 = vadd.f32 %v5514, %v5549
        %5551 = vmatmul.f32.gmra.mxu0 %v5433
        %v5552 = vpop.f32.mrf.mxu0
        %v5553 = vadd.f32 %v5515, %v5552
        %5554 = vmatmul.f32.gmra.mxu0 %v5437
        %v5555 = vpop.f32.mrf.mxu0
        %v5556 = vadd.f32 %v5516, %v5555
        %5557 = vdwg.mxu0
        %5558 = vmatpush.msra.mxu0 %v5472
        %5559 = vmatpush.msra.mxu0 %v5471
        %5560 = vmatpush.msra.mxu0 %v5470
        %5561 = vmatpush.msra.mxu0 %v5469
        %5562 = vmatpush.msra.mxu0 %v5468
        %5563 = vmatpush.msra.mxu0 %v5467
        %5564 = vmatpush.msra.mxu0 %v5466
        %5565 = vmatpush.msra.mxu0 %v5465
        %5566 = vmatpush.msra.mxu0 %v5464
        %5567 = vmatpush.msra.mxu0 %v5463
        %5568 = vmatpush.msra.mxu0 %v5462
        %5569 = vmatpush.msra.mxu0 %v5461
        %5570 = vmatpush.msra.mxu0 %v5460
        %5571 = vmatpush.msra.mxu0 %v5459
        %5572 = vmatpush.msra.mxu0 %v5458
        %5573 = vmatpush.msra.mxu0 %v5457
        %5574 = vmatmul.f32.gmra.mxu0 %v5410
        %v5575 = vpop.f32.mrf.mxu0
        %v5576 = vadd.f32 %v5535, %v5575
        %5577 = vmatmul.f32.gmra.mxu0 %v5414
        %v5578 = vpop.f32.mrf.mxu0
        %v5579 = vadd.f32 %v5538, %v5578
        %5580 = vmatmul.f32.gmra.mxu0 %v5418
        %v5581 = vpop.f32.mrf.mxu0
        %v5582 = vadd.f32 %v5541, %v5581
        %5583 = vmatmul.f32.gmra.mxu0 %v5422
        %v5584 = vpop.f32.mrf.mxu0
        %v5585 = vadd.f32 %v5544, %v5584
        %5586 = vmatmul.f32.gmra.mxu0 %v5426
        %v5587 = vpop.f32.mrf.mxu0
        %v5588 = vadd.f32 %v5547, %v5587
        %5589 = vmatmul.f32.gmra.mxu0 %v5430
        %v5590 = vpop.f32.mrf.mxu0
        %v5591 = vadd.f32 %v5550, %v5590
        %5592 = vmatmul.f32.gmra.mxu0 %v5434
        %v5593 = vpop.f32.mrf.mxu0
        %v5594 = vadd.f32 %v5553, %v5593
        %5595 = vmatmul.f32.gmra.mxu0 %v5438
        %v5596 = vpop.f32.mrf.mxu0
        %v5597 = vadd.f32 %v5556, %v5596
        %5598 = vdwg.mxu0
        %5599 = vmatpush.msra.mxu0 %v5488
        %5600 = vmatpush.msra.mxu0 %v5487
        %5601 = vmatpush.msra.mxu0 %v5486
        %5602 = vmatpush.msra.mxu0 %v5485
        %5603 = vmatpush.msra.mxu0 %v5484
        %5604 = vmatpush.msra.mxu0 %v5483
        %5605 = vmatpush.msra.mxu0 %v5482
        %5606 = vmatpush.msra.mxu0 %v5481
        %5607 = vmatpush.msra.mxu0 %v5480
        %5608 = vmatpush.msra.mxu0 %v5479
        %5609 = vmatpush.msra.mxu0 %v5478
        %5610 = vmatpush.msra.mxu0 %v5477
        %5611 = vmatpush.msra.mxu0 %v5476
        %5612 = vmatpush.msra.mxu0 %v5475
        %5613 = vmatpush.msra.mxu0 %v5474
        %5614 = vmatpush.msra.mxu0 %v5473
        %5615 = vmatmul.f32.gmra.mxu0 %v5411
        %v5616 = vpop.f32.mrf.mxu0
        %v5617 = vadd.f32 %v5576, %v5616
        %5618 = vmatmul.f32.gmra.mxu0 %v5415
        %v5619 = vpop.f32.mrf.mxu0
        %v5620 = vadd.f32 %v5579, %v5619
        %5621 = vmatmul.f32.gmra.mxu0 %v5419
        %v5622 = vpop.f32.mrf.mxu0
        %v5623 = vadd.f32 %v5582, %v5622
        %5624 = vmatmul.f32.gmra.mxu0 %v5423
        %v5625 = vpop.f32.mrf.mxu0
        %v5626 = vadd.f32 %v5585, %v5625
        %5627 = vmatmul.f32.gmra.mxu0 %v5427
        %v5628 = vpop.f32.mrf.mxu0
        %v5629 = vadd.f32 %v5588, %v5628
        %5630 = vmatmul.f32.gmra.mxu0 %v5431
        %v5631 = vpop.f32.mrf.mxu0
        %v5632 = vadd.f32 %v5591, %v5631
        %5633 = vmatmul.f32.gmra.mxu0 %v5435
        %v5634 = vpop.f32.mrf.mxu0
        %v5635 = vadd.f32 %v5594, %v5634
        %5636 = vmatmul.f32.gmra.mxu0 %v5439
        %v5637 = vpop.f32.mrf.mxu0
        %v5638 = vadd.f32 %v5597, %v5637
        %5639 = vdwg.mxu0
        %5640 = vmatpush.msra.mxu0 %v5504
        %5641 = vmatpush.msra.mxu0 %v5503
        %5642 = vmatpush.msra.mxu0 %v5502
        %5643 = vmatpush.msra.mxu0 %v5501
        %5644 = vmatpush.msra.mxu0 %v5500
        %5645 = vmatpush.msra.mxu0 %v5499
        %5646 = vmatpush.msra.mxu0 %v5498
        %5647 = vmatpush.msra.mxu0 %v5497
        %5648 = vmatpush.msra.mxu0 %v5496
        %5649 = vmatpush.msra.mxu0 %v5495
        %5650 = vmatpush.msra.mxu0 %v5494
        %5651 = vmatpush.msra.mxu0 %v5493
        %5652 = vmatpush.msra.mxu0 %v5492
        %5653 = vmatpush.msra.mxu0 %v5491
        %5654 = vmatpush.msra.mxu0 %v5490
        %5655 = vmatpush.msra.mxu0 %v5489
        %5656 = vmatmul.f32.gmra.mxu0 %v5412
        %v5657 = vpop.f32.mrf.mxu0
        %v5658 = vadd.f32 %v5617, %v5657
        %5659 = vmatmul.f32.gmra.mxu0 %v5416
        %v5660 = vpop.f32.mrf.mxu0
        %v5661 = vadd.f32 %v5620, %v5660
        %5662 = vmatmul.f32.gmra.mxu0 %v5420
        %v5663 = vpop.f32.mrf.mxu0
        %v5664 = vadd.f32 %v5623, %v5663
        %5665 = vmatmul.f32.gmra.mxu0 %v5424
        %v5666 = vpop.f32.mrf.mxu0
        %v5667 = vadd.f32 %v5626, %v5666
        %5668 = vmatmul.f32.gmra.mxu0 %v5428
        %v5669 = vpop.f32.mrf.mxu0
        %v5670 = vadd.f32 %v5629, %v5669
        %5671 = vmatmul.f32.gmra.mxu0 %v5432
        %v5672 = vpop.f32.mrf.mxu0
        %v5673 = vadd.f32 %v5632, %v5672
        %5674 = vmatmul.f32.gmra.mxu0 %v5436
        %v5675 = vpop.f32.mrf.mxu0
        %v5676 = vadd.f32 %v5635, %v5675
        %5677 = vmatmul.f32.gmra.mxu0 %v5440
        %v5678 = vpop.f32.mrf.mxu0
        %v5679 = vadd.f32 %v5638, %v5678
        %5680 = vdwg.mxu0
        %v5681 = vsel %vm640, %v5658, 0.0
        %5682 = vadd.xlane.f32.xlu0 %v5681
        %v5683 = vpop.xlane.xlu0 %5682
        %v5684 = vsel %vm640, %v5661, 0.0
        %5685 = vadd.xlane.f32.xlu0 %v5684
        %v5686 = vpop.xlane.xlu0 %5685
        %v5687 = vsel %vm640, %v5664, 0.0
        %5688 = vadd.xlane.f32.xlu0 %v5687
        %v5689 = vpop.xlane.xlu0 %5688
        %v5690 = vsel %vm640, %v5667, 0.0
        %5691 = vadd.xlane.f32.xlu0 %v5690
        %v5692 = vpop.xlane.xlu0 %5691
        %v5693 = vsel %vm640, %v5670, 0.0
        %5694 = vadd.xlane.f32.xlu0 %v5693
        %v5695 = vpop.xlane.xlu0 %5694
        %v5696 = vsel %vm640, %v5673, 0.0
        %5697 = vadd.xlane.f32.xlu0 %v5696
        %v5698 = vpop.xlane.xlu0 %5697
        %v5699 = vsel %vm640, %v5676, 0.0
        %5700 = vadd.xlane.f32.xlu0 %v5699
        %v5701 = vpop.xlane.xlu0 %5700
        %v5702 = vsel %vm640, %v5679, 0.0
        %5703 = vadd.xlane.f32.xlu0 %v5702
        %v5704 = vpop.xlane.xlu0 %5703
        %v5705 = vrcp.pop 32.0
        %v5706 = vmul.f32 32.0, %v5705
        %v5707 = vsub.f32 1.0, %v5706
        %v5708 = vmul.f32 %v5705, %v5707
        %v5709 = vadd.f32 %v5705, %v5708
        %vm5710 = vweird.f32 %v5705
        %v5711 = vsel %vm5710, %v5705, %v5709
        %v5712 = vmul.f32 %v5683, %v5711
        %v5713 = vmul.f32 %v5686, %v5711
        %v5714 = vmul.f32 %v5689, %v5711
        %v5715 = vmul.f32 %v5692, %v5711
        %v5716 = vmul.f32 %v5695, %v5711
        %v5717 = vmul.f32 %v5698, %v5711
        %v5718 = vmul.f32 %v5701, %v5711
        %v5719 = vmul.f32 %v5704, %v5711
        %v5720 = vsub.f32 %v5658, %v5712
        %v5721 = vsub.f32 %v5661, %v5713
        %v5722 = vsub.f32 %v5664, %v5714
        %v5723 = vsub.f32 %v5667, %v5715
        %v5724 = vsub.f32 %v5670, %v5716
        %v5725 = vsub.f32 %v5673, %v5717
        %v5726 = vsub.f32 %v5676, %v5718
        %v5727 = vsub.f32 %v5679, %v5719
        %v5728 = vmul.f32 %v5720, %v5720
        %v5729 = vmul.f32 %v5721, %v5721
        %v5730 = vmul.f32 %v5722, %v5722
        %v5731 = vmul.f32 %v5723, %v5723
        %v5732 = vmul.f32 %v5724, %v5724
        %v5733 = vmul.f32 %v5725, %v5725
        %v5734 = vmul.f32 %v5726, %v5726
        %v5735 = vmul.f32 %v5727, %v5727
        %v5736 = vsel %vm640, %v5728, 0.0
        %5737 = vadd.xlane.f32.xlu0 %v5736
        %v5738 = vpop.xlane.xlu0 %5737
        %v5739 = vsel %vm640, %v5729, 0.0
        %5740 = vadd.xlane.f32.xlu0 %v5739
        %v5741 = vpop.xlane.xlu0 %5740
        %v5742 = vsel %vm640, %v5730, 0.0
        %5743 = vadd.xlane.f32.xlu0 %v5742
        %v5744 = vpop.xlane.xlu0 %5743
        %v5745 = vsel %vm640, %v5731, 0.0
        %5746 = vadd.xlane.f32.xlu0 %v5745
        %v5747 = vpop.xlane.xlu0 %5746
        %v5748 = vsel %vm640, %v5732, 0.0
        %5749 = vadd.xlane.f32.xlu0 %v5748
        %v5750 = vpop.xlane.xlu0 %5749
        %v5751 = vsel %vm640, %v5733, 0.0
        %5752 = vadd.xlane.f32.xlu0 %v5751
        %v5753 = vpop.xlane.xlu0 %5752
        %v5754 = vsel %vm640, %v5734, 0.0
        %5755 = vadd.xlane.f32.xlu0 %v5754
        %v5756 = vpop.xlane.xlu0 %5755
        %v5757 = vsel %vm640, %v5735, 0.0
        %5758 = vadd.xlane.f32.xlu0 %v5757
        %v5759 = vpop.xlane.xlu0 %5758
        %v5760 = vmul.f32 %v5738, %v5711
        %v5761 = vmul.f32 %v5741, %v5711
        %v5762 = vmul.f32 %v5744, %v5711
        %v5763 = vmul.f32 %v5747, %v5711
        %v5764 = vmul.f32 %v5750, %v5711
        %v5765 = vmul.f32 %v5753, %v5711
        %v5766 = vmul.f32 %v5756, %v5711
        %v5767 = vmul.f32 %v5759, %v5711
        %v5768 = vadd.f32 %v5760, 1e-05
        %v5769 = vadd.f32 %v5761, 1e-05
        %v5770 = vadd.f32 %v5762, 1e-05
        %v5771 = vadd.f32 %v5763, 1e-05
        %v5772 = vadd.f32 %v5764, 1e-05
        %v5773 = vadd.f32 %v5765, 1e-05
        %v5774 = vadd.f32 %v5766, 1e-05
        %v5775 = vadd.f32 %v5767, 1e-05
        %v5776 = vrsqrt.pop %v5768
        %v5777 = vmul.f32 %v5776, %v5768
        %v5778 = vmul.f32 %v5777, %v5776
        %v5779 = vmul.f32 0.5, %v5778
        %v5780 = vsub.f32 1.5, %v5779
        %v5781 = vmul.f32 %v5776, %v5780
        %vm5782 = vweird.f32 %v5768
        %vm5783 = vweird.f32 %v5776
        %vm5784 = vmor %vm5782, %vm5783
        %v5785 = vsel %vm5784, %v5776, %v5781
        %v5786 = vrsqrt.pop %v5769
        %v5787 = vmul.f32 %v5786, %v5769
        %v5788 = vmul.f32 %v5787, %v5786
        %v5789 = vmul.f32 0.5, %v5788
        %v5790 = vsub.f32 1.5, %v5789
        %v5791 = vmul.f32 %v5786, %v5790
        %vm5792 = vweird.f32 %v5769
        %vm5793 = vweird.f32 %v5786
        %vm5794 = vmor %vm5792, %vm5793
        %v5795 = vsel %vm5794, %v5786, %v5791
        %v5796 = vrsqrt.pop %v5770
        %v5797 = vmul.f32 %v5796, %v5770
        %v5798 = vmul.f32 %v5797, %v5796
        %v5799 = vmul.f32 0.5, %v5798
        %v5800 = vsub.f32 1.5, %v5799
        %v5801 = vmul.f32 %v5796, %v5800
        %vm5802 = vweird.f32 %v5770
        %vm5803 = vweird.f32 %v5796
        %vm5804 = vmor %vm5802, %vm5803
        %v5805 = vsel %vm5804, %v5796, %v5801
        %v5806 = vrsqrt.pop %v5771
        %v5807 = vmul.f32 %v5806, %v5771
        %v5808 = vmul.f32 %v5807, %v5806
        %v5809 = vmul.f32 0.5, %v5808
        %v5810 = vsub.f32 1.5, %v5809
        %v5811 = vmul.f32 %v5806, %v5810
        %vm5812 = vweird.f32 %v5771
        %vm5813 = vweird.f32 %v5806
        %vm5814 = vmor %vm5812, %vm5813
        %v5815 = vsel %vm5814, %v5806, %v5811
        %v5816 = vrsqrt.pop %v5772
        %v5817 = vmul.f32 %v5816, %v5772
        %v5818 = vmul.f32 %v5817, %v5816
        %v5819 = vmul.f32 0.5, %v5818
        %v5820 = vsub.f32 1.5, %v5819
        %v5821 = vmul.f32 %v5816, %v5820
        %vm5822 = vweird.f32 %v5772
        %vm5823 = vweird.f32 %v5816
        %vm5824 = vmor %vm5822, %vm5823
        %v5825 = vsel %vm5824, %v5816, %v5821
        %v5826 = vrsqrt.pop %v5773
        %v5827 = vmul.f32 %v5826, %v5773
        %v5828 = vmul.f32 %v5827, %v5826
        %v5829 = vmul.f32 0.5, %v5828
        %v5830 = vsub.f32 1.5, %v5829
        %v5831 = vmul.f32 %v5826, %v5830
        %vm5832 = vweird.f32 %v5773
        %vm5833 = vweird.f32 %v5826
        %vm5834 = vmor %vm5832, %vm5833
        %v5835 = vsel %vm5834, %v5826, %v5831
        %v5836 = vrsqrt.pop %v5774
        %v5837 = vmul.f32 %v5836, %v5774
        %v5838 = vmul.f32 %v5837, %v5836
        %v5839 = vmul.f32 0.5, %v5838
        %v5840 = vsub.f32 1.5, %v5839
        %v5841 = vmul.f32 %v5836, %v5840
        %vm5842 = vweird.f32 %v5774
        %vm5843 = vweird.f32 %v5836
        %vm5844 = vmor %vm5842, %vm5843
        %v5845 = vsel %vm5844, %v5836, %v5841
        %v5846 = vrsqrt.pop %v5775
        %v5847 = vmul.f32 %v5846, %v5775
        %v5848 = vmul.f32 %v5847, %v5846
        %v5849 = vmul.f32 0.5, %v5848
        %v5850 = vsub.f32 1.5, %v5849
        %v5851 = vmul.f32 %v5846, %v5850
        %vm5852 = vweird.f32 %v5775
        %vm5853 = vweird.f32 %v5846
        %vm5854 = vmor %vm5852, %vm5853
        %v5855 = vsel %vm5854, %v5846, %v5851
        %v5856 = vmul.f32 %v5720, %v5785
        %v5857 = vmul.f32 %v5721, %v5795
        %v5858 = vmul.f32 %v5722, %v5805
        %v5859 = vmul.f32 %v5723, %v5815
        %v5860 = vmul.f32 %v5724, %v5825
        %v5861 = vmul.f32 %v5725, %v5835
        %v5862 = vmul.f32 %v5726, %v5845
        %v5863 = vmul.f32 %v5727, %v5855
        %v5864 = vld [vmem:[%s17] sm:$0x1]
        %v5866 = vperm.slane %v5864, 0
        %v5868 = vmul.f32 %v5856, %v5866
        %v5869 = vmul.f32 %v5857, %v5866
        %v5870 = vmul.f32 %v5858, %v5866
        %v5871 = vmul.f32 %v5859, %v5866
        %v5872 = vmul.f32 %v5860, %v5866
        %v5873 = vmul.f32 %v5861, %v5866
        %v5874 = vmul.f32 %v5862, %v5866
        %v5875 = vmul.f32 %v5863, %v5866
        %v5876 = vld [vmem:[%s18] sm:$0x1]
        %v5878 = vperm.slane %v5876, 0
        %v5880 = vadd.f32 %v5868, %v5878
        %v5881 = vadd.f32 %v5869, %v5878
        %v5882 = vadd.f32 %v5870, %v5878
        %v5883 = vadd.f32 %v5871, %v5878
        %v5884 = vadd.f32 %v5872, %v5878
        %v5885 = vadd.f32 %v5873, %v5878
        %v5886 = vadd.f32 %v5874, %v5878
        %v5887 = vadd.f32 %v5875, %v5878
        %v5888 = vand.u32 2147483647, %v683
        %v5889 = vand.u32 2147483647, %v686
        %v5890 = vand.u32 2147483647, %v689
        %v5891 = vand.u32 2147483647, %v692
        %v5892 = vand.u32 2147483647, %v695
        %v5893 = vand.u32 2147483647, %v698
        %v5894 = vand.u32 2147483647, %v701
        %v5895 = vand.u32 2147483647, %v704
        %v5896 = vsub.f32 0.0, %v5888
        %v5897 = vsub.f32 0.0, %v5889
        %v5898 = vsub.f32 0.0, %v5890
        %v5899 = vsub.f32 0.0, %v5891
        %v5900 = vsub.f32 0.0, %v5892
        %v5901 = vsub.f32 0.0, %v5893
        %v5902 = vsub.f32 0.0, %v5894
        %v5903 = vsub.f32 0.0, %v5895
        %v5904 = vmul.f32 %v5896, 1.442695
        %v5905 = vpow.pop %v5904
        %v5906 = vmul.f32 %v5897, 1.442695
        %v5907 = vpow.pop %v5906
        %v5908 = vmul.f32 %v5898, 1.442695
        %v5909 = vpow.pop %v5908
        %v5910 = vmul.f32 %v5899, 1.442695
        %v5911 = vpow.pop %v5910
        %v5912 = vmul.f32 %v5900, 1.442695
        %v5913 = vpow.pop %v5912
        %v5914 = vmul.f32 %v5901, 1.442695
        %v5915 = vpow.pop %v5914
        %v5916 = vmul.f32 %v5902, 1.442695
        %v5917 = vpow.pop %v5916
        %v5918 = vmul.f32 %v5903, 1.442695
        %v5919 = vpow.pop %v5918
        %vm5920 = vcmp.ge.f32.partialorder %v683, 0.0
        %vm5921 = vcmp.ge.f32.partialorder %v686, 0.0
        %vm5922 = vcmp.ge.f32.partialorder %v689, 0.0
        %vm5923 = vcmp.ge.f32.partialorder %v692, 0.0
        %vm5924 = vcmp.ge.f32.partialorder %v695, 0.0
        %vm5925 = vcmp.ge.f32.partialorder %v698, 0.0
        %vm5926 = vcmp.ge.f32.partialorder %v701, 0.0
        %vm5927 = vcmp.ge.f32.partialorder %v704, 0.0
        %v5928 = vadd.f32 %v5905, 1.0
        %v5929 = vadd.f32 %v5907, 1.0
        %v5930 = vadd.f32 %v5909, 1.0
        %v5931 = vadd.f32 %v5911, 1.0
        %v5932 = vadd.f32 %v5913, 1.0
        %v5933 = vadd.f32 %v5915, 1.0
        %v5934 = vadd.f32 %v5917, 1.0
        %v5935 = vadd.f32 %v5919, 1.0
        %v5936 = vrcp.pop %v5928
        %v5937 = vmul.f32 %v5928, %v5936
        %v5938 = vsub.f32 1.0, %v5937
        %v5939 = vmul.f32 %v5936, %v5938
        %v5940 = vadd.f32 %v5936, %v5939
        %vm5941 = vweird.f32 %v5928
        %vm5942 = vweird.f32 %v5936
        %vm5943 = vmor %vm5941, %vm5942
        %v5944 = vsel %vm5943, %v5936, %v5940
        %v5945 = vand.u32 2147483647, %v5928
        %vm5946 = vcmp.eq.f32.partialorder %v5945, 8.507059e+37
        %v5947 = vand.u32 %v5928, 2147483648
        %v5948 = vor.u32 1.1754944e-38, %v5947
        %v5949 = vsel %vm5946, %v5948, %v5944
        %v5950 = vmul.f32 1.0, %v5949
        %v5951 = vrcp.pop %v5929
        %v5952 = vmul.f32 %v5929, %v5951
        %v5953 = vsub.f32 1.0, %v5952
        %v5954 = vmul.f32 %v5951, %v5953
        %v5955 = vadd.f32 %v5951, %v5954
        %vm5956 = vweird.f32 %v5929
        %vm5957 = vweird.f32 %v5951
        %vm5958 = vmor %vm5956, %vm5957
        %v5959 = vsel %vm5958, %v5951, %v5955
        %v5960 = vand.u32 2147483647, %v5929
        %vm5961 = vcmp.eq.f32.partialorder %v5960, 8.507059e+37
        %v5962 = vand.u32 %v5929, 2147483648
        %v5963 = vor.u32 1.1754944e-38, %v5962
        %v5964 = vsel %vm5961, %v5963, %v5959
        %v5965 = vmul.f32 1.0, %v5964
        %v5966 = vrcp.pop %v5930
        %v5967 = vmul.f32 %v5930, %v5966
        %v5968 = vsub.f32 1.0, %v5967
        %v5969 = vmul.f32 %v5966, %v5968
        %v5970 = vadd.f32 %v5966, %v5969
        %vm5971 = vweird.f32 %v5930
        %vm5972 = vweird.f32 %v5966
        %vm5973 = vmor %vm5971, %vm5972
        %v5974 = vsel %vm5973, %v5966, %v5970
        %v5975 = vand.u32 2147483647, %v5930
        %vm5976 = vcmp.eq.f32.partialorder %v5975, 8.507059e+37
        %v5977 = vand.u32 %v5930, 2147483648
        %v5978 = vor.u32 1.1754944e-38, %v5977
        %v5979 = vsel %vm5976, %v5978, %v5974
        %v5980 = vmul.f32 1.0, %v5979
        %v5981 = vrcp.pop %v5931
        %v5982 = vmul.f32 %v5931, %v5981
        %v5983 = vsub.f32 1.0, %v5982
        %v5984 = vmul.f32 %v5981, %v5983
        %v5985 = vadd.f32 %v5981, %v5984
        %vm5986 = vweird.f32 %v5931
        %vm5987 = vweird.f32 %v5981
        %vm5988 = vmor %vm5986, %vm5987
        %v5989 = vsel %vm5988, %v5981, %v5985
        %v5990 = vand.u32 2147483647, %v5931
        %vm5991 = vcmp.eq.f32.partialorder %v5990, 8.507059e+37
        %v5992 = vand.u32 %v5931, 2147483648
        %v5993 = vor.u32 1.1754944e-38, %v5992
        %v5994 = vsel %vm5991, %v5993, %v5989
        %v5995 = vmul.f32 1.0, %v5994
        %v5996 = vrcp.pop %v5932
        %v5997 = vmul.f32 %v5932, %v5996
        %v5998 = vsub.f32 1.0, %v5997
        %v5999 = vmul.f32 %v5996, %v5998
        %v6000 = vadd.f32 %v5996, %v5999
        %vm6001 = vweird.f32 %v5932
        %vm6002 = vweird.f32 %v5996
        %vm6003 = vmor %vm6001, %vm6002
        %v6004 = vsel %vm6003, %v5996, %v6000
        %v6005 = vand.u32 2147483647, %v5932
        %vm6006 = vcmp.eq.f32.partialorder %v6005, 8.507059e+37
        %v6007 = vand.u32 %v5932, 2147483648
        %v6008 = vor.u32 1.1754944e-38, %v6007
        %v6009 = vsel %vm6006, %v6008, %v6004
        %v6010 = vmul.f32 1.0, %v6009
        %v6011 = vrcp.pop %v5933
        %v6012 = vmul.f32 %v5933, %v6011
        %v6013 = vsub.f32 1.0, %v6012
        %v6014 = vmul.f32 %v6011, %v6013
        %v6015 = vadd.f32 %v6011, %v6014
        %vm6016 = vweird.f32 %v5933
        %vm6017 = vweird.f32 %v6011
        %vm6018 = vmor %vm6016, %vm6017
        %v6019 = vsel %vm6018, %v6011, %v6015
        %v6020 = vand.u32 2147483647, %v5933
        %vm6021 = vcmp.eq.f32.partialorder %v6020, 8.507059e+37
        %v6022 = vand.u32 %v5933, 2147483648
        %v6023 = vor.u32 1.1754944e-38, %v6022
        %v6024 = vsel %vm6021, %v6023, %v6019
        %v6025 = vmul.f32 1.0, %v6024
        %v6026 = vrcp.pop %v5934
        %v6027 = vmul.f32 %v5934, %v6026
        %v6028 = vsub.f32 1.0, %v6027
        %v6029 = vmul.f32 %v6026, %v6028
        %v6030 = vadd.f32 %v6026, %v6029
        %vm6031 = vweird.f32 %v5934
        %vm6032 = vweird.f32 %v6026
        %vm6033 = vmor %vm6031, %vm6032
        %v6034 = vsel %vm6033, %v6026, %v6030
        %v6035 = vand.u32 2147483647, %v5934
        %vm6036 = vcmp.eq.f32.partialorder %v6035, 8.507059e+37
        %v6037 = vand.u32 %v5934, 2147483648
        %v6038 = vor.u32 1.1754944e-38, %v6037
        %v6039 = vsel %vm6036, %v6038, %v6034
        %v6040 = vmul.f32 1.0, %v6039
        %v6041 = vrcp.pop %v5935
        %v6042 = vmul.f32 %v5935, %v6041
        %v6043 = vsub.f32 1.0, %v6042
        %v6044 = vmul.f32 %v6041, %v6043
        %v6045 = vadd.f32 %v6041, %v6044
        %vm6046 = vweird.f32 %v5935
        %vm6047 = vweird.f32 %v6041
        %vm6048 = vmor %vm6046, %vm6047
        %v6049 = vsel %vm6048, %v6041, %v6045
        %v6050 = vand.u32 2147483647, %v5935
        %vm6051 = vcmp.eq.f32.partialorder %v6050, 8.507059e+37
        %v6052 = vand.u32 %v5935, 2147483648
        %v6053 = vor.u32 1.1754944e-38, %v6052
        %v6054 = vsel %vm6051, %v6053, %v6049
        %v6055 = vmul.f32 1.0, %v6054
        %v6056 = vmul.f32 %v5905, %v5949
        %v6057 = vmul.f32 %v5907, %v5964
        %v6058 = vmul.f32 %v5909, %v5979
        %v6059 = vmul.f32 %v5911, %v5994
        %v6060 = vmul.f32 %v5913, %v6009
        %v6061 = vmul.f32 %v5915, %v6024
        %v6062 = vmul.f32 %v5917, %v6039
        %v6063 = vmul.f32 %v5919, %v6054
        %v6064 = vsel %vm5920, %v5950, %v6056
        %v6065 = vsel %vm5921, %v5965, %v6057
        %v6066 = vsel %vm5922, %v5980, %v6058
        %v6067 = vsel %vm5923, %v5995, %v6059
        %v6068 = vsel %vm5924, %v6010, %v6060
        %v6069 = vsel %vm5925, %v6025, %v6061
        %v6070 = vsel %vm5926, %v6040, %v6062
        %v6071 = vsel %vm5927, %v6055, %v6063
        %v6072 = vmul.f32 %v683, %v6064
        %v6073 = vmul.f32 %v686, %v6065
        %v6074 = vmul.f32 %v689, %v6066
        %v6075 = vmul.f32 %v692, %v6067
        %v6076 = vmul.f32 %v695, %v6068
        %v6077 = vmul.f32 %v698, %v6069
        %v6078 = vmul.f32 %v701, %v6070
        %v6079 = vmul.f32 %v704, %v6071
        %6088 = vrot.lane.b32.xlu0 %v6072, 96
        %v6089 = vpop.permute.xlu0 %6088
        %6090 = vrot.lane.b32.xlu0 %v6073, 96
        %v6091 = vpop.permute.xlu0 %6090
        %6092 = vrot.lane.b32.xlu0 %v6074, 96
        %v6093 = vpop.permute.xlu0 %6092
        %6094 = vrot.lane.b32.xlu0 %v6075, 96
        %v6095 = vpop.permute.xlu0 %6094
        %6096 = vrot.lane.b32.xlu0 %v6076, 96
        %v6097 = vpop.permute.xlu0 %6096
        %6098 = vrot.lane.b32.xlu0 %v6077, 96
        %v6099 = vpop.permute.xlu0 %6098
        %6100 = vrot.lane.b32.xlu0 %v6078, 96
        %v6101 = vpop.permute.xlu0 %6100
        %6102 = vrot.lane.b32.xlu0 %v6079, 96
        %v6103 = vpop.permute.xlu0 %6102
        %v6112 = vmul.f32 %v5880, %v6089
        %v6113 = vmul.f32 %v5881, %v6091
        %v6114 = vmul.f32 %v5882, %v6093
        %v6115 = vmul.f32 %v5883, %v6095
        %v6116 = vmul.f32 %v5884, %v6097
        %v6117 = vmul.f32 %v5885, %v6099
        %v6118 = vmul.f32 %v5886, %v6101
        %v6119 = vmul.f32 %v5887, %v6103
        %v6120 = vld [vmem:[%s19] sm:$0xff]
        %v6121 = vld [vmem:[%s19 + $0x8] sm:$0xff]
        %v6122 = vld [vmem:[%s19 + $0x10] sm:$0xff]
        %v6123 = vld [vmem:[%s19 + $0x18] sm:$0xff]
        %v6125 = vsel %vm640, %v6112, 0
        %v6128 = vsel %vm640, %v6113, 0
        %v6131 = vsel %vm640, %v6114, 0
        %v6134 = vsel %vm640, %v6115, 0
        %v6137 = vsel %vm640, %v6116, 0
        %v6140 = vsel %vm640, %v6117, 0
        %v6143 = vsel %vm640, %v6118, 0
        %v6146 = vsel %vm640, %v6119, 0
        %6148 = vmatpush.msra.mxu0 0.0
        %6149 = vmatpush.msra.mxu0 0.0
        %6150 = vmatpush.msra.mxu0 0.0
        %6151 = vmatpush.msra.mxu0 0.0
        %6152 = vmatpush.msra.mxu0 0.0
        %6153 = vmatpush.msra.mxu0 0.0
        %6154 = vmatpush.msra.mxu0 0.0
        %6155 = vmatpush.msra.mxu0 0.0
        %6156 = vmatpush.msra.mxu0 0.0
        %6157 = vmatpush.msra.mxu0 0.0
        %6158 = vmatpush.msra.mxu0 0.0
        %6159 = vmatpush.msra.mxu0 0.0
        %6160 = vmatpush.msra.mxu0 %v6123
        %6161 = vmatpush.msra.mxu0 %v6122
        %6162 = vmatpush.msra.mxu0 %v6121
        %6163 = vmatpush.msra.mxu0 %v6120
        %6164 = vmatmul.f32.gmra.mxu0 %v6125
        %v6165 = vpop.f32.mrf.mxu0
        %v6166 = vadd.f32 0.0, %v6165
        %6167 = vmatmul.f32.gmra.mxu0 %v6128
        %v6168 = vpop.f32.mrf.mxu0
        %v6169 = vadd.f32 0.0, %v6168
        %6170 = vmatmul.f32.gmra.mxu0 %v6131
        %v6171 = vpop.f32.mrf.mxu0
        %v6172 = vadd.f32 0.0, %v6171
        %6173 = vmatmul.f32.gmra.mxu0 %v6134
        %v6174 = vpop.f32.mrf.mxu0
        %v6175 = vadd.f32 0.0, %v6174
        %6176 = vmatmul.f32.gmra.mxu0 %v6137
        %v6177 = vpop.f32.mrf.mxu0
        %v6178 = vadd.f32 0.0, %v6177
        %6179 = vmatmul.f32.gmra.mxu0 %v6140
        %v6180 = vpop.f32.mrf.mxu0
        %v6181 = vadd.f32 0.0, %v6180
        %6182 = vmatmul.f32.gmra.mxu0 %v6143
        %v6183 = vpop.f32.mrf.mxu0
        %v6184 = vadd.f32 0.0, %v6183
        %6185 = vmatmul.f32.gmra.mxu0 %v6146
        %v6186 = vpop.f32.mrf.mxu0
        %v6187 = vadd.f32 0.0, %v6186
        %6188 = vdwg.mxu0
        %6189 = vst.msk [vmem:[%s622] sm:$0xff] %vm640, %v6166
        %6190 = vst.msk [vmem:[%s622 + $0x8] sm:$0xff] %vm640, %v6169
        %6191 = vst.msk [vmem:[%s622 + $0x10] sm:$0xff] %vm640, %v6172
        %6192 = vst.msk [vmem:[%s622 + $0x18] sm:$0xff] %vm640, %v6175
        %6193 = vst.msk [vmem:[%s622 + $0x20] sm:$0xff] %vm640, %v6178
        %6194 = vst.msk [vmem:[%s622 + $0x28] sm:$0xff] %vm640, %v6181
        %6195 = vst.msk [vmem:[%s622 + $0x30] sm:$0xff] %vm640, %v6184
        %6196 = vst.msk [vmem:[%s622 + $0x38] sm:$0xff] %vm640, %v6187
        %s6197 = sand.u32 %s467, 1
        %s6198 = scalar_lea.sflag [#allocation3], %s6197
        %s6199 = sand.u32 %s467, 1
        %s6200 = smul.addr %s6199, 64
        %s6201 = scalar_lea.vmem [#allocation2], %s6200
        // Predicated region
        $region101: #{ss2depth_k1_forward.1} parent=99 // pred_check
          %p6202 = pneg %p477
        $region102: #{ss2depth_k1_forward.1} parent=99 // pred_check_branch
          %6204 = sbr.rel (%p6202) target = $region104
        $region103: #{ss2depth_k1_forward.1} parent=99 // pred_region
          %6206 = vsyncadd %s6198, 0
          %s6207 = smul.addr %s34, 8
          %s6208 = smul.addr %s6207, 8
          %s6209 = scalar_lea.hbm %s20, %s6208
          %s6210 = sshll.u32 %s6201, 4
          %s6211 = int_to_ptr.vmem [resolvable:$true] %s6210
          %s6212 = sshll.u32 %s6209, 4
          %s6213 = int_to_ptr.hbm [resolvable:$true] %s6212
          %6218 = dma.vmem_to_hbm [thread:$0]  %s6211, 1024, %s6213, %s6198, 128, 128, 8
        $region104: #{ss2depth_k1_forward.1} parent=99 // pred_fallthru
          _
      $region100: #{ss2depth_k1_forward.1} parent=5 // pred_fallthru
        _
      %p6219 = scmp.le.s32.totalorder 2, %s29
      // Predicated region
      $region105: #{ss2depth_k1_forward.1} parent=5 // pred_check
        %p6220 = pneg %p6219
      $region106: #{ss2depth_k1_forward.1} parent=5 // pred_check_branch
        %6222 = sbr.rel (%p6220) target = $region108
      $region107: #{ss2depth_k1_forward.1} parent=5 // pred_region
        %s6223 = ssub.s32 %s29, 2
        // Predicated region
        $region109: #{ss2depth_k1_forward.1} parent=107 // pred_check
          %p6224 = pneg %p483
        $region110: #{ss2depth_k1_forward.1} parent=107 // pred_check_branch
          %6226 = sbr.rel (%p6224) target = $region112
        $region111: #{ss2depth_k1_forward.1} parent=107 // pred_region
          %s6227 = sand.u32 %s468, 1
          %s6228 = scalar_lea.sflag [#allocation3], %s6227
          %s6229 = sand.u32 %s468, 1
          %s6230 = smul.addr %s6229, 64
          %s6231 = scalar_lea.vmem [#allocation2], %s6230
          %6233 = dma.done %s6228, 1024
        $region112: #{ss2depth_k1_forward.1} parent=107 // pred_fallthru
          _
      $region108: #{ss2depth_k1_forward.1} parent=5 // pred_fallthru
        _
    $region6: #{ss2depth_k1_forward.1} parent=1 // loop_footer
      %s33 = sadd.s32 1, %s29
    $region7: #{ss2depth_k1_forward.1} parent=1 // loop_footer_branch
      %28 = sbr.rel target = $region3
    $region8: #{ss2depth_k1_forward.1} parent=1 // loop_exit
      _
    %6234 = vsyncpa [#allocation3], 1
    %s6235 = scalar_lea.sflag [#allocation3], 1
    %6236 = vsyncpa %s6235, 1

</llo_original>
